<compile_context>
chip_gen: v6e
topology: v6e:2x2x1
jax: 0.10.0
libtpu: 0.0.40
codegen_flags: <defaults>
</compile_context>

<pallas_src>
import jax
import jax.numpy as jnp
from jax.experimental import pallas as pl
from jax.experimental.pallas import tpu as pltpu

EPS = 1e-5
LANE = 128
VMEM_LIMIT = 32 * 1024 * 1024   # explicit scoped-VMEM budget (safe incl. v7x 64 MiB)


def _round_up(x, m):
    return ((x + m - 1) // m) * m


def _pick_tile(m):
    for t in (512, 256, 128, 64, 32, 16, 8):
        if m % t == 0:
            return t
    return m


# ----------------------------- Pallas kernels ------------------------------

def _psum8(v, cp):
    """[R, cp] f32 -> [8, cp] per-channel partial sums (row-group reduction)."""
    r = v.shape[0]
    if r % 8 == 0:
        return jnp.sum(v.reshape(r // 8, 8, cp), axis=0)
    return jnp.broadcast_to(jnp.sum(v, axis=0, keepdims=True) * 0.125, (8, cp))


def _make_conv_stats_kernel(stride, hout, wout, cin, cp, with_proj):
    """3x3 conv (stride 1 or 2) as 9 shifted MXU matmuls + BN partial stats.

    Grid iterates over images; the zero-padded input arrives phase-split so every
    tap is a unit-stride window read.  Optionally also computes the 1x1
    projection-shortcut conv and its partial stats in the same pass.
    """
    nph = stride * stride
    hw = hout * wout

    def kernel(*refs):
        pos = 0
        phase_refs = refs[pos:pos + nph]; pos += nph
        w_ref = refs[pos]; pos += 1
        if with_proj:
            xs_ref = refs[pos]; ws_ref = refs[pos + 1]; pos += 2
        y_ref = refs[pos]; ps_ref = refs[pos + 1]; pq_ref = refs[pos + 2]; pos += 3
        if with_proj:
            sy_ref = refs[pos]; sps_ref = refs[pos + 1]; spq_ref = refs[pos + 2]

        acc = jnp.zeros((hw, cp), jnp.float32)
        for dy in range(3):
            for dx in range(3):
                ph = phase_refs[(dy % stride) * stride + (dx % stride)]
                patch = ph[pl.ds(dy // stride, hout), pl.ds(dx // stride, wout), :]
                acc = acc + jnp.dot(patch.reshape(hw, cin),      # bf16
                                    w_ref[dy * 3 + dx],          # bf16
                                    preferred_element_type=jnp.float32)
        y_ref[...] = acc
        ps_ref[...] = _psum8(acc, cp)
        pq_ref[...] = _psum8(acc * acc, cp)

        if with_proj:
            s = jnp.dot(xs_ref[...], ws_ref[...],
                        preferred_element_type=jnp.float32)
            sy_ref[...] = s
            sps_ref[...] = _psum8(s, cp)
            spq_ref[...] = _psum8(s * s, cp)

    return kernel


def bn_relu_kernel(y_ref, a_ref, b_ref, o_ref):
    o_ref[...] = jnp.maximum(y_ref[...] * a_ref[...] + b_ref[...],
                             0.0).astype(o_ref.dtype)


def bn_add_relu_kernel(y_ref, a_ref, b_ref, s_ref, o_ref):
    o_ref[...] = jnp.maximum(y_ref[...] * a_ref[...] + b_ref[...] + s_ref[...],
                             0.0).astype(o_ref.dtype)


def bn_bn_add_relu_kernel(y_ref, a_ref, b_ref, s_ref, as_ref, bs_ref, o_ref):
    o_ref[...] = jnp.maximum(y_ref[...] * a_ref[...] + b_ref[...]
                             + s_ref[...] * as_ref[...] + bs_ref[...],
                             0.0).astype(o_ref.dtype)


# --------------------------- pallas_call wrappers ---------------------------

def conv3x3_stats(phases, w, hout, wout, cp, xs=None, ws=None):
    """Conv (+ partial BN stats) pass; grid over images, 'parallel'."""
    stride = int(round(len(phases) ** 0.5))
    n, hq, wq, cin = phases[0].shape
    hw = hout * wout
    m = n * hw
    with_proj = xs is not None

    kernel = _make_conv_stats_kernel(stride, hout, wout, cin, cp, with_proj)

    phase_spec = pl.BlockSpec((None, hq, wq, cin), lambda i: (i, 0, 0, 0))
    in_specs = [phase_spec] * (stride * stride)
    in_specs.append(pl.BlockSpec(w.shape, lambda i: (0, 0, 0)))   # resident weights
    inputs = list(phases) + [w]
    if with_proj:
        in_specs.append(pl.BlockSpec((hw, xs.shape[-1]), lambda i: (i, 0)))
        in_specs.append(pl.BlockSpec(ws.shape, lambda i: (0, 0)))  # resident
        inputs += [xs, ws]

    y_shape = jax.ShapeDtypeStruct((m, cp), jnp.float32)
    st_shape = jax.ShapeDtypeStruct((n * 8, cp), jnp.float32)
    y_spec = pl.BlockSpec((hw, cp), lambda i: (i, 0))
    st_spec = pl.BlockSpec((8, cp), lambda i: (i, 0))
    out_shape = [y_shape, st_shape, st_shape]
    out_specs = [y_spec, st_spec, st_spec]
    if with_proj:
        out_shape = out_shape + [y_shape, st_shape, st_shape]
        out_specs = out_specs + [y_spec, st_spec, st_spec]

    return pl.pallas_call(
        kernel,
        grid=(n,),
        in_specs=in_specs,
        out_specs=out_specs,
        out_shape=out_shape,
        compiler_params=pltpu.CompilerParams(
            dimension_semantics=("parallel",),
            vmem_limit_bytes=VMEM_LIMIT),
    )(*inputs)


def _tiled_epilogue(kernel, arrays, tiled, out_dtype, tm):
    """Element-wise BN-apply (+shortcut) + ReLU; tiled over M, lane-dense Cp."""
    m, cp = arrays[0].shape
    in_specs = []
    for a, t in zip(arrays, tiled):
        if t:
            in_specs.append(pl.BlockSpec((tm, cp), lambda i: (i, 0)))
        else:
            in_specs.append(pl.BlockSpec(a.shape, lambda i: (0, 0)))  # resident
    return pl.pallas_call(
        kernel,
        grid=(m // tm,),
        in_specs=in_specs,
        out_specs=pl.BlockSpec((tm, cp), lambda i: (i, 0)),
        out_shape=jax.ShapeDtypeStruct((m, cp), out_dtype),
        compiler_params=pltpu.CompilerParams(
            dimension_semantics=("parallel",),
            vmem_limit_bytes=VMEM_LIMIT),
    )(*arrays)


# ------------------------------ glue (JAX) ---------------------------------

def _pad_last(a, target):
    pad = target - a.shape[-1]
    if pad > 0:
        a = jnp.pad(a, [(0, 0)] * (a.ndim - 1) + [(0, pad)])
    return a


def _pad_vec(v, cp):
    return _pad_last(v.reshape(1, -1).astype(jnp.float32), cp)


def _prep_w3x3(w, cp, pad_in_to=None):
    kh, kw, ci, _ = w.shape
    w = _pad_last(w, cp)
    if pad_in_to is not None and pad_in_to > ci:
        w = jnp.pad(w, ((0, 0), (0, 0), (0, pad_in_to - ci), (0, 0)))
    return w.reshape(kh * kw, w.shape[2], cp).astype(jnp.bfloat16)


def prepare_block_params(params, stride):
    """One-time (outside the jitted hot path) reshape/pad/cast of parameters."""
    del stride  # projection presence is indicated by "ws" in params
    cout = params["w1"].shape[-1]
    cin = params["w1"].shape[-2]
    cp = _round_up(cout, LANE)
    prep = {
        "w1": _prep_w3x3(params["w1"], cp),                  # [9, Cin, Cp] bf16
        "w2": _prep_w3x3(params["w2"], cp, pad_in_to=cp),    # [9, Cp,  Cp] bf16
        "g1": _pad_vec(params["g1"], cp), "b1": _pad_vec(params["b1"], cp),
        "g2": _pad_vec(params["g2"], cp), "b2": _pad_vec(params["b2"], cp),
    }
    if "ws" in params:
        prep["ws"] = _pad_last(params["ws"].reshape(cin, cout),
                               cp).astype(jnp.bfloat16)      # [Cin, Cp] bf16
        prep["gs"] = _pad_vec(params["gs"], cp)
        prep["bs"] = _pad_vec(params["bs"], cp)
    return prep


def _phase_split(x, stride, hout, wout):
    """Zero-pad by 1 and split into stride*stride even/odd phases (bf16).

    Total bytes equal the padded input (no im2col-style duplication); every 3x3
    tap then reads a unit-stride window of exactly one phase inside the kernel.
    """
    hq = hout + 2 // stride
    wq = wout + 2 // stride
    xp = jnp.pad(x, ((0, 0), (1, 1), (1, 1), (0, 0)))
    phases = []
    for a in range(stride):
        for b in range(stride):
            ph = xp[:, a::stride, b::stride, :][:, :hq, :wq, :]
            dh, dw = hq - ph.shape[1], wq - ph.shape[2]
            if dh or dw:
                ph = jnp.pad(ph, ((0, 0), (0, dh), (0, dw), (0, 0)))
            phases.append(ph.astype(jnp.bfloat16))
    return phases


def _bn_affine(psum, psq, count, gamma, beta):
    """Finalize BN batch statistics -> per-channel scale/shift (f32, [1, Cp])."""
    mean = jnp.sum(psum, axis=0, keepdims=True) / count
    ex2 = jnp.sum(psq, axis=0, keepdims=True) / count
    var = jnp.maximum(ex2 - mean * mean, 0.0)        # biased variance (training BN)
    scale = gamma * jax.lax.rsqrt(var + EPS)
    shift = beta - mean * scale
    return scale, shift


def _residual_block_impl(x_nchw, prep, stride, cout):
    x = jnp.transpose(x_nchw, (0, 2, 3, 1)).astype(jnp.float32)   # NCHW -> NHWC
    n, h, w, cin = x.shape
    cp = prep["g1"].shape[-1]
    project = (stride != 1) or (cin != cout)
    hout = (h + 2 - 3) // stride + 1
    wout = (w + 2 - 3) // stride + 1
    m = n * hout * wout
    tm = _pick_tile(m)

    # --- conv1 + per-image BN partial stats ---
    phases1 = _phase_split(x, stride, hout, wout)
    y1, ps1, pq1 = conv3x3_stats(phases1, prep["w1"], hout, wout, cp)
    scale1, shift1 = _bn_affine(ps1, pq1, m, prep["g1"], prep["b1"])

    # --- bn1 + relu (tiled, lane-dense; bf16 out = next matmul's input dtype) ---
    h1 = _tiled_epilogue(bn_relu_kernel, [y1, scale1, shift1],
                         [True, False, False], jnp.bfloat16, tm)

    # --- conv2 (+ optional fused 1x1 projection shortcut) + partial stats ---
    phases2 = _phase_split(h1.reshape(n, hout, wout, cp), 1, hout, wout)
    if project:
        xs = x[:, ::stride, ::stride, :].reshape(m, cin).astype(jnp.bfloat16)
        y2, ps2, pq2, sy, pss, pqs = conv3x3_stats(
            phases2, prep["w2"], hout, wout, cp, xs=xs, ws=prep["ws"])
        scale2, shift2 = _bn_affine(ps2, pq2, m, prep["g2"], prep["b2"])
        scs, shs = _bn_affine(pss, pqs, m, prep["gs"], prep["bs"])
        out = _tiled_epilogue(
            bn_bn_add_relu_kernel, [y2, scale2, shift2, sy, scs, shs],
            [True, False, False, True, False, False], jnp.float32, tm)
    else:
        y2, ps2, pq2 = conv3x3_stats(phases2, prep["w2"], hout, wout, cp)
        scale2, shift2 = _bn_affine(ps2, pq2, m, prep["g2"], prep["b2"])
        x_flat = _pad_last(x.reshape(m, cin), cp)
        out = _tiled_epilogue(
            bn_add_relu_kernel, [y2, scale2, shift2, x_flat],
            [True, False, False, True], jnp.float32, tm)

    out = out.reshape(n, hout, wout, cp)[..., :cout]
    return jnp.transpose(out, (0, 3, 1, 2))                       # NHWC -> NCHW


residual_block = jax.jit(_residual_block_impl, static_argnums=(2, 3))


# ----------------------------- reference (JAX) -----------------------------

def _ref_conv(x, w, stride, padding):
    return jax.lax.conv_general_dilated(
        x, w, (stride, stride), padding,
        dimension_numbers=("NHWC", "HWIO", "NHWC"))


def _ref_bn(y, g, b):
    mean = y.mean(axis=(0, 1, 2), keepdims=True)
    var = ((y - mean) ** 2).mean(axis=(0, 1, 2), keepdims=True)
    return g * (y - mean) * jax.lax.rsqrt(var + EPS) + b


def residual_block_ref(x_nchw, params, stride):
    x = jnp.transpose(x_nchw, (0, 2, 3, 1)).astype(jnp.float32)
    cin = x.shape[-1]
    cout = params["w1"].shape[-1]
    project = (stride != 1) or (cin != cout)
    h = jnp.maximum(_ref_bn(_ref_conv(x, params["w1"], stride, ((1, 1), (1, 1))),
                            params["g1"], params["b1"]), 0.0)
    y = _ref_bn(_ref_conv(h, params["w2"], 1, ((1, 1), (1, 1))),
                params["g2"], params["b2"])
    if project:
        s = _ref_bn(_ref_conv(x, params["ws"], stride, "VALID"),
                    params["gs"], params["bs"])
    else:
        s = x
    out = jnp.maximum(y + s, 0.0)
    return jnp.transpose(out, (0, 3, 1, 2))


# --------------------------------- main ------------------------------------

def init_params(key, cin, cout, project):
    ks = jax.random.split(key, 9)
    p = {
        "w1": 0.1 * jax.random.normal(ks[0], (3, 3, cin, cout), jnp.float32),
        "g1": 1.0 + 0.1 * jax.random.normal(ks[1], (cout,), jnp.float32),
        "b1": 0.1 * jax.random.normal(ks[2], (cout,), jnp.float32),
        "w2": 0.1 * jax.random.normal(ks[3], (3, 3, cout, cout), jnp.float32),
        "g2": 1.0 + 0.1 * jax.random.normal(ks[4], (cout,), jnp.float32),
        "b2": 0.1 * jax.random.normal(ks[5], (cout,), jnp.float32),
    }
    if project:
        p["ws"] = 0.1 * jax.random.normal(ks[6], (1, 1, cin, cout), jnp.float32)
        p["gs"] = 1.0 + 0.1 * jax.random.normal(ks[7], (cout,), jnp.float32)
        p["bs"] = 0.1 * jax.random.normal(ks[8], (cout,), jnp.float32)
    return p


if __name__ == "__main__":
    key = jax.random.PRNGKey(0)
    kx1, kp1, kx2, kp2 = jax.random.split(key, 4)

    # Tolerance revalidated for bf16 MXU inputs with f32 accumulation (per review).
    ATOL = RTOL = 5e-2

    # Case 1: projection shortcut (stride=2, channel change) -----------------
    x1 = jax.random.normal(kx1, (2, 4, 16, 16), jnp.float32)   # NCHW
    params1 = init_params(kp1, cin=4, cout=8, project=True)
    prep1 = prepare_block_params(params1, stride=2)
    out1 = jax.block_until_ready(residual_block(x1, prep1, 2, 8))
    ref1 = residual_block_ref(x1, params1, stride=2)
    assert out1.shape == (2, 8, 8, 8), out1.shape
    err1 = float(jnp.max(jnp.abs(out1 - ref1)))
    assert jnp.allclose(out1, ref1, atol=ATOL, rtol=RTOL), f"max abs err {err1}"

    # Case 2: identity shortcut (stride=1, same channels) --------------------
    x2 = jax.random.normal(kx2, (2, 4, 16, 16), jnp.float32)   # NCHW
    params2 = init_params(kp2, cin=4, cout=4, project=False)
    prep2 = prepare_block_params(params2, stride=1)
    out2 = jax.block_until_ready(residual_block(x2, prep2, 1, 4))
    ref2 = residual_block_ref(x2, params2, stride=1)
    assert out2.shape == (2, 4, 16, 16), out2.shape
    err2 = float(jnp.max(jnp.abs(out2 - ref2)))
    assert jnp.allclose(out2, ref2, atol=ATOL, rtol=RTOL), f"max abs err {err2}"

    print("KERNEL_OK")
</pallas_src>

<mosaic_0001>
module attributes {stable_mosaic.version = 11 : i64} {
  func.func @bn_relu_kernel(%arg0: i32, %arg1: memref<128x128xf32, #tpu.memory_space<vmem>>, %arg2: memref<1x128xf32, #tpu.memory_space<vmem>>, %arg3: memref<1x128xf32, #tpu.memory_space<vmem>>, %arg4: memref<128x128xbf16, #tpu.memory_space<vmem>>) attributes {dimension_semantics = [#tpu.dimension_semantics<parallel>], iteration_bounds = array<i64: 1>, scalar_prefetch = 0 : i64, scratch_operands = 0 : i64, tpu.core_type = #tpu.core_type<tc>, window_params = [{transform_indices = @transform_0, window_bounds = array<i64: 128, 128>}, {pipeline_mode = #tpu.pipeline_mode<synchronous>, transform_indices = @transform_1, window_bounds = array<i64: 1, 128>}, {pipeline_mode = #tpu.pipeline_mode<synchronous>, transform_indices = @transform_2, window_bounds = array<i64: 1, 128>}, {transform_indices = @transform_3, window_bounds = array<i64: 128, 128>}]} {
    %c0 = arith.constant 0 : index
    %c0_0 = arith.constant 0 : index
    %0 = vector.load %arg1[%c0, %c0_0] : memref<128x128xf32, #tpu.memory_space<vmem>>, vector<128x128xf32>
    %c0_1 = arith.constant 0 : index
    %c0_2 = arith.constant 0 : index
    %1 = vector.load %arg2[%c0_1, %c0_2] : memref<1x128xf32, #tpu.memory_space<vmem>>, vector<1x128xf32>
    %2 = vector.broadcast %1 : vector<1x128xf32> to vector<128x128xf32>
    %3 = arith.mulf %0, %2 : vector<128x128xf32>
    %c0_3 = arith.constant 0 : index
    %c0_4 = arith.constant 0 : index
    %4 = vector.load %arg3[%c0_3, %c0_4] : memref<1x128xf32, #tpu.memory_space<vmem>>, vector<1x128xf32>
    %5 = vector.broadcast %4 : vector<1x128xf32> to vector<128x128xf32>
    %6 = arith.addf %3, %5 : vector<128x128xf32>
    %cst = arith.constant 0.000000e+00 : f32
    %7 = vector.broadcast %cst : f32 to vector<128x128xf32>
    %8 = arith.maximumf %6, %7 : vector<128x128xf32>
    %9 = arith.truncf %8 : vector<128x128xf32> to vector<128x128xbf16>
    %c0_5 = arith.constant 0 : index
    %c0_6 = arith.constant 0 : index
    %10 = vector.load %arg4[%c0_5, %c0_6] : memref<128x128xbf16, #tpu.memory_space<vmem>>, vector<128x128xbf16>
    tpu.vector_store %arg4[%c0_5, %c0_6], %9 {strides = array<i32>} : memref<128x128xbf16, #tpu.memory_space<vmem>>, vector<128x128xbf16>,
    return
  }
  func.func @transform_0(%arg0: i32) -> (i32, i32) {
    %c0_i32 = arith.constant 0 : i32
    %c0_i32_0 = arith.constant 0 : i32
    return %arg0, %c0_i32 : i32, i32
  }
  func.func @transform_1(%arg0: i32) -> (i32, i32) {
    %c0_i32 = arith.constant 0 : i32
    %c0_i32_0 = arith.constant 0 : i32
    %c0_i32_1 = arith.constant 0 : i32
    return %c0_i32, %c0_i32_0 : i32, i32
  }
  func.func @transform_2(%arg0: i32) -> (i32, i32) {
    %c0_i32 = arith.constant 0 : i32
    %c0_i32_0 = arith.constant 0 : i32
    %c0_i32_1 = arith.constant 0 : i32
    return %c0_i32, %c0_i32_0 : i32, i32
  }
  func.func @transform_3(%arg0: i32) -> (i32, i32) {
    %c0_i32 = arith.constant 0 : i32
    %c0_i32_0 = arith.constant 0 : i32
    return %arg0, %c0_i32 : i32, i32
  }
}

module attributes {stable_mosaic.version = 11 : i64} {
  func.func @kernel(%arg0: i32, %arg1: memref<1x9x9x4xbf16, #tpu.memory_space<vmem>>, %arg2: memref<1x9x9x4xbf16, #tpu.memory_space<vmem>>, %arg3: memref<1x9x9x4xbf16, #tpu.memory_space<vmem>>, %arg4: memref<1x9x9x4xbf16, #tpu.memory_space<vmem>>, %arg5: memref<9x4x128xbf16, #tpu.memory_space<vmem>>, %arg6: memref<64x128xf32, #tpu.memory_space<vmem>>, %arg7: memref<8x128xf32, #tpu.memory_space<vmem>>, %arg8: memref<8x128xf32, #tpu.memory_space<vmem>>) attributes {dimension_semantics = [#tpu.dimension_semantics<parallel>], iteration_bounds = array<i64: 2>, scalar_prefetch = 0 : i64, scratch_operands = 0 : i64, tpu.core_type = #tpu.core_type<tc>, window_params = [{transform_indices = @transform_0, window_bounds = array<i64: 1, 9, 9, 4>}, {transform_indices = @transform_1, window_bounds = array<i64: 1, 9, 9, 4>}, {transform_indices = @transform_2, window_bounds = array<i64: 1, 9, 9, 4>}, {transform_indices = @transform_3, window_bounds = array<i64: 1, 9, 9, 4>}, {pipeline_mode = #tpu.pipeline_mode<synchronous>, transform_indices = @transform_4, window_bounds = array<i64: 9, 4, 128>}, {transform_indices = @transform_5, window_bounds = array<i64: 64, 128>}, {transform_indices = @transform_6, window_bounds = array<i64: 8, 128>}, {transform_indices = @transform_7, window_bounds = array<i64: 8, 128>}]} {
    %cst = arith.constant 0.000000e+00 : f32
    %0 = vector.broadcast %cst : f32 to vector<64x128xf32>
    %c0 = arith.constant 0 : index
    %c0_0 = arith.constant 0 : index
    %c0_1 = arith.constant 0 : index
    %c0_2 = arith.constant 0 : index
    %1 = vector.load %arg1[%c0, %c0_0, %c0_1, %c0_2] : memref<1x9x9x4xbf16, #tpu.memory_space<vmem>>, vector<1x8x8x4xbf16>
    %2 = vector.shape_cast %1 : vector<1x8x8x4xbf16> to vector<8x8x4xbf16>
    %3 = vector.shape_cast %2 : vector<8x8x4xbf16> to vector<64x4xbf16>
    %c0_3 = arith.constant 0 : index
    %c0_4 = arith.constant 0 : index
    %c0_5 = arith.constant 0 : index
    %4 = vector.load %arg5[%c0_3, %c0_4, %c0_5] : memref<9x4x128xbf16, #tpu.memory_space<vmem>>, vector<1x4x128xbf16>
    %5 = vector.shape_cast %4 : vector<1x4x128xbf16> to vector<4x128xbf16>
    %cst_6 = arith.constant dense<0.000000e+00> : vector<64x128xf32>
    %6 = tpu.matmul %3, %5, %cst_6 {dimension_numbers = #tpu.dot_dimension_numbers<[1], [0], [0], [1], [0, 0, 1, 1], [], []>} : vector<64x4xbf16>, vector<4x128xbf16>, vector<64x128xf32> -> vector<64x128xf32>
    %7 = arith.addf %0, %6 : vector<64x128xf32>
    %c0_7 = arith.constant 0 : index
    %c0_8 = arith.constant 0 : index
    %c0_9 = arith.constant 0 : index
    %c0_10 = arith.constant 0 : index
    %8 = vector.load %arg2[%c0_7, %c0_8, %c0_9, %c0_10] : memref<1x9x9x4xbf16, #tpu.memory_space<vmem>>, vector<1x8x8x4xbf16>
    %9 = vector.shape_cast %8 : vector<1x8x8x4xbf16> to vector<8x8x4xbf16>
    %10 = vector.shape_cast %9 : vector<8x8x4xbf16> to vector<64x4xbf16>
    %c1 = arith.constant 1 : index
    %c0_11 = arith.constant 0 : index
    %c0_12 = arith.constant 0 : index
    %11 = vector.load %arg5[%c1, %c0_11, %c0_12] : memref<9x4x128xbf16, #tpu.memory_space<vmem>>, vector<1x4x128xbf16>
    %12 = vector.shape_cast %11 : vector<1x4x128xbf16> to vector<4x128xbf16>
    %cst_13 = arith.constant dense<0.000000e+00> : vector<64x128xf32>
    %13 = tpu.matmul %10, %12, %cst_13 {dimension_numbers = #tpu.dot_dimension_numbers<[1], [0], [0], [1], [0, 0, 1, 1], [], []>} : vector<64x4xbf16>, vector<4x128xbf16>, vector<64x128xf32> -> vector<64x128xf32>
    %14 = arith.addf %7, %13 : vector<64x128xf32>
    %c0_14 = arith.constant 0 : index
    %c0_15 = arith.constant 0 : index
    %c1_16 = arith.constant 1 : index
    %c0_17 = arith.constant 0 : index
    %15 = vector.load %arg1[%c0_14, %c0_15, %c1_16, %c0_17] : memref<1x9x9x4xbf16, #tpu.memory_space<vmem>>, vector<1x8x8x4xbf16>
    %16 = vector.shape_cast %15 : vector<1x8x8x4xbf16> to vector<8x8x4xbf16>
    %17 = vector.shape_cast %16 : vector<8x8x4xbf16> to vector<64x4xbf16>
    %c2 = arith.constant 2 : index
    %c0_18 = arith.constant 0 : index
    %c0_19 = arith.constant 0 : index
    %18 = vector.load %arg5[%c2, %c0_18, %c0_19] : memref<9x4x128xbf16, #tpu.memory_space<vmem>>, vector<1x4x128xbf16>
    %19 = vector.shape_cast %18 : vector<1x4x128xbf16> to vector<4x128xbf16>
    %cst_20 = arith.constant dense<0.000000e+00> : vector<64x128xf32>
    %20 = tpu.matmul %17, %19, %cst_20 {dimension_numbers = #tpu.dot_dimension_numbers<[1], [0], [0], [1], [0, 0, 1, 1], [], []>} : vector<64x4xbf16>, vector<4x128xbf16>, vector<64x128xf32> -> vector<64x128xf32>
    %21 = arith.addf %14, %20 : vector<64x128xf32>
    %c0_21 = arith.constant 0 : index
    %c0_22 = arith.constant 0 : index
    %c0_23 = arith.constant 0 : index
    %c0_24 = arith.constant 0 : index
    %22 = vector.load %arg3[%c0_21, %c0_22, %c0_23, %c0_24] : memref<1x9x9x4xbf16, #tpu.memory_space<vmem>>, vector<1x8x8x4xbf16>
    %23 = vector.shape_cast %22 : vector<1x8x8x4xbf16> to vector<8x8x4xbf16>
    %24 = vector.shape_cast %23 : vector<8x8x4xbf16> to vector<64x4xbf16>
    %c3 = arith.constant 3 : index
    %c0_25 = arith.constant 0 : index
    %c0_26 = arith.constant 0 : index
    %25 = vector.load %arg5[%c3, %c0_25, %c0_26] : memref<9x4x128xbf16, #tpu.memory_space<vmem>>, vector<1x4x128xbf16>
    %26 = vector.shape_cast %25 : vector<1x4x128xbf16> to vector<4x128xbf16>
    %cst_27 = arith.constant dense<0.000000e+00> : vector<64x128xf32>
    %27 = tpu.matmul %24, %26, %cst_27 {dimension_numbers = #tpu.dot_dimension_numbers<[1], [0], [0], [1], [0, 0, 1, 1], [], []>} : vector<64x4xbf16>, vector<4x128xbf16>, vector<64x128xf32> -> vector<64x128xf32>
    %28 = arith.addf %21, %27 : vector<64x128xf32>
    %c0_28 = arith.constant 0 : index
    %c0_29 = arith.constant 0 : index
    %c0_30 = arith.constant 0 : index
    %c0_31 = arith.constant 0 : index
    %29 = vector.load %arg4[%c0_28, %c0_29, %c0_30, %c0_31] : memref<1x9x9x4xbf16, #tpu.memory_space<vmem>>, vector<1x8x8x4xbf16>
    %30 = vector.shape_cast %29 : vector<1x8x8x4xbf16> to vector<8x8x4xbf16>
    %31 = vector.shape_cast %30 : vector<8x8x4xbf16> to vector<64x4xbf16>
    %c4 = arith.constant 4 : index
    %c0_32 = arith.constant 0 : index
    %c0_33 = arith.constant 0 : index
    %32 = vector.load %arg5[%c4, %c0_32, %c0_33] : memref<9x4x128xbf16, #tpu.memory_space<vmem>>, vector<1x4x128xbf16>
    %33 = vector.shape_cast %32 : vector<1x4x128xbf16> to vector<4x128xbf16>
    %cst_34 = arith.constant dense<0.000000e+00> : vector<64x128xf32>
    %34 = tpu.matmul %31, %33, %cst_34 {dimension_numbers = #tpu.dot_dimension_numbers<[1], [0], [0], [1], [0, 0, 1, 1], [], []>} : vector<64x4xbf16>, vector<4x128xbf16>, vector<64x128xf32> -> vector<64x128xf32>
    %35 = arith.addf %28, %34 : vector<64x128xf32>
    %c0_35 = arith.constant 0 : index
    %c0_36 = arith.constant 0 : index
    %c1_37 = arith.constant 1 : index
    %c0_38 = arith.constant 0 : index
    %36 = vector.load %arg3[%c0_35, %c0_36, %c1_37, %c0_38] : memref<1x9x9x4xbf16, #tpu.memory_space<vmem>>, vector<1x8x8x4xbf16>
    %37 = vector.shape_cast %36 : vector<1x8x8x4xbf16> to vector<8x8x4xbf16>
    %38 = vector.shape_cast %37 : vector<8x8x4xbf16> to vector<64x4xbf16>
    %c5 = arith.constant 5 : index
    %c0_39 = arith.constant 0 : index
    %c0_40 = arith.constant 0 : index
    %39 = vector.load %arg5[%c5, %c0_39, %c0_40] : memref<9x4x128xbf16, #tpu.memory_space<vmem>>, vector<1x4x128xbf16>
    %40 = vector.shape_cast %39 : vector<1x4x128xbf16> to vector<4x128xbf16>
    %cst_41 = arith.constant dense<0.000000e+00> : vector<64x128xf32>
    %41 = tpu.matmul %38, %40, %cst_41 {dimension_numbers = #tpu.dot_dimension_numbers<[1], [0], [0], [1], [0, 0, 1, 1], [], []>} : vector<64x4xbf16>, vector<4x128xbf16>, vector<64x128xf32> -> vector<64x128xf32>
    %42 = arith.addf %35, %41 : vector<64x128xf32>
    %c0_42 = arith.constant 0 : index
    %c1_43 = arith.constant 1 : index
    %c0_44 = arith.constant 0 : index
    %c0_45 = arith.constant 0 : index
    %43 = vector.load %arg1[%c0_42, %c1_43, %c0_44, %c0_45] : memref<1x9x9x4xbf16, #tpu.memory_space<vmem>>, vector<1x8x8x4xbf16>
    %44 = vector.shape_cast %43 : vector<1x8x8x4xbf16> to vector<8x8x4xbf16>
    %45 = vector.shape_cast %44 : vector<8x8x4xbf16> to vector<64x4xbf16>
    %c6 = arith.constant 6 : index
    %c0_46 = arith.constant 0 : index
    %c0_47 = arith.constant 0 : index
    %46 = vector.load %arg5[%c6, %c0_46, %c0_47] : memref<9x4x128xbf16, #tpu.memory_space<vmem>>, vector<1x4x128xbf16>
    %47 = vector.shape_cast %46 : vector<1x4x128xbf16> to vector<4x128xbf16>
    %cst_48 = arith.constant dense<0.000000e+00> : vector<64x128xf32>
    %48 = tpu.matmul %45, %47, %cst_48 {dimension_numbers = #tpu.dot_dimension_numbers<[1], [0], [0], [1], [0, 0, 1, 1], [], []>} : vector<64x4xbf16>, vector<4x128xbf16>, vector<64x128xf32> -> vector<64x128xf32>
    %49 = arith.addf %42, %48 : vector<64x128xf32>
    %c0_49 = arith.constant 0 : index
    %c1_50 = arith.constant 1 : index
    %c0_51 = arith.constant 0 : index
    %c0_52 = arith.constant 0 : index
    %50 = vector.load %arg2[%c0_49, %c1_50, %c0_51, %c0_52] : memref<1x9x9x4xbf16, #tpu.memory_space<vmem>>, vector<1x8x8x4xbf16>
    %51 = vector.shape_cast %50 : vector<1x8x8x4xbf16> to vector<8x8x4xbf16>
    %52 = vector.shape_cast %51 : vector<8x8x4xbf16> to vector<64x4xbf16>
    %c7 = arith.constant 7 : index
    %c0_53 = arith.constant 0 : index
    %c0_54 = arith.constant 0 : index
    %53 = vector.load %arg5[%c7, %c0_53, %c0_54] : memref<9x4x128xbf16, #tpu.memory_space<vmem>>, vector<1x4x128xbf16>
    %54 = vector.shape_cast %53 : vector<1x4x128xbf16> to vector<4x128xbf16>
    %cst_55 = arith.constant dense<0.000000e+00> : vector<64x128xf32>
    %55 = tpu.matmul %52, %54, %cst_55 {dimension_numbers = #tpu.dot_dimension_numbers<[1], [0], [0], [1], [0, 0, 1, 1], [], []>} : vector<64x4xbf16>, vector<4x128xbf16>, vector<64x128xf32> -> vector<64x128xf32>
    %56 = arith.addf %49, %55 : vector<64x128xf32>
    %c0_56 = arith.constant 0 : index
    %c1_57 = arith.constant 1 : index
    %c1_58 = arith.constant 1 : index
    %c0_59 = arith.constant 0 : index
    %57 = vector.load %arg1[%c0_56, %c1_57, %c1_58, %c0_59] : memref<1x9x9x4xbf16, #tpu.memory_space<vmem>>, vector<1x8x8x4xbf16>
    %58 = vector.shape_cast %57 : vector<1x8x8x4xbf16> to vector<8x8x4xbf16>
    %59 = vector.shape_cast %58 : vector<8x8x4xbf16> to vector<64x4xbf16>
    %c8 = arith.constant 8 : index
    %c0_60 = arith.constant 0 : index
    %c0_61 = arith.constant 0 : index
    %60 = vector.load %arg5[%c8, %c0_60, %c0_61] : memref<9x4x128xbf16, #tpu.memory_space<vmem>>, vector<1x4x128xbf16>
    %61 = vector.shape_cast %60 : vector<1x4x128xbf16> to vector<4x128xbf16>
    %cst_62 = arith.constant dense<0.000000e+00> : vector<64x128xf32>
    %62 = tpu.matmul %59, %61, %cst_62 {dimension_numbers = #tpu.dot_dimension_numbers<[1], [0], [0], [1], [0, 0, 1, 1], [], []>} : vector<64x4xbf16>, vector<4x128xbf16>, vector<64x128xf32> -> vector<64x128xf32>
    %63 = arith.addf %56, %62 : vector<64x128xf32>
    %c0_63 = arith.constant 0 : index
    %c0_64 = arith.constant 0 : index
    %64 = vector.load %arg6[%c0_63, %c0_64] : memref<64x128xf32, #tpu.memory_space<vmem>>, vector<64x128xf32>
    tpu.vector_store %arg6[%c0_63, %c0_64], %63 {strides = array<i32>} : memref<64x128xf32, #tpu.memory_space<vmem>>, vector<64x128xf32>,
    %65 = vector.shape_cast %63 : vector<64x128xf32> to vector<8x8x128xf32>
    %cst_65 = arith.constant dense<0.000000e+00> : vector<8x128xf32>
    %66 = vector.multi_reduction <add>, %65, %cst_65 [0] : vector<8x8x128xf32> to vector<8x128xf32>
    %c0_66 = arith.constant 0 : index
    %c0_67 = arith.constant 0 : index
    %67 = vector.load %arg7[%c0_66, %c0_67] : memref<8x128xf32, #tpu.memory_space<vmem>>, vector<8x128xf32>
    tpu.vector_store %arg7[%c0_66, %c0_67], %66 {strides = array<i32>} : memref<8x128xf32, #tpu.memory_space<vmem>>, vector<8x128xf32>,
    %68 = arith.mulf %63, %63 : vector<64x128xf32>
    %69 = vector.shape_cast %68 : vector<64x128xf32> to vector<8x8x128xf32>
    %cst_68 = arith.constant dense<0.000000e+00> : vector<8x128xf32>
    %70 = vector.multi_reduction <add>, %69, %cst_68 [0] : vector<8x8x128xf32> to vector<8x128xf32>
    %c0_69 = arith.constant 0 : index
    %c0_70 = arith.constant 0 : index
    %71 = vector.load %arg8[%c0_69, %c0_70] : memref<8x128xf32, #tpu.memory_space<vmem>>, vector<8x128xf32>
    tpu.vector_store %arg8[%c0_69, %c0_70], %70 {strides = array<i32>} : memref<8x128xf32, #tpu.memory_space<vmem>>, vector<8x128xf32>,
    return
  }
  func.func @transform_0(%arg0: i32) -> (i32, i32, i32, i32) {
    %c0_i32 = arith.constant 0 : i32
    %c0_i32_0 = arith.constant 0 : i32
    %c0_i32_1 = arith.constant 0 : i32
    %c0_i32_2 = arith.constant 0 : i32
    return %arg0, %c0_i32, %c0_i32_0, %c0_i32_1 : i32, i32, i32, i32
  }
  func.func @transform_1(%arg0: i32) -> (i32, i32, i32, i32) {
    %c0_i32 = arith.constant 0 : i32
    %c0_i32_0 = arith.constant 0 : i32
    %c0_i32_1 = arith.constant 0 : i32
    %c0_i32_2 = arith.constant 0 : i32
    return %arg0, %c0_i32, %c0_i32_0, %c0_i32_1 : i32, i32, i32, i32
  }
  func.func @transform_2(%arg0: i32) -> (i32, i32, i32, i32) {
    %c0_i32 = arith.constant 0 : i32
    %c0_i32_0 = arith.constant 0 : i32
    %c0_i32_1 = arith.constant 0 : i32
    %c0_i32_2 = arith.constant 0 : i32
    return %arg0, %c0_i32, %c0_i32_0, %c0_i32_1 : i32, i32, i32, i32
  }
  func.func @transform_3(%arg0: i32) -> (i32, i32, i32, i32) {
    %c0_i32 = arith.constant 0 : i32
    %c0_i32_0 = arith.constant 0 : i32
    %c0_i32_1 = arith.constant 0 : i32
    %c0_i32_2 = arith.constant 0 : i32
    return %arg0, %c0_i32, %c0_i32_0, %c0_i32_1 : i32, i32, i32, i32
  }
  func.func @transform_4(%arg0: i32) -> (i32, i32, i32) {
    %c0_i32 = arith.constant 0 : i32
    %c0_i32_0 = arith.constant 0 : i32
    %c0_i32_1 = arith.constant 0 : i32
    %c0_i32_2 = arith.constant 0 : i32
    return %c0_i32, %c0_i32_0, %c0_i32_1 : i32, i32, i32
  }
  func.func @transform_5(%arg0: i32) -> (i32, i32) {
    %c0_i32 = arith.constant 0 : i32
    %c0_i32_0 = arith.constant 0 : i32
    return %arg0, %c0_i32 : i32, i32
  }
  func.func @transform_6(%arg0: i32) -> (i32, i32) {
    %c0_i32 = arith.constant 0 : i32
    %c0_i32_0 = arith.constant 0 : i32
    return %arg0, %c0_i32 : i32, i32
  }
  func.func @transform_7(%arg0: i32) -> (i32, i32) {
    %c0_i32 = arith.constant 0 : i32
    %c0_i32_0 = arith.constant 0 : i32
    return %arg0, %c0_i32 : i32, i32
  }
}

module attributes {stable_mosaic.version = 11 : i64} {
  func.func @kernel(%arg0: i32, %arg1: memref<1x10x10x128xbf16, #tpu.memory_space<vmem>>, %arg2: memref<9x128x128xbf16, #tpu.memory_space<vmem>>, %arg3: memref<64x4xbf16, #tpu.memory_space<vmem>>, %arg4: memref<4x128xbf16, #tpu.memory_space<vmem>>, %arg5: memref<64x128xf32, #tpu.memory_space<vmem>>, %arg6: memref<8x128xf32, #tpu.memory_space<vmem>>, %arg7: memref<8x128xf32, #tpu.memory_space<vmem>>, %arg8: memref<64x128xf32, #tpu.memory_space<vmem>>, %arg9: memref<8x128xf32, #tpu.memory_space<vmem>>, %arg10: memref<8x128xf32, #tpu.memory_space<vmem>>) attributes {dimension_semantics = [#tpu.dimension_semantics<parallel>], iteration_bounds = array<i64: 2>, scalar_prefetch = 0 : i64, scratch_operands = 0 : i64, tpu.core_type = #tpu.core_type<tc>, window_params = [{transform_indices = @transform_0, window_bounds = array<i64: 1, 10, 10, 128>}, {pipeline_mode = #tpu.pipeline_mode<synchronous>, transform_indices = @transform_1, window_bounds = array<i64: 9, 128, 128>}, {transform_indices = @transform_2, window_bounds = array<i64: 64, 4>}, {pipeline_mode = #tpu.pipeline_mode<synchronous>, transform_indices = @transform_3, window_bounds = array<i64: 4, 128>}, {transform_indices = @transform_4, window_bounds = array<i64: 64, 128>}, {transform_indices = @transform_5, window_bounds = array<i64: 8, 128>}, {transform_indices = @transform_6, window_bounds = array<i64: 8, 128>}, {transform_indices = @transform_7, window_bounds = array<i64: 64, 128>}, {transform_indices = @transform_8, window_bounds = array<i64: 8, 128>}, {transform_indices = @transform_9, window_bounds = array<i64: 8, 128>}]} {
    %cst = arith.constant 0.000000e+00 : f32
    %0 = vector.broadcast %cst : f32 to vector<64x128xf32>
    %c0 = arith.constant 0 : index
    %c0_0 = arith.constant 0 : index
    %c0_1 = arith.constant 0 : index
    %c0_2 = arith.constant 0 : index
    %1 = vector.load %arg1[%c0, %c0_0, %c0_1, %c0_2] : memref<1x10x10x128xbf16, #tpu.memory_space<vmem>>, vector<1x8x8x128xbf16>
    %2 = vector.shape_cast %1 : vector<1x8x8x128xbf16> to vector<8x8x128xbf16>
    %3 = vector.shape_cast %2 : vector<8x8x128xbf16> to vector<64x128xbf16>
    %c0_3 = arith.constant 0 : index
    %c0_4 = arith.constant 0 : index
    %c0_5 = arith.constant 0 : index
    %4 = vector.load %arg2[%c0_3, %c0_4, %c0_5] : memref<9x128x128xbf16, #tpu.memory_space<vmem>>, vector<1x128x128xbf16>
    %5 = vector.shape_cast %4 : vector<1x128x128xbf16> to vector<128x128xbf16>
    %cst_6 = arith.constant dense<0.000000e+00> : vector<64x128xf32>
    %6 = tpu.matmul %3, %5, %cst_6 {dimension_numbers = #tpu.dot_dimension_numbers<[1], [0], [0], [1], [0, 0, 1, 1], [], []>} : vector<64x128xbf16>, vector<128x128xbf16>, vector<64x128xf32> -> vector<64x128xf32>
    %7 = arith.addf %0, %6 : vector<64x128xf32>
    %c0_7 = arith.constant 0 : index
    %c0_8 = arith.constant 0 : index
    %c1 = arith.constant 1 : index
    %c0_9 = arith.constant 0 : index
    %8 = vector.load %arg1[%c0_7, %c0_8, %c1, %c0_9] : memref<1x10x10x128xbf16, #tpu.memory_space<vmem>>, vector<1x8x8x128xbf16>
    %9 = vector.shape_cast %8 : vector<1x8x8x128xbf16> to vector<8x8x128xbf16>
    %10 = vector.shape_cast %9 : vector<8x8x128xbf16> to vector<64x128xbf16>
    %c1_10 = arith.constant 1 : index
    %c0_11 = arith.constant 0 : index
    %c0_12 = arith.constant 0 : index
    %11 = vector.load %arg2[%c1_10, %c0_11, %c0_12] : memref<9x128x128xbf16, #tpu.memory_space<vmem>>, vector<1x128x128xbf16>
    %12 = vector.shape_cast %11 : vector<1x128x128xbf16> to vector<128x128xbf16>
    %cst_13 = arith.constant dense<0.000000e+00> : vector<64x128xf32>
    %13 = tpu.matmul %10, %12, %cst_13 {dimension_numbers = #tpu.dot_dimension_numbers<[1], [0], [0], [1], [0, 0, 1, 1], [], []>} : vector<64x128xbf16>, vector<128x128xbf16>, vector<64x128xf32> -> vector<64x128xf32>
    %14 = arith.addf %7, %13 : vector<64x128xf32>
    %c0_14 = arith.constant 0 : index
    %c0_15 = arith.constant 0 : index
    %c2 = arith.constant 2 : index
    %c0_16 = arith.constant 0 : index
    %15 = vector.load %arg1[%c0_14, %c0_15, %c2, %c0_16] : memref<1x10x10x128xbf16, #tpu.memory_space<vmem>>, vector<1x8x8x128xbf16>
    %16 = vector.shape_cast %15 : vector<1x8x8x128xbf16> to vector<8x8x128xbf16>
    %17 = vector.shape_cast %16 : vector<8x8x128xbf16> to vector<64x128xbf16>
    %c2_17 = arith.constant 2 : index
    %c0_18 = arith.constant 0 : index
    %c0_19 = arith.constant 0 : index
    %18 = vector.load %arg2[%c2_17, %c0_18, %c0_19] : memref<9x128x128xbf16, #tpu.memory_space<vmem>>, vector<1x128x128xbf16>
    %19 = vector.shape_cast %18 : vector<1x128x128xbf16> to vector<128x128xbf16>
    %cst_20 = arith.constant dense<0.000000e+00> : vector<64x128xf32>
    %20 = tpu.matmul %17, %19, %cst_20 {dimension_numbers = #tpu.dot_dimension_numbers<[1], [0], [0], [1], [0, 0, 1, 1], [], []>} : vector<64x128xbf16>, vector<128x128xbf16>, vector<64x128xf32> -> vector<64x128xf32>
    %21 = arith.addf %14, %20 : vector<64x128xf32>
    %c0_21 = arith.constant 0 : index
    %c1_22 = arith.constant 1 : index
    %c0_23 = arith.constant 0 : index
    %c0_24 = arith.constant 0 : index
    %22 = vector.load %arg1[%c0_21, %c1_22, %c0_23, %c0_24] : memref<1x10x10x128xbf16, #tpu.memory_space<vmem>>, vector<1x8x8x128xbf16>
    %23 = vector.shape_cast %22 : vector<1x8x8x128xbf16> to vector<8x8x128xbf16>
    %24 = vector.shape_cast %23 : vector<8x8x128xbf16> to vector<64x128xbf16>
    %c3 = arith.constant 3 : index
    %c0_25 = arith.constant 0 : index
    %c0_26 = arith.constant 0 : index
    %25 = vector.load %arg2[%c3, %c0_25, %c0_26] : memref<9x128x128xbf16, #tpu.memory_space<vmem>>, vector<1x128x128xbf16>
    %26 = vector.shape_cast %25 : vector<1x128x128xbf16> to vector<128x128xbf16>
    %cst_27 = arith.constant dense<0.000000e+00> : vector<64x128xf32>
    %27 = tpu.matmul %24, %26, %cst_27 {dimension_numbers = #tpu.dot_dimension_numbers<[1], [0], [0], [1], [0, 0, 1, 1], [], []>} : vector<64x128xbf16>, vector<128x128xbf16>, vector<64x128xf32> -> vector<64x128xf32>
    %28 = arith.addf %21, %27 : vector<64x128xf32>
    %c0_28 = arith.constant 0 : index
    %c1_29 = arith.constant 1 : index
    %c1_30 = arith.constant 1 : index
    %c0_31 = arith.constant 0 : index
    %29 = vector.load %arg1[%c0_28, %c1_29, %c1_30, %c0_31] : memref<1x10x10x128xbf16, #tpu.memory_space<vmem>>, vector<1x8x8x128xbf16>
    %30 = vector.shape_cast %29 : vector<1x8x8x128xbf16> to vector<8x8x128xbf16>
    %31 = vector.shape_cast %30 : vector<8x8x128xbf16> to vector<64x128xbf16>
    %c4 = arith.constant 4 : index
    %c0_32 = arith.constant 0 : index
    %c0_33 = arith.constant 0 : index
    %32 = vector.load %arg2[%c4, %c0_32, %c0_33] : memref<9x128x128xbf16, #tpu.memory_space<vmem>>, vector<1x128x128xbf16>
    %33 = vector.shape_cast %32 : vector<1x128x128xbf16> to vector<128x128xbf16>
    %cst_34 = arith.constant dense<0.000000e+00> : vector<64x128xf32>
    %34 = tpu.matmul %31, %33, %cst_34 {dimension_numbers = #tpu.dot_dimension_numbers<[1], [0], [0], [1], [0, 0, 1, 1], [], []>} : vector<64x128xbf16>, vector<128x128xbf16>, vector<64x128xf32> -> vector<64x128xf32>
    %35 = arith.addf %28, %34 : vector<64x128xf32>
    %c0_35 = arith.constant 0 : index
    %c1_36 = arith.constant 1 : index
    %c2_37 = arith.constant 2 : index
    %c0_38 = arith.constant 0 : index
    %36 = vector.load %arg1[%c0_35, %c1_36, %c2_37, %c0_38] : memref<1x10x10x128xbf16, #tpu.memory_space<vmem>>, vector<1x8x8x128xbf16>
    %37 = vector.shape_cast %36 : vector<1x8x8x128xbf16> to vector<8x8x128xbf16>
    %38 = vector.shape_cast %37 : vector<8x8x128xbf16> to vector<64x128xbf16>
    %c5 = arith.constant 5 : index
    %c0_39 = arith.constant 0 : index
    %c0_40 = arith.constant 0 : index
    %39 = vector.load %arg2[%c5, %c0_39, %c0_40] : memref<9x128x128xbf16, #tpu.memory_space<vmem>>, vector<1x128x128xbf16>
    %40 = vector.shape_cast %39 : vector<1x128x128xbf16> to vector<128x128xbf16>
    %cst_41 = arith.constant dense<0.000000e+00> : vector<64x128xf32>
    %41 = tpu.matmul %38, %40, %cst_41 {dimension_numbers = #tpu.dot_dimension_numbers<[1], [0], [0], [1], [0, 0, 1, 1], [], []>} : vector<64x128xbf16>, vector<128x128xbf16>, vector<64x128xf32> -> vector<64x128xf32>
    %42 = arith.addf %35, %41 : vector<64x128xf32>
    %c0_42 = arith.constant 0 : index
    %c2_43 = arith.constant 2 : index
    %c0_44 = arith.constant 0 : index
    %c0_45 = arith.constant 0 : index
    %43 = vector.load %arg1[%c0_42, %c2_43, %c0_44, %c0_45] : memref<1x10x10x128xbf16, #tpu.memory_space<vmem>>, vector<1x8x8x128xbf16>
    %44 = vector.shape_cast %43 : vector<1x8x8x128xbf16> to vector<8x8x128xbf16>
    %45 = vector.shape_cast %44 : vector<8x8x128xbf16> to vector<64x128xbf16>
    %c6 = arith.constant 6 : index
    %c0_46 = arith.constant 0 : index
    %c0_47 = arith.constant 0 : index
    %46 = vector.load %arg2[%c6, %c0_46, %c0_47] : memref<9x128x128xbf16, #tpu.memory_space<vmem>>, vector<1x128x128xbf16>
    %47 = vector.shape_cast %46 : vector<1x128x128xbf16> to vector<128x128xbf16>
    %cst_48 = arith.constant dense<0.000000e+00> : vector<64x128xf32>
    %48 = tpu.matmul %45, %47, %cst_48 {dimension_numbers = #tpu.dot_dimension_numbers<[1], [0], [0], [1], [0, 0, 1, 1], [], []>} : vector<64x128xbf16>, vector<128x128xbf16>, vector<64x128xf32> -> vector<64x128xf32>
    %49 = arith.addf %42, %48 : vector<64x128xf32>
    %c0_49 = arith.constant 0 : index
    %c2_50 = arith.constant 2 : index
    %c1_51 = arith.constant 1 : index
    %c0_52 = arith.constant 0 : index
    %50 = vector.load %arg1[%c0_49, %c2_50, %c1_51, %c0_52] : memref<1x10x10x128xbf16, #tpu.memory_space<vmem>>, vector<1x8x8x128xbf16>
    %51 = vector.shape_cast %50 : vector<1x8x8x128xbf16> to vector<8x8x128xbf16>
    %52 = vector.shape_cast %51 : vector<8x8x128xbf16> to vector<64x128xbf16>
    %c7 = arith.constant 7 : index
    %c0_53 = arith.constant 0 : index
    %c0_54 = arith.constant 0 : index
    %53 = vector.load %arg2[%c7, %c0_53, %c0_54] : memref<9x128x128xbf16, #tpu.memory_space<vmem>>, vector<1x128x128xbf16>
    %54 = vector.shape_cast %53 : vector<1x128x128xbf16> to vector<128x128xbf16>
    %cst_55 = arith.constant dense<0.000000e+00> : vector<64x128xf32>
    %55 = tpu.matmul %52, %54, %cst_55 {dimension_numbers = #tpu.dot_dimension_numbers<[1], [0], [0], [1], [0, 0, 1, 1], [], []>} : vector<64x128xbf16>, vector<128x128xbf16>, vector<64x128xf32> -> vector<64x128xf32>
    %56 = arith.addf %49, %55 : vector<64x128xf32>
    %c0_56 = arith.constant 0 : index
    %c2_57 = arith.constant 2 : index
    %c2_58 = arith.constant 2 : index
    %c0_59 = arith.constant 0 : index
    %57 = vector.load %arg1[%c0_56, %c2_57, %c2_58, %c0_59] : memref<1x10x10x128xbf16, #tpu.memory_space<vmem>>, vector<1x8x8x128xbf16>
    %58 = vector.shape_cast %57 : vector<1x8x8x128xbf16> to vector<8x8x128xbf16>
    %59 = vector.shape_cast %58 : vector<8x8x128xbf16> to vector<64x128xbf16>
    %c8 = arith.constant 8 : index
    %c0_60 = arith.constant 0 : index
    %c0_61 = arith.constant 0 : index
    %60 = vector.load %arg2[%c8, %c0_60, %c0_61] : memref<9x128x128xbf16, #tpu.memory_space<vmem>>, vector<1x128x128xbf16>
    %61 = vector.shape_cast %60 : vector<1x128x128xbf16> to vector<128x128xbf16>
    %cst_62 = arith.constant dense<0.000000e+00> : vector<64x128xf32>
    %62 = tpu.matmul %59, %61, %cst_62 {dimension_numbers = #tpu.dot_dimension_numbers<[1], [0], [0], [1], [0, 0, 1, 1], [], []>} : vector<64x128xbf16>, vector<128x128xbf16>, vector<64x128xf32> -> vector<64x128xf32>
    %63 = arith.addf %56, %62 : vector<64x128xf32>
    %c0_63 = arith.constant 0 : index
    %c0_64 = arith.constant 0 : index
    %64 = vector.load %arg5[%c0_63, %c0_64] : memref<64x128xf32, #tpu.memory_space<vmem>>, vector<64x128xf32>
    tpu.vector_store %arg5[%c0_63, %c0_64], %63 {strides = array<i32>} : memref<64x128xf32, #tpu.memory_space<vmem>>, vector<64x128xf32>,
    %65 = vector.shape_cast %63 : vector<64x128xf32> to vector<8x8x128xf32>
    %cst_65 = arith.constant dense<0.000000e+00> : vector<8x128xf32>
    %66 = vector.multi_reduction <add>, %65, %cst_65 [0] : vector<8x8x128xf32> to vector<8x128xf32>
    %c0_66 = arith.constant 0 : index
    %c0_67 = arith.constant 0 : index
    %67 = vector.load %arg6[%c0_66, %c0_67] : memref<8x128xf32, #tpu.memory_space<vmem>>, vector<8x128xf32>
    tpu.vector_store %arg6[%c0_66, %c0_67], %66 {strides = array<i32>} : memref<8x128xf32, #tpu.memory_space<vmem>>, vector<8x128xf32>,
    %68 = arith.mulf %63, %63 : vector<64x128xf32>
    %69 = vector.shape_cast %68 : vector<64x128xf32> to vector<8x8x128xf32>
    %cst_68 = arith.constant dense<0.000000e+00> : vector<8x128xf32>
    %70 = vector.multi_reduction <add>, %69, %cst_68 [0] : vector<8x8x128xf32> to vector<8x128xf32>
    %c0_69 = arith.constant 0 : index
    %c0_70 = arith.constant 0 : index
    %71 = vector.load %arg7[%c0_69, %c0_70] : memref<8x128xf32, #tpu.memory_space<vmem>>, vector<8x128xf32>
    tpu.vector_store %arg7[%c0_69, %c0_70], %70 {strides = array<i32>} : memref<8x128xf32, #tpu.memory_space<vmem>>, vector<8x128xf32>,
    %c0_71 = arith.constant 0 : index
    %c0_72 = arith.constant 0 : index
    %72 = vector.load %arg3[%c0_71, %c0_72] : memref<64x4xbf16, #tpu.memory_space<vmem>>, vector<64x4xbf16>
    %c0_73 = arith.constant 0 : index
    %c0_74 = arith.constant 0 : index
    %73 = vector.load %arg4[%c0_73, %c0_74] : memref<4x128xbf16, #tpu.memory_space<vmem>>, vector<4x128xbf16>
    %cst_75 = arith.constant dense<0.000000e+00> : vector<64x128xf32>
    %74 = tpu.matmul %72, %73, %cst_75 {dimension_numbers = #tpu.dot_dimension_numbers<[1], [0], [0], [1], [0, 0, 1, 1], [], []>} : vector<64x4xbf16>, vector<4x128xbf16>, vector<64x128xf32> -> vector<64x128xf32>
    %c0_76 = arith.constant 0 : index
    %c0_77 = arith.constant 0 : index
    %75 = vector.load %arg8[%c0_76, %c0_77] : memref<64x128xf32, #tpu.memory_space<vmem>>, vector<64x128xf32>
    tpu.vector_store %arg8[%c0_76, %c0_77], %74 {strides = array<i32>} : memref<64x128xf32, #tpu.memory_space<vmem>>, vector<64x128xf32>,
    %76 = vector.shape_cast %74 : vector<64x128xf32> to vector<8x8x128xf32>
    %cst_78 = arith.constant dense<0.000000e+00> : vector<8x128xf32>
    %77 = vector.multi_reduction <add>, %76, %cst_78 [0] : vector<8x8x128xf32> to vector<8x128xf32>
    %c0_79 = arith.constant 0 : index
    %c0_80 = arith.constant 0 : index
    %78 = vector.load %arg9[%c0_79, %c0_80] : memref<8x128xf32, #tpu.memory_space<vmem>>, vector<8x128xf32>
    tpu.vector_store %arg9[%c0_79, %c0_80], %77 {strides = array<i32>} : memref<8x128xf32, #tpu.memory_space<vmem>>, vector<8x128xf32>,
    %79 = arith.mulf %74, %74 : vector<64x128xf32>
    %80 = vector.shape_cast %79 : vector<64x128xf32> to vector<8x8x128xf32>
    %cst_81 = arith.constant dense<0.000000e+00> : vector<8x128xf32>
    %81 = vector.multi_reduction <add>, %80, %cst_81 [0] : vector<8x8x128xf32> to vector<8x128xf32>
    %c0_82 = arith.constant 0 : index
    %c0_83 = arith.constant 0 : index
    %82 = vector.load %arg10[%c0_82, %c0_83] : memref<8x128xf32, #tpu.memory_space<vmem>>, vector<8x128xf32>
    tpu.vector_store %arg10[%c0_82, %c0_83], %81 {strides = array<i32>} : memref<8x128xf32, #tpu.memory_space<vmem>>, vector<8x128xf32>,
    return
  }
  func.func @transform_0(%arg0: i32) -> (i32, i32, i32, i32) {
    %c0_i32 = arith.constant 0 : i32
    %c0_i32_0 = arith.constant 0 : i32
    %c0_i32_1 = arith.constant 0 : i32
    %c0_i32_2 = arith.constant 0 : i32
    return %arg0, %c0_i32, %c0_i32_0, %c0_i32_1 : i32, i32, i32, i32
  }
  func.func @transform_1(%arg0: i32) -> (i32, i32, i32) {
    %c0_i32 = arith.constant 0 : i32
    %c0_i32_0 = arith.constant 0 : i32
    %c0_i32_1 = arith.constant 0 : i32
    %c0_i32_2 = arith.constant 0 : i32
    return %c0_i32, %c0_i32_0, %c0_i32_1 : i32, i32, i32
  }
  func.func @transform_2(%arg0: i32) -> (i32, i32) {
    %c0_i32 = arith.constant 0 : i32
    %c0_i32_0 = arith.constant 0 : i32
    return %arg0, %c0_i32 : i32, i32
  }
  func.func @transform_3(%arg0: i32) -> (i32, i32) {
    %c0_i32 = arith.constant 0 : i32
    %c0_i32_0 = arith.constant 0 : i32
    %c0_i32_1 = arith.constant 0 : i32
    return %c0_i32, %c0_i32_0 : i32, i32
  }
  func.func @transform_4(%arg0: i32) -> (i32, i32) {
    %c0_i32 = arith.constant 0 : i32
    %c0_i32_0 = arith.constant 0 : i32
    return %arg0, %c0_i32 : i32, i32
  }
  func.func @transform_5(%arg0: i32) -> (i32, i32) {
    %c0_i32 = arith.constant 0 : i32
    %c0_i32_0 = arith.constant 0 : i32
    return %arg0, %c0_i32 : i32, i32
  }
  func.func @transform_6(%arg0: i32) -> (i32, i32) {
    %c0_i32 = arith.constant 0 : i32
    %c0_i32_0 = arith.constant 0 : i32
    return %arg0, %c0_i32 : i32, i32
  }
  func.func @transform_7(%arg0: i32) -> (i32, i32) {
    %c0_i32 = arith.constant 0 : i32
    %c0_i32_0 = arith.constant 0 : i32
    return %arg0, %c0_i32 : i32, i32
  }
  func.func @transform_8(%arg0: i32) -> (i32, i32) {
    %c0_i32 = arith.constant 0 : i32
    %c0_i32_0 = arith.constant 0 : i32
    return %arg0, %c0_i32 : i32, i32
  }
  func.func @transform_9(%arg0: i32) -> (i32, i32) {
    %c0_i32 = arith.constant 0 : i32
    %c0_i32_0 = arith.constant 0 : i32
    return %arg0, %c0_i32 : i32, i32
  }
}

module attributes {stable_mosaic.version = 11 : i64} {
  func.func @bn_bn_add_relu_kernel(%arg0: i32, %arg1: memref<128x128xf32, #tpu.memory_space<vmem>>, %arg2: memref<1x128xf32, #tpu.memory_space<vmem>>, %arg3: memref<1x128xf32, #tpu.memory_space<vmem>>, %arg4: memref<128x128xf32, #tpu.memory_space<vmem>>, %arg5: memref<1x128xf32, #tpu.memory_space<vmem>>, %arg6: memref<1x128xf32, #tpu.memory_space<vmem>>, %arg7: memref<128x128xf32, #tpu.memory_space<vmem>>) attributes {dimension_semantics = [#tpu.dimension_semantics<parallel>], iteration_bounds = array<i64: 1>, scalar_prefetch = 0 : i64, scratch_operands = 0 : i64, tpu.core_type = #tpu.core_type<tc>, window_params = [{transform_indices = @transform_0, window_bounds = array<i64: 128, 128>}, {pipeline_mode = #tpu.pipeline_mode<synchronous>, transform_indices = @transform_1, window_bounds = array<i64: 1, 128>}, {pipeline_mode = #tpu.pipeline_mode<synchronous>, transform_indices = @transform_2, window_bounds = array<i64: 1, 128>}, {transform_indices = @transform_3, window_bounds = array<i64: 128, 128>}, {pipeline_mode = #tpu.pipeline_mode<synchronous>, transform_indices = @transform_4, window_bounds = array<i64: 1, 128>}, {pipeline_mode = #tpu.pipeline_mode<synchronous>, transform_indices = @transform_5, window_bounds = array<i64: 1, 128>}, {transform_indices = @transform_6, window_bounds = array<i64: 128, 128>}]} {
    %c0 = arith.constant 0 : index
    %c0_0 = arith.constant 0 : index
    %0 = vector.load %arg1[%c0, %c0_0] : memref<128x128xf32, #tpu.memory_space<vmem>>, vector<128x128xf32>
    %c0_1 = arith.constant 0 : index
    %c0_2 = arith.constant 0 : index
    %1 = vector.load %arg2[%c0_1, %c0_2] : memref<1x128xf32, #tpu.memory_space<vmem>>, vector<1x128xf32>
    %2 = vector.broadcast %1 : vector<1x128xf32> to vector<128x128xf32>
    %3 = arith.mulf %0, %2 : vector<128x128xf32>
    %c0_3 = arith.constant 0 : index
    %c0_4 = arith.constant 0 : index
    %4 = vector.load %arg3[%c0_3, %c0_4] : memref<1x128xf32, #tpu.memory_space<vmem>>, vector<1x128xf32>
    %5 = vector.broadcast %4 : vector<1x128xf32> to vector<128x128xf32>
    %6 = arith.addf %3, %5 : vector<128x128xf32>
    %c0_5 = arith.constant 0 : index
    %c0_6 = arith.constant 0 : index
    %7 = vector.load %arg4[%c0_5, %c0_6] : memref<128x128xf32, #tpu.memory_space<vmem>>, vector<128x128xf32>
    %c0_7 = arith.constant 0 : index
    %c0_8 = arith.constant 0 : index
    %8 = vector.load %arg5[%c0_7, %c0_8] : memref<1x128xf32, #tpu.memory_space<vmem>>, vector<1x128xf32>
    %9 = vector.broadcast %8 : vector<1x128xf32> to vector<128x128xf32>
    %10 = arith.mulf %7, %9 : vector<128x128xf32>
    %11 = arith.addf %6, %10 : vector<128x128xf32>
    %c0_9 = arith.constant 0 : index
    %c0_10 = arith.constant 0 : index
    %12 = vector.load %arg6[%c0_9, %c0_10] : memref<1x128xf32, #tpu.memory_space<vmem>>, vector<1x128xf32>
    %13 = vector.broadcast %12 : vector<1x128xf32> to vector<128x128xf32>
    %14 = arith.addf %11, %13 : vector<128x128xf32>
    %cst = arith.constant 0.000000e+00 : f32
    %15 = vector.broadcast %cst : f32 to vector<128x128xf32>
    %16 = arith.maximumf %14, %15 : vector<128x128xf32>
    %c0_11 = arith.constant 0 : index
    %c0_12 = arith.constant 0 : index
    %17 = vector.load %arg7[%c0_11, %c0_12] : memref<128x128xf32, #tpu.memory_space<vmem>>, vector<128x128xf32>
    tpu.vector_store %arg7[%c0_11, %c0_12], %16 {strides = array<i32>} : memref<128x128xf32, #tpu.memory_space<vmem>>, vector<128x128xf32>,
    return
  }
  func.func @transform_0(%arg0: i32) -> (i32, i32) {
    %c0_i32 = arith.constant 0 : i32
    %c0_i32_0 = arith.constant 0 : i32
    return %arg0, %c0_i32 : i32, i32
  }
  func.func @transform_1(%arg0: i32) -> (i32, i32) {
    %c0_i32 = arith.constant 0 : i32
    %c0_i32_0 = arith.constant 0 : i32
    %c0_i32_1 = arith.constant 0 : i32
    return %c0_i32, %c0_i32_0 : i32, i32
  }
  func.func @transform_2(%arg0: i32) -> (i32, i32) {
    %c0_i32 = arith.constant 0 : i32
    %c0_i32_0 = arith.constant 0 : i32
    %c0_i32_1 = arith.constant 0 : i32
    return %c0_i32, %c0_i32_0 : i32, i32
  }
  func.func @transform_3(%arg0: i32) -> (i32, i32) {
    %c0_i32 = arith.constant 0 : i32
    %c0_i32_0 = arith.constant 0 : i32
    return %arg0, %c0_i32 : i32, i32
  }
  func.func @transform_4(%arg0: i32) -> (i32, i32) {
    %c0_i32 = arith.constant 0 : i32
    %c0_i32_0 = arith.constant 0 : i32
    %c0_i32_1 = arith.constant 0 : i32
    return %c0_i32, %c0_i32_0 : i32, i32
  }
  func.func @transform_5(%arg0: i32) -> (i32, i32) {
    %c0_i32 = arith.constant 0 : i32
    %c0_i32_0 = arith.constant 0 : i32
    %c0_i32_1 = arith.constant 0 : i32
    return %c0_i32, %c0_i32_0 : i32, i32
  }
  func.func @transform_6(%arg0: i32) -> (i32, i32) {
    %c0_i32 = arith.constant 0 : i32
    %c0_i32_0 = arith.constant 0 : i32
    return %arg0, %c0_i32 : i32, i32
  }
}

</mosaic_0001>

<llo_original>
// kernel: _residual_block_impl.5
$region0: #{_residual_block_impl.5}
  #allocation0 [shape = 'u32[]', space=smem, size = 0x4, offset = 0x4, fixed_abs, tag = 'smem constant byte address 0x4 - core index']
  #allocation1 [shape = 'u32[144,128]{1,0:T(1,128)}', space=vmem, size = 0x12000, scoped, tag = 'internal scratch']
  %s0 = inlined_call_operand.vmem [shape: f32[128,128], index: 0, kind: input, shape index: {}]
  %s1 = inlined_call_operand.vmem [shape: f32[1,128], index: 1, kind: input, shape index: {}]
  %s2 = inlined_call_operand.vmem [shape: f32[1,128], index: 2, kind: input, shape index: {}]
  %s3 = inlined_call_operand.vmem [shape: bf16[128,128], index: 3, kind: output, shape index: {}]
  %s4 = sld [smem:[#allocation0]]
  $region22: #{_residual_block_impl.5} parent=0
    _
  %s6 = ssub.s32 1, %s4
  %s7 = scalar_select 0, %s6, %s4
  // Predicated region
  $region2: #{_residual_block_impl.5} parent=0 // pred_check
    _
  $region3: #{_residual_block_impl.5} parent=0 // pred_check_branch
    %9 = sbr.rel (0) target = $region5
  $region4: #{_residual_block_impl.5} parent=0 // pred_region
    _
  $region5: #{_residual_block_impl.5} parent=0 // pred_fallthru
    _
  // Predicated region
  $region6: #{_residual_block_impl.5} parent=0 // pred_check
    _
  $region7: #{_residual_block_impl.5} parent=0 // pred_check_branch
    %11 = sbr.rel (0) target = $region9
  $region8: #{_residual_block_impl.5} parent=0 // pred_region
    _
  $region9: #{_residual_block_impl.5} parent=0 // pred_fallthru
    _
  // Predicated region
  $region10: #{_residual_block_impl.5} parent=0 // pred_check
    _
  $region11: #{_residual_block_impl.5} parent=0 // pred_check_branch
    %13 = sbr.rel (0) target = $region13
  $region12: #{_residual_block_impl.5} parent=0 // pred_region
    _
  $region13: #{_residual_block_impl.5} parent=0 // pred_fallthru
    _
  %v14 = vld [vmem:[%s0] sm:$0xff]
  %v15 = vld [vmem:[%s0 + $0x8] sm:$0xff]
  %v16 = vld [vmem:[%s0 + $0x10] sm:$0xff]
  %v17 = vld [vmem:[%s0 + $0x18] sm:$0xff]
  %v18 = vld [vmem:[%s0 + $0x20] sm:$0xff]
  %v19 = vld [vmem:[%s0 + $0x28] sm:$0xff]
  %v20 = vld [vmem:[%s0 + $0x30] sm:$0xff]
  %v21 = vld [vmem:[%s0 + $0x38] sm:$0xff]
  %v22 = vld [vmem:[%s0 + $0x40] sm:$0xff]
  %v23 = vld [vmem:[%s0 + $0x48] sm:$0xff]
  %v24 = vld [vmem:[%s0 + $0x50] sm:$0xff]
  %v25 = vld [vmem:[%s0 + $0x58] sm:$0xff]
  %v26 = vld [vmem:[%s0 + $0x60] sm:$0xff]
  %v27 = vld [vmem:[%s0 + $0x68] sm:$0xff]
  %v28 = vld [vmem:[%s0 + $0x70] sm:$0xff]
  %v29 = vld [vmem:[%s0 + $0x78] sm:$0xff]
  %v30 = vld [vmem:[%s1] sm:$0x1]
  %v32 = vlaneseq
  %v33 = vshrl.u32 %v32, 7
  %v34 = vsub.s32 0, %v33
  %v35 = vrot.slane %v30, %v34
  %v37 = vmul.f32 %v14, %v35
  %v38 = vmul.f32 %v15, %v35
  %v39 = vmul.f32 %v16, %v35
  %v40 = vmul.f32 %v17, %v35
  %v41 = vmul.f32 %v18, %v35
  %v42 = vmul.f32 %v19, %v35
  %v43 = vmul.f32 %v20, %v35
  %v44 = vmul.f32 %v21, %v35
  %v45 = vmul.f32 %v22, %v35
  %v46 = vmul.f32 %v23, %v35
  %v47 = vmul.f32 %v24, %v35
  %v48 = vmul.f32 %v25, %v35
  %v49 = vmul.f32 %v26, %v35
  %v50 = vmul.f32 %v27, %v35
  %v51 = vmul.f32 %v28, %v35
  %v52 = vmul.f32 %v29, %v35
  %v53 = vld [vmem:[%s2] sm:$0x1]
  %v55 = vlaneseq
  %v56 = vshrl.u32 %v55, 7
  %v57 = vsub.s32 0, %v56
  %v58 = vrot.slane %v53, %v57
  %v60 = vadd.f32 %v37, %v58
  %v61 = vadd.f32 %v38, %v58
  %v62 = vadd.f32 %v39, %v58
  %v63 = vadd.f32 %v40, %v58
  %v64 = vadd.f32 %v41, %v58
  %v65 = vadd.f32 %v42, %v58
  %v66 = vadd.f32 %v43, %v58
  %v67 = vadd.f32 %v44, %v58
  %v68 = vadd.f32 %v45, %v58
  %v69 = vadd.f32 %v46, %v58
  %v70 = vadd.f32 %v47, %v58
  %v71 = vadd.f32 %v48, %v58
  %v72 = vadd.f32 %v49, %v58
  %v73 = vadd.f32 %v50, %v58
  %v74 = vadd.f32 %v51, %v58
  %v75 = vadd.f32 %v52, %v58
  %v76 = vmax.f32 %v60, 0.0
  %v77 = vmax.f32 %v61, 0.0
  %v78 = vmax.f32 %v62, 0.0
  %v79 = vmax.f32 %v63, 0.0
  %v80 = vmax.f32 %v64, 0.0
  %v81 = vmax.f32 %v65, 0.0
  %v82 = vmax.f32 %v66, 0.0
  %v83 = vmax.f32 %v67, 0.0
  %v84 = vmax.f32 %v68, 0.0
  %v85 = vmax.f32 %v69, 0.0
  %v86 = vmax.f32 %v70, 0.0
  %v87 = vmax.f32 %v71, 0.0
  %v88 = vmax.f32 %v72, 0.0
  %v89 = vmax.f32 %v73, 0.0
  %v90 = vmax.f32 %v74, 0.0
  %v91 = vmax.f32 %v75, 0.0
  %v92 = vpack.c.bf16 %v77, %v76
  %v93 = vpack.c.bf16 %v79, %v78
  %v94 = vpack.c.bf16 %v81, %v80
  %v95 = vpack.c.bf16 %v83, %v82
  %v96 = vpack.c.bf16 %v85, %v84
  %v97 = vpack.c.bf16 %v87, %v86
  %v98 = vpack.c.bf16 %v89, %v88
  %v99 = vpack.c.bf16 %v91, %v90
  %v108 = vunpack.c.l.b16 %v92
  %v109 = vunpack.c.h.b16 %v92
  %v110 = vunpack.c.l.b16 %v93
  %v111 = vunpack.c.h.b16 %v93
  %v112 = vunpack.c.l.b16 %v94
  %v113 = vunpack.c.h.b16 %v94
  %v114 = vunpack.c.l.b16 %v95
  %v115 = vunpack.c.h.b16 %v95
  %v116 = vunpack.c.l.b16 %v96
  %v117 = vunpack.c.h.b16 %v96
  %v118 = vunpack.c.l.b16 %v97
  %v119 = vunpack.c.h.b16 %v97
  %v120 = vunpack.c.l.b16 %v98
  %v121 = vunpack.c.h.b16 %v98
  %v122 = vunpack.c.l.b16 %v99
  %v123 = vunpack.c.h.b16 %v99
  %v124 = vpack.c.b16 %v108, %v108
  %v125 = vpack.c.b16 %v109, %v109
  %v126 = vpack.c.b16 %v110, %v110
  %v127 = vpack.c.b16 %v111, %v111
  %v128 = vpack.c.b16 %v112, %v112
  %v129 = vpack.c.b16 %v113, %v113
  %v130 = vpack.c.b16 %v114, %v114
  %v131 = vpack.c.b16 %v115, %v115
  %v132 = vpack.c.b16 %v116, %v116
  %v133 = vpack.c.b16 %v117, %v117
  %v134 = vpack.c.b16 %v118, %v118
  %v135 = vpack.c.b16 %v119, %v119
  %v136 = vpack.c.b16 %v120, %v120
  %v137 = vpack.c.b16 %v121, %v121
  %v138 = vpack.c.b16 %v122, %v122
  %v139 = vpack.c.b16 %v123, %v123
  %156 = vst [vmem:[%s3] sm:$0xf] %v124
  %157 = vst [vmem:[%s3 + $0x4] sm:$0xf] %v125
  %158 = vst [vmem:[%s3 + $0x8] sm:$0xf] %v126
  %159 = vst [vmem:[%s3 + $0xc] sm:$0xf] %v127
  %160 = vst [vmem:[%s3 + $0x10] sm:$0xf] %v128
  %161 = vst [vmem:[%s3 + $0x14] sm:$0xf] %v129
  %162 = vst [vmem:[%s3 + $0x18] sm:$0xf] %v130
  %163 = vst [vmem:[%s3 + $0x1c] sm:$0xf] %v131
  %164 = vst [vmem:[%s3 + $0x20] sm:$0xf] %v132
  %165 = vst [vmem:[%s3 + $0x24] sm:$0xf] %v133
  %166 = vst [vmem:[%s3 + $0x28] sm:$0xf] %v134
  %167 = vst [vmem:[%s3 + $0x2c] sm:$0xf] %v135
  %168 = vst [vmem:[%s3 + $0x30] sm:$0xf] %v136
  %169 = vst [vmem:[%s3 + $0x34] sm:$0xf] %v137
  %170 = vst [vmem:[%s3 + $0x38] sm:$0xf] %v138
  %171 = vst [vmem:[%s3 + $0x3c] sm:$0xf] %v139
  // Predicated region
  $region14: #{_residual_block_impl.5} parent=0 // pred_check
    _
  $region15: #{_residual_block_impl.5} parent=0 // pred_check_branch
    %173 = sbr.rel (0) target = $region17
  $region16: #{_residual_block_impl.5} parent=0 // pred_region
    _
  $region17: #{_residual_block_impl.5} parent=0 // pred_fallthru
    _
  // Predicated region
  $region18: #{_residual_block_impl.5} parent=0 // pred_check
    _
  $region19: #{_residual_block_impl.5} parent=0 // pred_check_branch
    %175 = sbr.rel (0) target = $region21
  $region20: #{_residual_block_impl.5} parent=0 // pred_region
    _
  $region21: #{_residual_block_impl.5} parent=0 // pred_fallthru
    _

// kernel: _residual_block_impl.7
$region0: #{_residual_block_impl.7}
  #allocation0 [shape = 'u32[]', space=smem, size = 0x4, offset = 0x4, fixed_abs, tag = 'smem constant byte address 0x4 - core index']
  #allocation1 [shape = 'u32[144,128]{1,0:T(1,128)}', space=vmem, size = 0x12000, scoped, tag = 'internal scratch']
  %s0 = inlined_call_operand.vmem [shape: f32[128,128], index: 0, kind: input, shape index: {}]
  %s1 = inlined_call_operand.vmem [shape: f32[1,128], index: 1, kind: input, shape index: {}]
  %s2 = inlined_call_operand.vmem [shape: f32[1,128], index: 2, kind: input, shape index: {}]
  %s3 = inlined_call_operand.vmem [shape: f32[128,128], index: 3, kind: input, shape index: {}]
  %s4 = inlined_call_operand.vmem [shape: f32[1,128], index: 4, kind: input, shape index: {}]
  %s5 = inlined_call_operand.vmem [shape: f32[1,128], index: 5, kind: input, shape index: {}]
  %s6 = inlined_call_operand.vmem [shape: f32[128,128], index: 6, kind: output, shape index: {}]
  %s7 = sld [smem:[#allocation0]]
  $region34: #{_residual_block_impl.7} parent=0
    _
  %s9 = ssub.s32 1, %s7
  %s10 = scalar_select 0, %s9, %s7
  // Predicated region
  $region2: #{_residual_block_impl.7} parent=0 // pred_check
    _
  $region3: #{_residual_block_impl.7} parent=0 // pred_check_branch
    %12 = sbr.rel (0) target = $region5
  $region4: #{_residual_block_impl.7} parent=0 // pred_region
    _
  $region5: #{_residual_block_impl.7} parent=0 // pred_fallthru
    _
  // Predicated region
  $region6: #{_residual_block_impl.7} parent=0 // pred_check
    _
  $region7: #{_residual_block_impl.7} parent=0 // pred_check_branch
    %14 = sbr.rel (0) target = $region9
  $region8: #{_residual_block_impl.7} parent=0 // pred_region
    _
  $region9: #{_residual_block_impl.7} parent=0 // pred_fallthru
    _
  // Predicated region
  $region10: #{_residual_block_impl.7} parent=0 // pred_check
    _
  $region11: #{_residual_block_impl.7} parent=0 // pred_check_branch
    %16 = sbr.rel (0) target = $region13
  $region12: #{_residual_block_impl.7} parent=0 // pred_region
    _
  $region13: #{_residual_block_impl.7} parent=0 // pred_fallthru
    _
  // Predicated region
  $region14: #{_residual_block_impl.7} parent=0 // pred_check
    _
  $region15: #{_residual_block_impl.7} parent=0 // pred_check_branch
    %18 = sbr.rel (0) target = $region17
  $region16: #{_residual_block_impl.7} parent=0 // pred_region
    _
  $region17: #{_residual_block_impl.7} parent=0 // pred_fallthru
    _
  // Predicated region
  $region18: #{_residual_block_impl.7} parent=0 // pred_check
    _
  $region19: #{_residual_block_impl.7} parent=0 // pred_check_branch
    %20 = sbr.rel (0) target = $region21
  $region20: #{_residual_block_impl.7} parent=0 // pred_region
    _
  $region21: #{_residual_block_impl.7} parent=0 // pred_fallthru
    _
  // Predicated region
  $region22: #{_residual_block_impl.7} parent=0 // pred_check
    _
  $region23: #{_residual_block_impl.7} parent=0 // pred_check_branch
    %22 = sbr.rel (0) target = $region25
  $region24: #{_residual_block_impl.7} parent=0 // pred_region
    _
  $region25: #{_residual_block_impl.7} parent=0 // pred_fallthru
    _
  %v23 = vld [vmem:[%s0] sm:$0xff]
  %v24 = vld [vmem:[%s0 + $0x8] sm:$0xff]
  %v25 = vld [vmem:[%s0 + $0x10] sm:$0xff]
  %v26 = vld [vmem:[%s0 + $0x18] sm:$0xff]
  %v27 = vld [vmem:[%s0 + $0x20] sm:$0xff]
  %v28 = vld [vmem:[%s0 + $0x28] sm:$0xff]
  %v29 = vld [vmem:[%s0 + $0x30] sm:$0xff]
  %v30 = vld [vmem:[%s0 + $0x38] sm:$0xff]
  %v31 = vld [vmem:[%s0 + $0x40] sm:$0xff]
  %v32 = vld [vmem:[%s0 + $0x48] sm:$0xff]
  %v33 = vld [vmem:[%s0 + $0x50] sm:$0xff]
  %v34 = vld [vmem:[%s0 + $0x58] sm:$0xff]
  %v35 = vld [vmem:[%s0 + $0x60] sm:$0xff]
  %v36 = vld [vmem:[%s0 + $0x68] sm:$0xff]
  %v37 = vld [vmem:[%s0 + $0x70] sm:$0xff]
  %v38 = vld [vmem:[%s0 + $0x78] sm:$0xff]
  %v39 = vld [vmem:[%s1] sm:$0x1]
  %v41 = vlaneseq
  %v42 = vshrl.u32 %v41, 7
  %v43 = vsub.s32 0, %v42
  %v44 = vrot.slane %v39, %v43
  %v46 = vmul.f32 %v23, %v44
  %v47 = vmul.f32 %v24, %v44
  %v48 = vmul.f32 %v25, %v44
  %v49 = vmul.f32 %v26, %v44
  %v50 = vmul.f32 %v27, %v44
  %v51 = vmul.f32 %v28, %v44
  %v52 = vmul.f32 %v29, %v44
  %v53 = vmul.f32 %v30, %v44
  %v54 = vmul.f32 %v31, %v44
  %v55 = vmul.f32 %v32, %v44
  %v56 = vmul.f32 %v33, %v44
  %v57 = vmul.f32 %v34, %v44
  %v58 = vmul.f32 %v35, %v44
  %v59 = vmul.f32 %v36, %v44
  %v60 = vmul.f32 %v37, %v44
  %v61 = vmul.f32 %v38, %v44
  %v62 = vld [vmem:[%s2] sm:$0x1]
  %v64 = vlaneseq
  %v65 = vshrl.u32 %v64, 7
  %v66 = vsub.s32 0, %v65
  %v67 = vrot.slane %v62, %v66
  %v69 = vadd.f32 %v46, %v67
  %v70 = vadd.f32 %v47, %v67
  %v71 = vadd.f32 %v48, %v67
  %v72 = vadd.f32 %v49, %v67
  %v73 = vadd.f32 %v50, %v67
  %v74 = vadd.f32 %v51, %v67
  %v75 = vadd.f32 %v52, %v67
  %v76 = vadd.f32 %v53, %v67
  %v77 = vadd.f32 %v54, %v67
  %v78 = vadd.f32 %v55, %v67
  %v79 = vadd.f32 %v56, %v67
  %v80 = vadd.f32 %v57, %v67
  %v81 = vadd.f32 %v58, %v67
  %v82 = vadd.f32 %v59, %v67
  %v83 = vadd.f32 %v60, %v67
  %v84 = vadd.f32 %v61, %v67
  %v85 = vld [vmem:[%s3] sm:$0xff]
  %v86 = vld [vmem:[%s3 + $0x8] sm:$0xff]
  %v87 = vld [vmem:[%s3 + $0x10] sm:$0xff]
  %v88 = vld [vmem:[%s3 + $0x18] sm:$0xff]
  %v89 = vld [vmem:[%s3 + $0x20] sm:$0xff]
  %v90 = vld [vmem:[%s3 + $0x28] sm:$0xff]
  %v91 = vld [vmem:[%s3 + $0x30] sm:$0xff]
  %v92 = vld [vmem:[%s3 + $0x38] sm:$0xff]
  %v93 = vld [vmem:[%s3 + $0x40] sm:$0xff]
  %v94 = vld [vmem:[%s3 + $0x48] sm:$0xff]
  %v95 = vld [vmem:[%s3 + $0x50] sm:$0xff]
  %v96 = vld [vmem:[%s3 + $0x58] sm:$0xff]
  %v97 = vld [vmem:[%s3 + $0x60] sm:$0xff]
  %v98 = vld [vmem:[%s3 + $0x68] sm:$0xff]
  %v99 = vld [vmem:[%s3 + $0x70] sm:$0xff]
  %v100 = vld [vmem:[%s3 + $0x78] sm:$0xff]
  %v101 = vld [vmem:[%s4] sm:$0x1]
  %v103 = vlaneseq
  %v104 = vshrl.u32 %v103, 7
  %v105 = vsub.s32 0, %v104
  %v106 = vrot.slane %v101, %v105
  %v108 = vmul.f32 %v85, %v106
  %v109 = vmul.f32 %v86, %v106
  %v110 = vmul.f32 %v87, %v106
  %v111 = vmul.f32 %v88, %v106
  %v112 = vmul.f32 %v89, %v106
  %v113 = vmul.f32 %v90, %v106
  %v114 = vmul.f32 %v91, %v106
  %v115 = vmul.f32 %v92, %v106
  %v116 = vmul.f32 %v93, %v106
  %v117 = vmul.f32 %v94, %v106
  %v118 = vmul.f32 %v95, %v106
  %v119 = vmul.f32 %v96, %v106
  %v120 = vmul.f32 %v97, %v106
  %v121 = vmul.f32 %v98, %v106
  %v122 = vmul.f32 %v99, %v106
  %v123 = vmul.f32 %v100, %v106
  %v124 = vadd.f32 %v69, %v108
  %v125 = vadd.f32 %v70, %v109
  %v126 = vadd.f32 %v71, %v110
  %v127 = vadd.f32 %v72, %v111
  %v128 = vadd.f32 %v73, %v112
  %v129 = vadd.f32 %v74, %v113
  %v130 = vadd.f32 %v75, %v114
  %v131 = vadd.f32 %v76, %v115
  %v132 = vadd.f32 %v77, %v116
  %v133 = vadd.f32 %v78, %v117
  %v134 = vadd.f32 %v79, %v118
  %v135 = vadd.f32 %v80, %v119
  %v136 = vadd.f32 %v81, %v120
  %v137 = vadd.f32 %v82, %v121
  %v138 = vadd.f32 %v83, %v122
  %v139 = vadd.f32 %v84, %v123
  %v140 = vld [vmem:[%s5] sm:$0x1]
  %v142 = vlaneseq
  %v143 = vshrl.u32 %v142, 7
  %v144 = vsub.s32 0, %v143
  %v145 = vrot.slane %v140, %v144
  %v147 = vadd.f32 %v124, %v145
  %v148 = vadd.f32 %v125, %v145
  %v149 = vadd.f32 %v126, %v145
  %v150 = vadd.f32 %v127, %v145
  %v151 = vadd.f32 %v128, %v145
  %v152 = vadd.f32 %v129, %v145
  %v153 = vadd.f32 %v130, %v145
  %v154 = vadd.f32 %v131, %v145
  %v155 = vadd.f32 %v132, %v145
  %v156 = vadd.f32 %v133, %v145
  %v157 = vadd.f32 %v134, %v145
  %v158 = vadd.f32 %v135, %v145
  %v159 = vadd.f32 %v136, %v145
  %v160 = vadd.f32 %v137, %v145
  %v161 = vadd.f32 %v138, %v145
  %v162 = vadd.f32 %v139, %v145
  %v163 = vmax.f32 %v147, 0.0
  %v164 = vmax.f32 %v148, 0.0
  %v165 = vmax.f32 %v149, 0.0
  %v166 = vmax.f32 %v150, 0.0
  %v167 = vmax.f32 %v151, 0.0
  %v168 = vmax.f32 %v152, 0.0
  %v169 = vmax.f32 %v153, 0.0
  %v170 = vmax.f32 %v154, 0.0
  %v171 = vmax.f32 %v155, 0.0
  %v172 = vmax.f32 %v156, 0.0
  %v173 = vmax.f32 %v157, 0.0
  %v174 = vmax.f32 %v158, 0.0
  %v175 = vmax.f32 %v159, 0.0
  %v176 = vmax.f32 %v160, 0.0
  %v177 = vmax.f32 %v161, 0.0
  %v178 = vmax.f32 %v162, 0.0
  %179 = vst [vmem:[%s6] sm:$0xff] %v163
  %180 = vst [vmem:[%s6 + $0x8] sm:$0xff] %v164
  %181 = vst [vmem:[%s6 + $0x10] sm:$0xff] %v165
  %182 = vst [vmem:[%s6 + $0x18] sm:$0xff] %v166
  %183 = vst [vmem:[%s6 + $0x20] sm:$0xff] %v167
  %184 = vst [vmem:[%s6 + $0x28] sm:$0xff] %v168
  %185 = vst [vmem:[%s6 + $0x30] sm:$0xff] %v169
  %186 = vst [vmem:[%s6 + $0x38] sm:$0xff] %v170
  %187 = vst [vmem:[%s6 + $0x40] sm:$0xff] %v171
  %188 = vst [vmem:[%s6 + $0x48] sm:$0xff] %v172
  %189 = vst [vmem:[%s6 + $0x50] sm:$0xff] %v173
  %190 = vst [vmem:[%s6 + $0x58] sm:$0xff] %v174
  %191 = vst [vmem:[%s6 + $0x60] sm:$0xff] %v175
  %192 = vst [vmem:[%s6 + $0x68] sm:$0xff] %v176
  %193 = vst [vmem:[%s6 + $0x70] sm:$0xff] %v177
  %194 = vst [vmem:[%s6 + $0x78] sm:$0xff] %v178
  // Predicated region
  $region26: #{_residual_block_impl.7} parent=0 // pred_check
    _
  $region27: #{_residual_block_impl.7} parent=0 // pred_check_branch
    %196 = sbr.rel (0) target = $region29
  $region28: #{_residual_block_impl.7} parent=0 // pred_region
    _
  $region29: #{_residual_block_impl.7} parent=0 // pred_fallthru
    _
  // Predicated region
  $region30: #{_residual_block_impl.7} parent=0 // pred_check
    _
  $region31: #{_residual_block_impl.7} parent=0 // pred_check_branch
    %198 = sbr.rel (0) target = $region33
  $region32: #{_residual_block_impl.7} parent=0 // pred_region
    _
  $region33: #{_residual_block_impl.7} parent=0 // pred_fallthru
    _

// kernel: _residual_block_impl.4
$region0: #{_residual_block_impl.4}
  #allocation0 [shape = 'u32[]', space=smem, size = 0x4, offset = 0x4, fixed_abs, tag = 'smem constant byte address 0x4 - core index']
  #allocation1 [shape = 'u32[144,128]{1,0:T(1,128)}', space=vmem, size = 0x12000, scoped, tag = 'internal scratch']
  %s0 = inlined_call_operand.vmem [shape: bf16[2,9,9,4], index: 0, kind: input, shape index: {}]
  %s1 = inlined_call_operand.vmem [shape: bf16[2,9,9,4], index: 1, kind: input, shape index: {}]
  %s2 = inlined_call_operand.vmem [shape: bf16[2,9,9,4], index: 2, kind: input, shape index: {}]
  %s3 = inlined_call_operand.vmem [shape: bf16[2,9,9,4], index: 3, kind: input, shape index: {}]
  %s4 = inlined_call_operand.vmem [shape: bf16[9,4,128], index: 4, kind: input, shape index: {}]
  %s5 = inlined_call_operand.vmem [shape: f32[128,128], index: 5, kind: output, shape index: {0}]
  %s6 = inlined_call_operand.vmem [shape: f32[16,128], index: 6, kind: output, shape index: {1}]
  %s7 = inlined_call_operand.vmem [shape: f32[16,128], index: 7, kind: output, shape index: {2}]
  %8 = xla_tuple %s5, %s6, %s7
  %s9 = sld [smem:[#allocation0]]
  $region69: #{_residual_block_impl.4} parent=0
    _
  %s11 = ssub.s32 1, %s9
  %s12 = scalar_select 0, %s11, %s9
  loop: start=0, step=1, limit=4
  $region2: #{_residual_block_impl.4} parent=0 // loop_pre_header
    _
  $region3: #{_residual_block_impl.4} parent=0 // loop_header
    %s14 = sphi 0, %s18
    %p15 = scmp.ge.s32.totalorder %s14, 4
    %s24 = sphi 0, %s26
    %s27 = sphi 0, %s24
    %s28 = sphi 0, %s27
    %s44 = sphi 0, %s28
    %s50 = sphi 0, %s52
    %s53 = sphi 0, %s50
    %s54 = sphi 0, %s53
    %s70 = sphi 0, %s54
    %s76 = sphi 0, %s78
    %s79 = sphi 0, %s76
    %s80 = sphi 0, %s79
    %s96 = sphi 0, %s80
    %s102 = sphi 0, %s104
    %s105 = sphi 0, %s102
    %s106 = sphi 0, %s105
    %s122 = sphi 0, %s106
    %s126 = sphi 0, %s126
    %s128 = sphi 0, %s126
    %s129 = sphi 0, %s128
    %s143 = sphi 0, %s129
    %s149 = sphi 0, %s151
    %s152 = sphi 0, %s149
    %s153 = sphi 0, %s152
    %s169 = sphi 0, %s153
    %s175 = sphi 0, %s177
    %s178 = sphi 0, %s175
    %s179 = sphi 0, %s178
    %s195 = sphi 0, %s179
    %s201 = sphi 0, %s203
    %s204 = sphi 0, %s201
    %s205 = sphi 0, %s204
    %s221 = sphi 0, %s205
  $region4: #{_residual_block_impl.4} parent=0 // loop_header_branch
    %17 = sbr.rel (%p15) target = $region8
  $region5: #{_residual_block_impl.4} parent=0 // loop_body
    %s19 = ssub.s32 %s14, 1
    %s20 = ssub.s32 %s14, 2
    %s21 = sadd.s32 %s14, 1
    %s22 = ssub.s32 %s14, %s21
    %p23 = scmp.eq.s32.totalorder %s22, 0
    %s25 = sadd.s32 %s24, 1
    %s26 = scalar_select %p23, %s24, %s25
    %p29 = pneg %p23
    %p30 = scmp.eq.s32.totalorder %s14, 1
    %p31 = por %p29, %p30
    %p32 = scmp.ne.s32.totalorder %s24, %s27
    %p33 = scmp.eq.s32.totalorder %s14, 0
    %p34 = por %p32, %p33
    %p35 = scmp.ne.s32.totalorder %s24, %s27
    %p36 = scmp.eq.s32.totalorder %s19, 1
    %p37 = por %p35, %p36
    %p38 = scmp.ne.s32.totalorder %s27, %s28
    %p39 = scmp.eq.s32.totalorder %s19, 0
    %p40 = por %p38, %p39
    %p41 = scmp.ne.s32.totalorder %s27, %s28
    %p42 = scmp.eq.s32.totalorder %s20, 1
    %p43 = por %p41, %p42
    %p45 = scmp.ne.s32.totalorder %s28, %s44
    %p46 = scmp.eq.s32.totalorder %s20, 0
    %p47 = por %p45, %p46
    %s48 = ssub.s32 %s14, %s21
    %p49 = scmp.eq.s32.totalorder %s48, 0
    %s51 = sadd.s32 %s50, 1
    %s52 = scalar_select %p49, %s50, %s51
    %p55 = pneg %p49
    %p56 = scmp.eq.s32.totalorder %s14, 1
    %p57 = por %p55, %p56
    %p58 = scmp.ne.s32.totalorder %s50, %s53
    %p59 = scmp.eq.s32.totalorder %s14, 0
    %p60 = por %p58, %p59
    %p61 = scmp.ne.s32.totalorder %s50, %s53
    %p62 = scmp.eq.s32.totalorder %s19, 1
    %p63 = por %p61, %p62
    %p64 = scmp.ne.s32.totalorder %s53, %s54
    %p65 = scmp.eq.s32.totalorder %s19, 0
    %p66 = por %p64, %p65
    %p67 = scmp.ne.s32.totalorder %s53, %s54
    %p68 = scmp.eq.s32.totalorder %s20, 1
    %p69 = por %p67, %p68
    %p71 = scmp.ne.s32.totalorder %s54, %s70
    %p72 = scmp.eq.s32.totalorder %s20, 0
    %p73 = por %p71, %p72
    %s74 = ssub.s32 %s14, %s21
    %p75 = scmp.eq.s32.totalorder %s74, 0
    %s77 = sadd.s32 %s76, 1
    %s78 = scalar_select %p75, %s76, %s77
    %p81 = pneg %p75
    %p82 = scmp.eq.s32.totalorder %s14, 1
    %p83 = por %p81, %p82
    %p84 = scmp.ne.s32.totalorder %s76, %s79
    %p85 = scmp.eq.s32.totalorder %s14, 0
    %p86 = por %p84, %p85
    %p87 = scmp.ne.s32.totalorder %s76, %s79
    %p88 = scmp.eq.s32.totalorder %s19, 1
    %p89 = por %p87, %p88
    %p90 = scmp.ne.s32.totalorder %s79, %s80
    %p91 = scmp.eq.s32.totalorder %s19, 0
    %p92 = por %p90, %p91
    %p93 = scmp.ne.s32.totalorder %s79, %s80
    %p94 = scmp.eq.s32.totalorder %s20, 1
    %p95 = por %p93, %p94
    %p97 = scmp.ne.s32.totalorder %s80, %s96
    %p98 = scmp.eq.s32.totalorder %s20, 0
    %p99 = por %p97, %p98
    %s100 = ssub.s32 %s14, %s21
    %p101 = scmp.eq.s32.totalorder %s100, 0
    %s103 = sadd.s32 %s102, 1
    %s104 = scalar_select %p101, %s102, %s103
    %p107 = pneg %p101
    %p108 = scmp.eq.s32.totalorder %s14, 1
    %p109 = por %p107, %p108
    %p110 = scmp.ne.s32.totalorder %s102, %s105
    %p111 = scmp.eq.s32.totalorder %s14, 0
    %p112 = por %p110, %p111
    %p113 = scmp.ne.s32.totalorder %s102, %s105
    %p114 = scmp.eq.s32.totalorder %s19, 1
    %p115 = por %p113, %p114
    %p116 = scmp.ne.s32.totalorder %s105, %s106
    %p117 = scmp.eq.s32.totalorder %s19, 0
    %p118 = por %p116, %p117
    %p119 = scmp.ne.s32.totalorder %s105, %s106
    %p120 = scmp.eq.s32.totalorder %s20, 1
    %p121 = por %p119, %p120
    %p123 = scmp.ne.s32.totalorder %s106, %s122
    %p124 = scmp.eq.s32.totalorder %s20, 0
    %p125 = por %p123, %p124
    %s127 = sadd.s32 %s126, 1
    %p130 = scmp.eq.s32.totalorder %s14, 1
    %p131 = scmp.ne.s32.totalorder %s126, %s128
    %p132 = scmp.eq.s32.totalorder %s14, 0
    %p133 = por %p131, %p132
    %p134 = scmp.ne.s32.totalorder %s126, %s128
    %p135 = scmp.eq.s32.totalorder %s19, 1
    %p136 = por %p134, %p135
    %p137 = scmp.ne.s32.totalorder %s128, %s129
    %p138 = scmp.eq.s32.totalorder %s19, 0
    %p139 = por %p137, %p138
    %p140 = scmp.ne.s32.totalorder %s128, %s129
    %p141 = scmp.eq.s32.totalorder %s20, 1
    %p142 = por %p140, %p141
    %p144 = scmp.ne.s32.totalorder %s129, %s143
    %p145 = scmp.eq.s32.totalorder %s20, 0
    %p146 = por %p144, %p145
    %s147 = ssub.s32 %s14, %s21
    %p148 = scmp.eq.s32.totalorder %s147, 0
    %s150 = sadd.s32 %s149, 1
    %s151 = scalar_select %p148, %s149, %s150
    %p154 = pneg %p148
    %p155 = scmp.eq.s32.totalorder %s14, 1
    %p156 = por %p154, %p155
    %p157 = scmp.ne.s32.totalorder %s149, %s152
    %p158 = scmp.eq.s32.totalorder %s14, 0
    %p159 = por %p157, %p158
    %p160 = scmp.ne.s32.totalorder %s149, %s152
    %p161 = scmp.eq.s32.totalorder %s19, 1
    %p162 = por %p160, %p161
    %p163 = scmp.ne.s32.totalorder %s152, %s153
    %p164 = scmp.eq.s32.totalorder %s19, 0
    %p165 = por %p163, %p164
    %p166 = scmp.ne.s32.totalorder %s152, %s153
    %p167 = scmp.eq.s32.totalorder %s20, 1
    %p168 = por %p166, %p167
    %p170 = scmp.ne.s32.totalorder %s153, %s169
    %p171 = scmp.eq.s32.totalorder %s20, 0
    %p172 = por %p170, %p171
    %s173 = ssub.s32 %s14, %s21
    %p174 = scmp.eq.s32.totalorder %s173, 0
    %s176 = sadd.s32 %s175, 1
    %s177 = scalar_select %p174, %s175, %s176
    %p180 = pneg %p174
    %p181 = scmp.eq.s32.totalorder %s14, 1
    %p182 = por %p180, %p181
    %p183 = scmp.ne.s32.totalorder %s175, %s178
    %p184 = scmp.eq.s32.totalorder %s14, 0
    %p185 = por %p183, %p184
    %p186 = scmp.ne.s32.totalorder %s175, %s178
    %p187 = scmp.eq.s32.totalorder %s19, 1
    %p188 = por %p186, %p187
    %p189 = scmp.ne.s32.totalorder %s178, %s179
    %p190 = scmp.eq.s32.totalorder %s19, 0
    %p191 = por %p189, %p190
    %p192 = scmp.ne.s32.totalorder %s178, %s179
    %p193 = scmp.eq.s32.totalorder %s20, 1
    %p194 = por %p192, %p193
    %p196 = scmp.ne.s32.totalorder %s179, %s195
    %p197 = scmp.eq.s32.totalorder %s20, 0
    %p198 = por %p196, %p197
    %s199 = ssub.s32 %s14, %s21
    %p200 = scmp.eq.s32.totalorder %s199, 0
    %s202 = sadd.s32 %s201, 1
    %s203 = scalar_select %p200, %s201, %s202
    %p206 = pneg %p200
    %p207 = scmp.eq.s32.totalorder %s14, 1
    %p208 = por %p206, %p207
    %p209 = scmp.ne.s32.totalorder %s201, %s204
    %p210 = scmp.eq.s32.totalorder %s14, 0
    %p211 = por %p209, %p210
    %p212 = scmp.ne.s32.totalorder %s201, %s204
    %p213 = scmp.eq.s32.totalorder %s19, 1
    %p214 = por %p212, %p213
    %p215 = scmp.ne.s32.totalorder %s204, %s205
    %p216 = scmp.eq.s32.totalorder %s19, 0
    %p217 = por %p215, %p216
    %p218 = scmp.ne.s32.totalorder %s204, %s205
    %p219 = scmp.eq.s32.totalorder %s20, 1
    %p220 = por %p218, %p219
    %p222 = scmp.ne.s32.totalorder %s205, %s221
    %p223 = scmp.eq.s32.totalorder %s20, 0
    %p224 = por %p222, %p223
    %p225 = scmp.le.s32.totalorder 1, %s14
    %p226 = scmp.lt.s32.totalorder %s14, 3
    %p227 = pnand %p225, %p226
    %p228 = pneg %p227
    // Predicated region
    $region9: #{_residual_block_impl.4} parent=5 // pred_check
      _
    $region10: #{_residual_block_impl.4} parent=5 // pred_check_branch
      %230 = sbr.rel (%p227) target = $region12
    $region11: #{_residual_block_impl.4} parent=5 // pred_region
      %s231 = ssub.s32 %s14, 1
      // Predicated region
      $region13: #{_residual_block_impl.4} parent=11 // pred_check
        %p232 = pneg %p139
      $region14: #{_residual_block_impl.4} parent=11 // pred_check_branch
        %234 = sbr.rel (%p232) target = $region16
      $region15: #{_residual_block_impl.4} parent=11 // pred_region
        _
      $region16: #{_residual_block_impl.4} parent=11 // pred_fallthru
        _
    $region12: #{_residual_block_impl.4} parent=5 // pred_fallthru
      _
    %p235 = scmp.lt.s32.totalorder %s14, 2
    // Predicated region
    $region17: #{_residual_block_impl.4} parent=5 // pred_check
      %p236 = pneg %p235
    $region18: #{_residual_block_impl.4} parent=5 // pred_check_branch
      %238 = sbr.rel (%p236) target = $region20
    $region19: #{_residual_block_impl.4} parent=5 // pred_region
      // Predicated region
      $region21: #{_residual_block_impl.4} parent=19 // pred_check
        %p239 = pneg %p34
      $region22: #{_residual_block_impl.4} parent=19 // pred_check_branch
        %241 = sbr.rel (%p239) target = $region24
      $region23: #{_residual_block_impl.4} parent=19 // pred_region
        %p242 = scmp.lt.s32.totalorder %s14, 1
        %s243 = scalar_select %p242, %s14, 1
        %s244 = smul.addr %s243, 18
        %s245 = smul.addr %s244, 4
        %s246 = scalar_lea.vmem %s0, %s245
      $region24: #{_residual_block_impl.4} parent=19 // pred_fallthru
        _
      // Predicated region
      $region25: #{_residual_block_impl.4} parent=19 // pred_check
        %p247 = pneg %p60
      $region26: #{_residual_block_impl.4} parent=19 // pred_check_branch
        %249 = sbr.rel (%p247) target = $region28
      $region27: #{_residual_block_impl.4} parent=19 // pred_region
        %p250 = scmp.lt.s32.totalorder %s14, 1
        %s251 = scalar_select %p250, %s14, 1
        %s252 = smul.addr %s251, 18
        %s253 = smul.addr %s252, 4
        %s254 = scalar_lea.vmem %s1, %s253
      $region28: #{_residual_block_impl.4} parent=19 // pred_fallthru
        _
      // Predicated region
      $region29: #{_residual_block_impl.4} parent=19 // pred_check
        %p255 = pneg %p86
      $region30: #{_residual_block_impl.4} parent=19 // pred_check_branch
        %257 = sbr.rel (%p255) target = $region32
      $region31: #{_residual_block_impl.4} parent=19 // pred_region
        %p258 = scmp.lt.s32.totalorder %s14, 1
        %s259 = scalar_select %p258, %s14, 1
        %s260 = smul.addr %s259, 18
        %s261 = smul.addr %s260, 4
        %s262 = scalar_lea.vmem %s2, %s261
      $region32: #{_residual_block_impl.4} parent=19 // pred_fallthru
        _
      // Predicated region
      $region33: #{_residual_block_impl.4} parent=19 // pred_check
        %p263 = pneg %p112
      $region34: #{_residual_block_impl.4} parent=19 // pred_check_branch
        %265 = sbr.rel (%p263) target = $region36
      $region35: #{_residual_block_impl.4} parent=19 // pred_region
        %p266 = scmp.lt.s32.totalorder %s14, 1
        %s267 = scalar_select %p266, %s14, 1
        %s268 = smul.addr %s267, 18
        %s269 = smul.addr %s268, 4
        %s270 = scalar_lea.vmem %s3, %s269
      $region36: #{_residual_block_impl.4} parent=19 // pred_fallthru
        _
    $region20: #{_residual_block_impl.4} parent=5 // pred_fallthru
      _
    %p271 = scmp.le.s32.totalorder 1, %s14
    %p272 = scmp.lt.s32.totalorder %s14, 3
    %p273 = pnand %p271, %p272
    %p274 = pneg %p273
    // Predicated region
    $region37: #{_residual_block_impl.4} parent=5 // pred_check
      _
    $region38: #{_residual_block_impl.4} parent=5 // pred_check_branch
      %276 = sbr.rel (%p273) target = $region40
    $region39: #{_residual_block_impl.4} parent=5 // pred_region
      %s277 = ssub.s32 %s14, 1
      %p278 = scmp.lt.s32.totalorder %s19, 1
      %s279 = scalar_select %p278, %s19, 1
      %s280 = smul.addr %s279, 18
      %s281 = smul.addr %s280, 4
      %s282 = scalar_lea.vmem %s0, %s281
      %p283 = pneg %p40
      %p284 = pneg %p37
      %p285 = scmp.lt.s32.totalorder %s19, 1
      %s286 = scalar_select %p285, %s19, 1
      %s287 = smul.addr %s286, 18
      %s288 = smul.addr %s287, 4
      %s289 = scalar_lea.vmem %s1, %s288
      %p290 = pneg %p66
      %p291 = pneg %p63
      %p292 = scmp.lt.s32.totalorder %s19, 1
      %s293 = scalar_select %p292, %s19, 1
      %s294 = smul.addr %s293, 18
      %s295 = smul.addr %s294, 4
      %s296 = scalar_lea.vmem %s2, %s295
      %p297 = pneg %p92
      %p298 = pneg %p89
      %p299 = scmp.lt.s32.totalorder %s19, 1
      %s300 = scalar_select %p299, %s19, 1
      %s301 = smul.addr %s300, 18
      %s302 = smul.addr %s301, 4
      %s303 = scalar_lea.vmem %s3, %s302
      %p304 = pneg %p118
      %p305 = pneg %p115
      %p306 = pneg %p139
      %p307 = pneg %p136
      %p308 = pneg %p165
      %p309 = pneg %p162
      %s310 = smul.u32 8, %s19
      %p311 = scmp.lt.s32.totalorder %s310, 15
      %s312 = scalar_select %p311, %s310, 15
      %s313 = smul.addr %s312, 8
      %s314 = scalar_lea.vmem %s5, %s313
      %p315 = pneg %p191
      %p316 = pneg %p188
      %p317 = scmp.lt.s32.totalorder %s19, 1
      %s318 = scalar_select %p317, %s19, 1
      %s319 = smul.addr %s318, 8
      %s320 = scalar_lea.vmem %s6, %s319
      %p321 = pneg %p217
      %p322 = pneg %p214
      %p323 = scmp.lt.s32.totalorder %s19, 1
      %s324 = scalar_select %p323, %s19, 1
      %s325 = smul.addr %s324, 8
      %s326 = scalar_lea.vmem %s7, %s325
      %p327 = scmp.lt.s32.totalorder %s19, 1
      %s328 = scalar_select %p327, %s19, 1
      %s329 = smul.addr %s328, 18
      %s330 = smul.addr %s329, 4
      %s331 = scalar_lea.vmem %s0, %s330
      %p332 = scmp.lt.s32.totalorder %s19, 1
      %s333 = scalar_select %p332, %s19, 1
      %s334 = smul.addr %s333, 18
      %s335 = smul.addr %s334, 4
      %s336 = scalar_lea.vmem %s1, %s335
      %p337 = scmp.lt.s32.totalorder %s19, 1
      %s338 = scalar_select %p337, %s19, 1
      %s339 = smul.addr %s338, 18
      %s340 = smul.addr %s339, 4
      %s341 = scalar_lea.vmem %s2, %s340
      %p342 = scmp.lt.s32.totalorder %s19, 1
      %s343 = scalar_select %p342, %s19, 1
      %s344 = smul.addr %s343, 18
      %s345 = smul.addr %s344, 4
      %s346 = scalar_lea.vmem %s3, %s345
      %s347 = smul.u32 8, %s19
      %p348 = scmp.lt.s32.totalorder %s347, 15
      %s349 = scalar_select %p348, %s347, 15
      %s350 = smul.addr %s349, 8
      %s351 = scalar_lea.vmem %s5, %s350
      %s352 = smul.u32 8, %s19
      %p353 = scmp.lt.s32.totalorder %s19, 1
      %s354 = scalar_select %p353, %s19, 1
      %s355 = smul.addr %s354, 8
      %s356 = scalar_lea.vmem %s6, %s355
      %p357 = scmp.lt.s32.totalorder %s19, 1
      %s358 = scalar_select %p357, %s19, 1
      %s359 = smul.addr %s358, 8
      %s360 = scalar_lea.vmem %s7, %s359
      %v362 = vld [vmem:[%s331] sm:$0xf]
      %v363 = vld [vmem:[%s331 + $0x8] sm:$0xf]
      %v364 = vld [vmem:[%s331 + $0x10] sm:$0xf]
      %v365 = vld [vmem:[%s331 + $0x18] sm:$0xf]
      %v366 = vld [vmem:[%s331 + $0x20] sm:$0xf]
      %v367 = vld [vmem:[%s331 + $0x28] sm:$0xf]
      %v368 = vld [vmem:[%s331 + $0x30] sm:$0xf]
      %v369 = vld [vmem:[%s331 + $0x38] sm:$0xf]
      %v370 = vld [vmem:[%s4] sm:$0x3]
      %v371 = vld [vmem:[%s336] sm:$0xf]
      %v372 = vld [vmem:[%s336 + $0x8] sm:$0xf]
      %v373 = vld [vmem:[%s336 + $0x10] sm:$0xf]
      %v374 = vld [vmem:[%s336 + $0x18] sm:$0xf]
      %v375 = vld [vmem:[%s336 + $0x20] sm:$0xf]
      %v376 = vld [vmem:[%s336 + $0x28] sm:$0xf]
      %v377 = vld [vmem:[%s336 + $0x30] sm:$0xf]
      %v378 = vld [vmem:[%s336 + $0x38] sm:$0xf]
      %s379 = scalar_lea.vmem %s4, 2
      %v380 = vld [vmem:[%s379] sm:$0x3]
      %v389 = vunpack.c.l.b16 %v371
      %v390 = vunpack.c.l.b16 %v372
      %v391 = vunpack.c.l.b16 %v373
      %v392 = vunpack.c.l.b16 %v374
      %v393 = vunpack.c.l.b16 %v375
      %v394 = vunpack.c.l.b16 %v376
      %v395 = vunpack.c.l.b16 %v377
      %v396 = vunpack.c.l.b16 %v378
      %v397 = vpack.c.b16 %v390, %v389
      %v398 = vpack.c.b16 %v392, %v391
      %v399 = vpack.c.b16 %v394, %v393
      %v400 = vpack.c.b16 %v396, %v395
      %vm401 = vcmask 31744
      %v403 = vsel %vm401, %v397, 0
      %v406 = vsel %vm401, %v398, 0
      %v409 = vsel %vm401, %v399, 0
      %v412 = vsel %vm401, %v400, 0
      %vm414 = vcmask 1041408
      %v416 = vsel %vm414, %v380, 0
      %418 = vmatprep.subr.bf16.mxu0 0
      %419 = vmatpush1.bf16.msra.mxu0 0
      %420 = vmatprep.subr.bf16.mxu0 0
      %421 = vmatpush1.bf16.msra.mxu0 0
      %422 = vmatprep.subr.bf16.mxu0 0
      %423 = vmatpush1.bf16.msra.mxu0 0
      %424 = vmatprep.subr.bf16.mxu0 0
      %425 = vmatpush1.bf16.msra.mxu0 0
      %426 = vmatprep.subr.bf16.mxu0 0
      %427 = vmatpush1.bf16.msra.mxu0 0
      %428 = vmatprep.subr.bf16.mxu0 0
      %429 = vmatpush1.bf16.msra.mxu0 0
      %430 = vmatprep.subr.bf16.mxu0 0
      %431 = vmatpush1.bf16.msra.mxu0 0
      %432 = vmatprep.subr.bf16.mxu0 0
      %433 = vmatpush1.bf16.msra.mxu0 %v416
      %434 = vmatprep.subr.bf16.mxu0 0
      %435 = vmatpush2.bf16.msra.mxu0 0
      %436 = vmatprep.subr.bf16.mxu0 0
      %437 = vmatpush2.bf16.msra.mxu0 0
      %438 = vmatprep.subr.bf16.mxu0 0
      %439 = vmatpush2.bf16.msra.mxu0 0
      %440 = vmatprep.subr.bf16.mxu0 0
      %441 = vmatpush2.bf16.msra.mxu0 0
      %442 = vmatprep.subr.bf16.mxu0 0
      %443 = vmatpush2.bf16.msra.mxu0 0
      %444 = vmatprep.subr.bf16.mxu0 0
      %445 = vmatpush2.bf16.msra.mxu0 0
      %446 = vmatprep.subr.bf16.mxu0 0
      %447 = vmatpush2.bf16.msra.mxu0 0
      %448 = vmatprep.subr.bf16.mxu0 0
      %449 = vmatpush2.bf16.msra.mxu0 0
      %450 = vmatprep.mubr.bf16.mxu0 0
      %451 = vmatmul.mubr.bf16.gmra.mxu0 %v403
      %v452 = vpop.f32.mrf.mxu0
      %v453 = vadd.f32 0.0, %v452
      %v454 = vpop.f32.mrf.mxu0
      %v455 = vpop.f32.mrf.mxu0
      %v456 = vadd.f32 0.0, %v455
      %v457 = vpop.f32.mrf.mxu0
      %458 = vmatprep.mubr.bf16.mxu0 0
      %459 = vmatmul.mubr.bf16.gmra.mxu0 %v406
      %v460 = vpop.f32.mrf.mxu0
      %v461 = vadd.f32 0.0, %v460
      %v462 = vpop.f32.mrf.mxu0
      %v463 = vpop.f32.mrf.mxu0
      %v464 = vadd.f32 0.0, %v463
      %v465 = vpop.f32.mrf.mxu0
      %466 = vmatprep.mubr.bf16.mxu0 0
      %467 = vmatmul.mubr.bf16.gmra.mxu0 %v409
      %v468 = vpop.f32.mrf.mxu0
      %v469 = vadd.f32 0.0, %v468
      %v470 = vpop.f32.mrf.mxu0
      %v471 = vpop.f32.mrf.mxu0
      %v472 = vadd.f32 0.0, %v471
      %v473 = vpop.f32.mrf.mxu0
      %474 = vmatprep.mubr.bf16.mxu0 0
      %475 = vmatmul.mubr.bf16.gmra.mxu0 %v412
      %v476 = vpop.f32.mrf.mxu0
      %v477 = vadd.f32 0.0, %v476
      %v478 = vpop.f32.mrf.mxu0
      %v479 = vpop.f32.mrf.mxu0
      %v480 = vadd.f32 0.0, %v479
      %v481 = vpop.f32.mrf.mxu0
      %482 = vdwg.mxu0
      %v491 = vunpack.c.l.b16 %v362
      %v492 = vunpack.c.l.b16 %v363
      %v493 = vunpack.c.l.b16 %v364
      %v494 = vunpack.c.l.b16 %v365
      %v495 = vunpack.c.l.b16 %v366
      %v496 = vunpack.c.l.b16 %v367
      %v497 = vunpack.c.l.b16 %v368
      %v498 = vunpack.c.l.b16 %v369
      %v499 = vpack.c.b16 %v492, %v491
      %v500 = vpack.c.b16 %v494, %v493
      %v501 = vpack.c.b16 %v496, %v495
      %v502 = vpack.c.b16 %v498, %v497
      %v504 = vsel %vm401, %v499, 0
      %v507 = vsel %vm401, %v500, 0
      %v510 = vsel %vm401, %v501, 0
      %v513 = vsel %vm401, %v502, 0
      %v516 = vsel %vm414, %v370, 0
      %518 = vmatprep.subr.bf16.mxu0 0
      %519 = vmatpush1.bf16.msra.mxu0 0
      %520 = vmatprep.subr.bf16.mxu0 0
      %521 = vmatpush1.bf16.msra.mxu0 0
      %522 = vmatprep.subr.bf16.mxu0 0
      %523 = vmatpush1.bf16.msra.mxu0 0
      %524 = vmatprep.subr.bf16.mxu0 0
      %525 = vmatpush1.bf16.msra.mxu0 0
      %526 = vmatprep.subr.bf16.mxu0 0
      %527 = vmatpush1.bf16.msra.mxu0 0
      %528 = vmatprep.subr.bf16.mxu0 0
      %529 = vmatpush1.bf16.msra.mxu0 0
      %530 = vmatprep.subr.bf16.mxu0 0
      %531 = vmatpush1.bf16.msra.mxu0 0
      %532 = vmatprep.subr.bf16.mxu0 0
      %533 = vmatpush1.bf16.msra.mxu0 %v516
      %534 = vmatprep.subr.bf16.mxu0 0
      %535 = vmatpush2.bf16.msra.mxu0 0
      %536 = vmatprep.subr.bf16.mxu0 0
      %537 = vmatpush2.bf16.msra.mxu0 0
      %538 = vmatprep.subr.bf16.mxu0 0
      %539 = vmatpush2.bf16.msra.mxu0 0
      %540 = vmatprep.subr.bf16.mxu0 0
      %541 = vmatpush2.bf16.msra.mxu0 0
      %542 = vmatprep.subr.bf16.mxu0 0
      %543 = vmatpush2.bf16.msra.mxu0 0
      %544 = vmatprep.subr.bf16.mxu0 0
      %545 = vmatpush2.bf16.msra.mxu0 0
      %546 = vmatprep.subr.bf16.mxu0 0
      %547 = vmatpush2.bf16.msra.mxu0 0
      %548 = vmatprep.subr.bf16.mxu0 0
      %549 = vmatpush2.bf16.msra.mxu0 0
      %550 = vmatprep.mubr.bf16.mxu0 0
      %551 = vmatmul.mubr.bf16.gmra.mxu0 %v504
      %v552 = vpop.f32.mrf.mxu0
      %v553 = vadd.f32 %v453, %v552
      %v554 = vpop.f32.mrf.mxu0
      %v555 = vpop.f32.mrf.mxu0
      %v556 = vadd.f32 %v456, %v555
      %v557 = vpop.f32.mrf.mxu0
      %558 = vmatprep.mubr.bf16.mxu0 0
      %559 = vmatmul.mubr.bf16.gmra.mxu0 %v507
      %v560 = vpop.f32.mrf.mxu0
      %v561 = vadd.f32 %v461, %v560
      %v562 = vpop.f32.mrf.mxu0
      %v563 = vpop.f32.mrf.mxu0
      %v564 = vadd.f32 %v464, %v563
      %v565 = vpop.f32.mrf.mxu0
      %566 = vmatprep.mubr.bf16.mxu0 0
      %567 = vmatmul.mubr.bf16.gmra.mxu0 %v510
      %v568 = vpop.f32.mrf.mxu0
      %v569 = vadd.f32 %v469, %v568
      %v570 = vpop.f32.mrf.mxu0
      %v571 = vpop.f32.mrf.mxu0
      %v572 = vadd.f32 %v472, %v571
      %v573 = vpop.f32.mrf.mxu0
      %574 = vmatprep.mubr.bf16.mxu0 0
      %575 = vmatmul.mubr.bf16.gmra.mxu0 %v513
      %v576 = vpop.f32.mrf.mxu0
      %v577 = vadd.f32 %v477, %v576
      %v578 = vpop.f32.mrf.mxu0
      %v579 = vpop.f32.mrf.mxu0
      %v580 = vadd.f32 %v480, %v579
      %v581 = vpop.f32.mrf.mxu0
      %582 = vdwg.mxu0
      %v583 = vld [vmem:[%s331] sm:$0xf]
      %v584 = vld [vmem:[%s331 + $0x4] sm:$0x1]
      %v585 = vld [vmem:[%s331 + $0x8] sm:$0xf]
      %v586 = vld [vmem:[%s331 + $0xc] sm:$0x1]
      %v587 = vld [vmem:[%s331 + $0x10] sm:$0xf]
      %v588 = vld [vmem:[%s331 + $0x14] sm:$0x1]
      %v589 = vld [vmem:[%s331 + $0x18] sm:$0xf]
      %v590 = vld [vmem:[%s331 + $0x1c] sm:$0x1]
      %v591 = vld [vmem:[%s331 + $0x20] sm:$0xf]
      %v592 = vld [vmem:[%s331 + $0x24] sm:$0x1]
      %v593 = vld [vmem:[%s331 + $0x28] sm:$0xf]
      %v594 = vld [vmem:[%s331 + $0x2c] sm:$0x1]
      %v595 = vld [vmem:[%s331 + $0x30] sm:$0xf]
      %v596 = vld [vmem:[%s331 + $0x34] sm:$0x1]
      %v597 = vld [vmem:[%s331 + $0x38] sm:$0xf]
      %v598 = vld [vmem:[%s331 + $0x3c] sm:$0x1]
      %vm599 = vsmask.f32 3328
      %vm600 = vsmask.f32 7440
      %vm601 = vmor %vm599, %vm600
      %v603 = vshrl.u32 %v583, 16
      %v605 = vrot.slane %v603, 4
      %v606 = vshll.u32 %v583, 16
      %v608 = vrot.slane %v606, 5
      %v609 = vor.u32 %v605, %v608
      %v610 = vrot.slane %v609, 4
      %v612 = vshll.u32 %v584, 16
      %v614 = vrot.slane %v612, 5
      %v615 = vsel %vm601, %v610, %v614
      %v617 = vshrl.u32 %v585, 16
      %v619 = vrot.slane %v617, 4
      %v620 = vshll.u32 %v585, 16
      %v622 = vrot.slane %v620, 5
      %v623 = vor.u32 %v619, %v622
      %v624 = vrot.slane %v623, 4
      %v626 = vshll.u32 %v586, 16
      %v628 = vrot.slane %v626, 5
      %v629 = vsel %vm601, %v624, %v628
      %v631 = vshrl.u32 %v587, 16
      %v633 = vrot.slane %v631, 4
      %v634 = vshll.u32 %v587, 16
      %v636 = vrot.slane %v634, 5
      %v637 = vor.u32 %v633, %v636
      %v638 = vrot.slane %v637, 4
      %v640 = vshll.u32 %v588, 16
      %v642 = vrot.slane %v640, 5
      %v643 = vsel %vm601, %v638, %v642
      %v645 = vshrl.u32 %v589, 16
      %v647 = vrot.slane %v645, 4
      %v648 = vshll.u32 %v589, 16
      %v650 = vrot.slane %v648, 5
      %v651 = vor.u32 %v647, %v650
      %v652 = vrot.slane %v651, 4
      %v654 = vshll.u32 %v590, 16
      %v656 = vrot.slane %v654, 5
      %v657 = vsel %vm601, %v652, %v656
      %v659 = vshrl.u32 %v591, 16
      %v661 = vrot.slane %v659, 4
      %v662 = vshll.u32 %v591, 16
      %v664 = vrot.slane %v662, 5
      %v665 = vor.u32 %v661, %v664
      %v666 = vrot.slane %v665, 4
      %v668 = vshll.u32 %v592, 16
      %v670 = vrot.slane %v668, 5
      %v671 = vsel %vm601, %v666, %v670
      %v673 = vshrl.u32 %v593, 16
      %v675 = vrot.slane %v673, 4
      %v676 = vshll.u32 %v593, 16
      %v678 = vrot.slane %v676, 5
      %v679 = vor.u32 %v675, %v678
      %v680 = vrot.slane %v679, 4
      %v682 = vshll.u32 %v594, 16
      %v684 = vrot.slane %v682, 5
      %v685 = vsel %vm601, %v680, %v684
      %v687 = vshrl.u32 %v595, 16
      %v689 = vrot.slane %v687, 4
      %v690 = vshll.u32 %v595, 16
      %v692 = vrot.slane %v690, 5
      %v693 = vor.u32 %v689, %v692
      %v694 = vrot.slane %v693, 4
      %v696 = vshll.u32 %v596, 16
      %v698 = vrot.slane %v696, 5
      %v699 = vsel %vm601, %v694, %v698
      %v701 = vshrl.u32 %v597, 16
      %v703 = vrot.slane %v701, 4
      %v704 = vshll.u32 %v597, 16
      %v706 = vrot.slane %v704, 5
      %v707 = vor.u32 %v703, %v706
      %v708 = vrot.slane %v707, 4
      %v710 = vshll.u32 %v598, 16
      %v712 = vrot.slane %v710, 5
      %v713 = vsel %vm601, %v708, %v712
      %s714 = scalar_lea.vmem %s4, 4
      %v715 = vld [vmem:[%s714] sm:$0x3]
      %v716 = vunpack.c.l.b16 %v615
      %v717 = vunpack.c.l.b16 %v629
      %v718 = vunpack.c.l.b16 %v643
      %v719 = vunpack.c.l.b16 %v657
      %v720 = vunpack.c.l.b16 %v671
      %v721 = vunpack.c.l.b16 %v685
      %v722 = vunpack.c.l.b16 %v699
      %v723 = vunpack.c.l.b16 %v713
      %v724 = vpack.c.b16 %v717, %v716
      %v725 = vpack.c.b16 %v719, %v718
      %v726 = vpack.c.b16 %v721, %v720
      %v727 = vpack.c.b16 %v723, %v722
      %v729 = vsel %vm401, %v724, 0
      %v732 = vsel %vm401, %v725, 0
      %v735 = vsel %vm401, %v726, 0
      %v738 = vsel %vm401, %v727, 0
      %v741 = vsel %vm414, %v715, 0
      %743 = vmatprep.subr.bf16.mxu0 0
      %744 = vmatpush1.bf16.msra.mxu0 0
      %745 = vmatprep.subr.bf16.mxu0 0
      %746 = vmatpush1.bf16.msra.mxu0 0
      %747 = vmatprep.subr.bf16.mxu0 0
      %748 = vmatpush1.bf16.msra.mxu0 0
      %749 = vmatprep.subr.bf16.mxu0 0
      %750 = vmatpush1.bf16.msra.mxu0 0
      %751 = vmatprep.subr.bf16.mxu0 0
      %752 = vmatpush1.bf16.msra.mxu0 0
      %753 = vmatprep.subr.bf16.mxu0 0
      %754 = vmatpush1.bf16.msra.mxu0 0
      %755 = vmatprep.subr.bf16.mxu0 0
      %756 = vmatpush1.bf16.msra.mxu0 0
      %757 = vmatprep.subr.bf16.mxu0 0
      %758 = vmatpush1.bf16.msra.mxu0 %v741
      %759 = vmatprep.subr.bf16.mxu0 0
      %760 = vmatpush2.bf16.msra.mxu0 0
      %761 = vmatprep.subr.bf16.mxu0 0
      %762 = vmatpush2.bf16.msra.mxu0 0
      %763 = vmatprep.subr.bf16.mxu0 0
      %764 = vmatpush2.bf16.msra.mxu0 0
      %765 = vmatprep.subr.bf16.mxu0 0
      %766 = vmatpush2.bf16.msra.mxu0 0
      %767 = vmatprep.subr.bf16.mxu0 0
      %768 = vmatpush2.bf16.msra.mxu0 0
      %769 = vmatprep.subr.bf16.mxu0 0
      %770 = vmatpush2.bf16.msra.mxu0 0
      %771 = vmatprep.subr.bf16.mxu0 0
      %772 = vmatpush2.bf16.msra.mxu0 0
      %773 = vmatprep.subr.bf16.mxu0 0
      %774 = vmatpush2.bf16.msra.mxu0 0
      %775 = vmatprep.mubr.bf16.mxu0 0
      %776 = vmatmul.mubr.bf16.gmra.mxu0 %v729
      %v777 = vpop.f32.mrf.mxu0
      %v778 = vadd.f32 0.0, %v777
      %v779 = vpop.f32.mrf.mxu0
      %v780 = vpop.f32.mrf.mxu0
      %v781 = vadd.f32 0.0, %v780
      %v782 = vpop.f32.mrf.mxu0
      %783 = vmatprep.mubr.bf16.mxu0 0
      %784 = vmatmul.mubr.bf16.gmra.mxu0 %v732
      %v785 = vpop.f32.mrf.mxu0
      %v786 = vadd.f32 0.0, %v785
      %v787 = vpop.f32.mrf.mxu0
      %v788 = vpop.f32.mrf.mxu0
      %v789 = vadd.f32 0.0, %v788
      %v790 = vpop.f32.mrf.mxu0
      %791 = vmatprep.mubr.bf16.mxu0 0
      %792 = vmatmul.mubr.bf16.gmra.mxu0 %v735
      %v793 = vpop.f32.mrf.mxu0
      %v794 = vadd.f32 0.0, %v793
      %v795 = vpop.f32.mrf.mxu0
      %v796 = vpop.f32.mrf.mxu0
      %v797 = vadd.f32 0.0, %v796
      %v798 = vpop.f32.mrf.mxu0
      %799 = vmatprep.mubr.bf16.mxu0 0
      %800 = vmatmul.mubr.bf16.gmra.mxu0 %v738
      %v801 = vpop.f32.mrf.mxu0
      %v802 = vadd.f32 0.0, %v801
      %v803 = vpop.f32.mrf.mxu0
      %v804 = vpop.f32.mrf.mxu0
      %v805 = vadd.f32 0.0, %v804
      %v806 = vpop.f32.mrf.mxu0
      %807 = vdwg.mxu0
      %v808 = vadd.f32 %v553, %v778
      %v809 = vadd.f32 %v556, %v781
      %v810 = vadd.f32 %v561, %v786
      %v811 = vadd.f32 %v564, %v789
      %v812 = vadd.f32 %v569, %v794
      %v813 = vadd.f32 %v572, %v797
      %v814 = vadd.f32 %v577, %v802
      %v815 = vadd.f32 %v580, %v805
      %v816 = vld [vmem:[%s341] sm:$0xf]
      %v817 = vld [vmem:[%s341 + $0x8] sm:$0xf]
      %v818 = vld [vmem:[%s341 + $0x10] sm:$0xf]
      %v819 = vld [vmem:[%s341 + $0x18] sm:$0xf]
      %v820 = vld [vmem:[%s341 + $0x20] sm:$0xf]
      %v821 = vld [vmem:[%s341 + $0x28] sm:$0xf]
      %v822 = vld [vmem:[%s341 + $0x30] sm:$0xf]
      %v823 = vld [vmem:[%s341 + $0x38] sm:$0xf]
      %s824 = scalar_lea.vmem %s4, 6
      %v825 = vld [vmem:[%s824] sm:$0x3]
      %v834 = vunpack.c.l.b16 %v816
      %v835 = vunpack.c.l.b16 %v817
      %v836 = vunpack.c.l.b16 %v818
      %v837 = vunpack.c.l.b16 %v819
      %v838 = vunpack.c.l.b16 %v820
      %v839 = vunpack.c.l.b16 %v821
      %v840 = vunpack.c.l.b16 %v822
      %v841 = vunpack.c.l.b16 %v823
      %v842 = vpack.c.b16 %v835, %v834
      %v843 = vpack.c.b16 %v837, %v836
      %v844 = vpack.c.b16 %v839, %v838
      %v845 = vpack.c.b16 %v841, %v840
      %v847 = vsel %vm401, %v842, 0
      %v850 = vsel %vm401, %v843, 0
      %v853 = vsel %vm401, %v844, 0
      %v856 = vsel %vm401, %v845, 0
      %v859 = vsel %vm414, %v825, 0
      %861 = vmatprep.subr.bf16.mxu0 0
      %862 = vmatpush1.bf16.msra.mxu0 0
      %863 = vmatprep.subr.bf16.mxu0 0
      %864 = vmatpush1.bf16.msra.mxu0 0
      %865 = vmatprep.subr.bf16.mxu0 0
      %866 = vmatpush1.bf16.msra.mxu0 0
      %867 = vmatprep.subr.bf16.mxu0 0
      %868 = vmatpush1.bf16.msra.mxu0 0
      %869 = vmatprep.subr.bf16.mxu0 0
      %870 = vmatpush1.bf16.msra.mxu0 0
      %871 = vmatprep.subr.bf16.mxu0 0
      %872 = vmatpush1.bf16.msra.mxu0 0
      %873 = vmatprep.subr.bf16.mxu0 0
      %874 = vmatpush1.bf16.msra.mxu0 0
      %875 = vmatprep.subr.bf16.mxu0 0
      %876 = vmatpush1.bf16.msra.mxu0 %v859
      %877 = vmatprep.subr.bf16.mxu0 0
      %878 = vmatpush2.bf16.msra.mxu0 0
      %879 = vmatprep.subr.bf16.mxu0 0
      %880 = vmatpush2.bf16.msra.mxu0 0
      %881 = vmatprep.subr.bf16.mxu0 0
      %882 = vmatpush2.bf16.msra.mxu0 0
      %883 = vmatprep.subr.bf16.mxu0 0
      %884 = vmatpush2.bf16.msra.mxu0 0
      %885 = vmatprep.subr.bf16.mxu0 0
      %886 = vmatpush2.bf16.msra.mxu0 0
      %887 = vmatprep.subr.bf16.mxu0 0
      %888 = vmatpush2.bf16.msra.mxu0 0
      %889 = vmatprep.subr.bf16.mxu0 0
      %890 = vmatpush2.bf16.msra.mxu0 0
      %891 = vmatprep.subr.bf16.mxu0 0
      %892 = vmatpush2.bf16.msra.mxu0 0
      %893 = vmatprep.mubr.bf16.mxu0 0
      %894 = vmatmul.mubr.bf16.gmra.mxu0 %v847
      %v895 = vpop.f32.mrf.mxu0
      %v896 = vadd.f32 0.0, %v895
      %v897 = vpop.f32.mrf.mxu0
      %v898 = vpop.f32.mrf.mxu0
      %v899 = vadd.f32 0.0, %v898
      %v900 = vpop.f32.mrf.mxu0
      %901 = vmatprep.mubr.bf16.mxu0 0
      %902 = vmatmul.mubr.bf16.gmra.mxu0 %v850
      %v903 = vpop.f32.mrf.mxu0
      %v904 = vadd.f32 0.0, %v903
      %v905 = vpop.f32.mrf.mxu0
      %v906 = vpop.f32.mrf.mxu0
      %v907 = vadd.f32 0.0, %v906
      %v908 = vpop.f32.mrf.mxu0
      %909 = vmatprep.mubr.bf16.mxu0 0
      %910 = vmatmul.mubr.bf16.gmra.mxu0 %v853
      %v911 = vpop.f32.mrf.mxu0
      %v912 = vadd.f32 0.0, %v911
      %v913 = vpop.f32.mrf.mxu0
      %v914 = vpop.f32.mrf.mxu0
      %v915 = vadd.f32 0.0, %v914
      %v916 = vpop.f32.mrf.mxu0
      %917 = vmatprep.mubr.bf16.mxu0 0
      %918 = vmatmul.mubr.bf16.gmra.mxu0 %v856
      %v919 = vpop.f32.mrf.mxu0
      %v920 = vadd.f32 0.0, %v919
      %v921 = vpop.f32.mrf.mxu0
      %v922 = vpop.f32.mrf.mxu0
      %v923 = vadd.f32 0.0, %v922
      %v924 = vpop.f32.mrf.mxu0
      %925 = vdwg.mxu0
      %v926 = vadd.f32 %v808, %v896
      %v927 = vadd.f32 %v809, %v899
      %v928 = vadd.f32 %v810, %v904
      %v929 = vadd.f32 %v811, %v907
      %v930 = vadd.f32 %v812, %v912
      %v931 = vadd.f32 %v813, %v915
      %v932 = vadd.f32 %v814, %v920
      %v933 = vadd.f32 %v815, %v923
      %v934 = vld [vmem:[%s346] sm:$0xf]
      %v935 = vld [vmem:[%s346 + $0x8] sm:$0xf]
      %v936 = vld [vmem:[%s346 + $0x10] sm:$0xf]
      %v937 = vld [vmem:[%s346 + $0x18] sm:$0xf]
      %v938 = vld [vmem:[%s346 + $0x20] sm:$0xf]
      %v939 = vld [vmem:[%s346 + $0x28] sm:$0xf]
      %v940 = vld [vmem:[%s346 + $0x30] sm:$0xf]
      %v941 = vld [vmem:[%s346 + $0x38] sm:$0xf]
      %s942 = scalar_lea.vmem %s4, 8
      %v943 = vld [vmem:[%s942] sm:$0x3]
      %v952 = vunpack.c.l.b16 %v934
      %v953 = vunpack.c.l.b16 %v935
      %v954 = vunpack.c.l.b16 %v936
      %v955 = vunpack.c.l.b16 %v937
      %v956 = vunpack.c.l.b16 %v938
      %v957 = vunpack.c.l.b16 %v939
      %v958 = vunpack.c.l.b16 %v940
      %v959 = vunpack.c.l.b16 %v941
      %v960 = vpack.c.b16 %v953, %v952
      %v961 = vpack.c.b16 %v955, %v954
      %v962 = vpack.c.b16 %v957, %v956
      %v963 = vpack.c.b16 %v959, %v958
      %v965 = vsel %vm401, %v960, 0
      %v968 = vsel %vm401, %v961, 0
      %v971 = vsel %vm401, %v962, 0
      %v974 = vsel %vm401, %v963, 0
      %v977 = vsel %vm414, %v943, 0
      %979 = vmatprep.subr.bf16.mxu0 0
      %980 = vmatpush1.bf16.msra.mxu0 0
      %981 = vmatprep.subr.bf16.mxu0 0
      %982 = vmatpush1.bf16.msra.mxu0 0
      %983 = vmatprep.subr.bf16.mxu0 0
      %984 = vmatpush1.bf16.msra.mxu0 0
      %985 = vmatprep.subr.bf16.mxu0 0
      %986 = vmatpush1.bf16.msra.mxu0 0
      %987 = vmatprep.subr.bf16.mxu0 0
      %988 = vmatpush1.bf16.msra.mxu0 0
      %989 = vmatprep.subr.bf16.mxu0 0
      %990 = vmatpush1.bf16.msra.mxu0 0
      %991 = vmatprep.subr.bf16.mxu0 0
      %992 = vmatpush1.bf16.msra.mxu0 0
      %993 = vmatprep.subr.bf16.mxu0 0
      %994 = vmatpush1.bf16.msra.mxu0 %v977
      %995 = vmatprep.subr.bf16.mxu0 0
      %996 = vmatpush2.bf16.msra.mxu0 0
      %997 = vmatprep.subr.bf16.mxu0 0
      %998 = vmatpush2.bf16.msra.mxu0 0
      %999 = vmatprep.subr.bf16.mxu0 0
      %1000 = vmatpush2.bf16.msra.mxu0 0
      %1001 = vmatprep.subr.bf16.mxu0 0
      %1002 = vmatpush2.bf16.msra.mxu0 0
      %1003 = vmatprep.subr.bf16.mxu0 0
      %1004 = vmatpush2.bf16.msra.mxu0 0
      %1005 = vmatprep.subr.bf16.mxu0 0
      %1006 = vmatpush2.bf16.msra.mxu0 0
      %1007 = vmatprep.subr.bf16.mxu0 0
      %1008 = vmatpush2.bf16.msra.mxu0 0
      %1009 = vmatprep.subr.bf16.mxu0 0
      %1010 = vmatpush2.bf16.msra.mxu0 0
      %1011 = vmatprep.mubr.bf16.mxu0 0
      %1012 = vmatmul.mubr.bf16.gmra.mxu0 %v965
      %v1013 = vpop.f32.mrf.mxu0
      %v1014 = vadd.f32 0.0, %v1013
      %v1015 = vpop.f32.mrf.mxu0
      %v1016 = vpop.f32.mrf.mxu0
      %v1017 = vadd.f32 0.0, %v1016
      %v1018 = vpop.f32.mrf.mxu0
      %1019 = vmatprep.mubr.bf16.mxu0 0
      %1020 = vmatmul.mubr.bf16.gmra.mxu0 %v968
      %v1021 = vpop.f32.mrf.mxu0
      %v1022 = vadd.f32 0.0, %v1021
      %v1023 = vpop.f32.mrf.mxu0
      %v1024 = vpop.f32.mrf.mxu0
      %v1025 = vadd.f32 0.0, %v1024
      %v1026 = vpop.f32.mrf.mxu0
      %1027 = vmatprep.mubr.bf16.mxu0 0
      %1028 = vmatmul.mubr.bf16.gmra.mxu0 %v971
      %v1029 = vpop.f32.mrf.mxu0
      %v1030 = vadd.f32 0.0, %v1029
      %v1031 = vpop.f32.mrf.mxu0
      %v1032 = vpop.f32.mrf.mxu0
      %v1033 = vadd.f32 0.0, %v1032
      %v1034 = vpop.f32.mrf.mxu0
      %1035 = vmatprep.mubr.bf16.mxu0 0
      %1036 = vmatmul.mubr.bf16.gmra.mxu0 %v974
      %v1037 = vpop.f32.mrf.mxu0
      %v1038 = vadd.f32 0.0, %v1037
      %v1039 = vpop.f32.mrf.mxu0
      %v1040 = vpop.f32.mrf.mxu0
      %v1041 = vadd.f32 0.0, %v1040
      %v1042 = vpop.f32.mrf.mxu0
      %1043 = vdwg.mxu0
      %v1044 = vadd.f32 %v926, %v1014
      %v1045 = vadd.f32 %v927, %v1017
      %v1046 = vadd.f32 %v928, %v1022
      %v1047 = vadd.f32 %v929, %v1025
      %v1048 = vadd.f32 %v930, %v1030
      %v1049 = vadd.f32 %v931, %v1033
      %v1050 = vadd.f32 %v932, %v1038
      %v1051 = vadd.f32 %v933, %v1041
      %v1052 = vld [vmem:[%s341] sm:$0xf]
      %v1053 = vld [vmem:[%s341 + $0x4] sm:$0x1]
      %v1054 = vld [vmem:[%s341 + $0x8] sm:$0xf]
      %v1055 = vld [vmem:[%s341 + $0xc] sm:$0x1]
      %v1056 = vld [vmem:[%s341 + $0x10] sm:$0xf]
      %v1057 = vld [vmem:[%s341 + $0x14] sm:$0x1]
      %v1058 = vld [vmem:[%s341 + $0x18] sm:$0xf]
      %v1059 = vld [vmem:[%s341 + $0x1c] sm:$0x1]
      %v1060 = vld [vmem:[%s341 + $0x20] sm:$0xf]
      %v1061 = vld [vmem:[%s341 + $0x24] sm:$0x1]
      %v1062 = vld [vmem:[%s341 + $0x28] sm:$0xf]
      %v1063 = vld [vmem:[%s341 + $0x2c] sm:$0x1]
      %v1064 = vld [vmem:[%s341 + $0x30] sm:$0xf]
      %v1065 = vld [vmem:[%s341 + $0x34] sm:$0x1]
      %v1066 = vld [vmem:[%s341 + $0x38] sm:$0xf]
      %v1067 = vld [vmem:[%s341 + $0x3c] sm:$0x1]
      %v1069 = vshrl.u32 %v1052, 16
      %v1071 = vrot.slane %v1069, 4
      %v1072 = vshll.u32 %v1052, 16
      %v1074 = vrot.slane %v1072, 5
      %v1075 = vor.u32 %v1071, %v1074
      %v1076 = vrot.slane %v1075, 4
      %v1078 = vshll.u32 %v1053, 16
      %v1080 = vrot.slane %v1078, 5
      %v1081 = vsel %vm601, %v1076, %v1080
      %v1083 = vshrl.u32 %v1054, 16
      %v1085 = vrot.slane %v1083, 4
      %v1086 = vshll.u32 %v1054, 16
      %v1088 = vrot.slane %v1086, 5
      %v1089 = vor.u32 %v1085, %v1088
      %v1090 = vrot.slane %v1089, 4
      %v1092 = vshll.u32 %v1055, 16
      %v1094 = vrot.slane %v1092, 5
      %v1095 = vsel %vm601, %v1090, %v1094
      %v1097 = vshrl.u32 %v1056, 16
      %v1099 = vrot.slane %v1097, 4
      %v1100 = vshll.u32 %v1056, 16
      %v1102 = vrot.slane %v1100, 5
      %v1103 = vor.u32 %v1099, %v1102
      %v1104 = vrot.slane %v1103, 4
      %v1106 = vshll.u32 %v1057, 16
      %v1108 = vrot.slane %v1106, 5
      %v1109 = vsel %vm601, %v1104, %v1108
      %v1111 = vshrl.u32 %v1058, 16
      %v1113 = vrot.slane %v1111, 4
      %v1114 = vshll.u32 %v1058, 16
      %v1116 = vrot.slane %v1114, 5
      %v1117 = vor.u32 %v1113, %v1116
      %v1118 = vrot.slane %v1117, 4
      %v1120 = vshll.u32 %v1059, 16
      %v1122 = vrot.slane %v1120, 5
      %v1123 = vsel %vm601, %v1118, %v1122
      %v1125 = vshrl.u32 %v1060, 16
      %v1127 = vrot.slane %v1125, 4
      %v1128 = vshll.u32 %v1060, 16
      %v1130 = vrot.slane %v1128, 5
      %v1131 = vor.u32 %v1127, %v1130
      %v1132 = vrot.slane %v1131, 4
      %v1134 = vshll.u32 %v1061, 16
      %v1136 = vrot.slane %v1134, 5
      %v1137 = vsel %vm601, %v1132, %v1136
      %v1139 = vshrl.u32 %v1062, 16
      %v1141 = vrot.slane %v1139, 4
      %v1142 = vshll.u32 %v1062, 16
      %v1144 = vrot.slane %v1142, 5
      %v1145 = vor.u32 %v1141, %v1144
      %v1146 = vrot.slane %v1145, 4
      %v1148 = vshll.u32 %v1063, 16
      %v1150 = vrot.slane %v1148, 5
      %v1151 = vsel %vm601, %v1146, %v1150
      %v1153 = vshrl.u32 %v1064, 16
      %v1155 = vrot.slane %v1153, 4
      %v1156 = vshll.u32 %v1064, 16
      %v1158 = vrot.slane %v1156, 5
      %v1159 = vor.u32 %v1155, %v1158
      %v1160 = vrot.slane %v1159, 4
      %v1162 = vshll.u32 %v1065, 16
      %v1164 = vrot.slane %v1162, 5
      %v1165 = vsel %vm601, %v1160, %v1164
      %v1167 = vshrl.u32 %v1066, 16
      %v1169 = vrot.slane %v1167, 4
      %v1170 = vshll.u32 %v1066, 16
      %v1172 = vrot.slane %v1170, 5
      %v1173 = vor.u32 %v1169, %v1172
      %v1174 = vrot.slane %v1173, 4
      %v1176 = vshll.u32 %v1067, 16
      %v1178 = vrot.slane %v1176, 5
      %v1179 = vsel %vm601, %v1174, %v1178
      %s1180 = scalar_lea.vmem %s4, 10
      %v1181 = vld [vmem:[%s1180] sm:$0x3]
      %v1182 = vunpack.c.l.b16 %v1081
      %v1183 = vunpack.c.l.b16 %v1095
      %v1184 = vunpack.c.l.b16 %v1109
      %v1185 = vunpack.c.l.b16 %v1123
      %v1186 = vunpack.c.l.b16 %v1137
      %v1187 = vunpack.c.l.b16 %v1151
      %v1188 = vunpack.c.l.b16 %v1165
      %v1189 = vunpack.c.l.b16 %v1179
      %v1190 = vpack.c.b16 %v1183, %v1182
      %v1191 = vpack.c.b16 %v1185, %v1184
      %v1192 = vpack.c.b16 %v1187, %v1186
      %v1193 = vpack.c.b16 %v1189, %v1188
      %v1195 = vsel %vm401, %v1190, 0
      %v1198 = vsel %vm401, %v1191, 0
      %v1201 = vsel %vm401, %v1192, 0
      %v1204 = vsel %vm401, %v1193, 0
      %v1207 = vsel %vm414, %v1181, 0
      %1209 = vmatprep.subr.bf16.mxu0 0
      %1210 = vmatpush1.bf16.msra.mxu0 0
      %1211 = vmatprep.subr.bf16.mxu0 0
      %1212 = vmatpush1.bf16.msra.mxu0 0
      %1213 = vmatprep.subr.bf16.mxu0 0
      %1214 = vmatpush1.bf16.msra.mxu0 0
      %1215 = vmatprep.subr.bf16.mxu0 0
      %1216 = vmatpush1.bf16.msra.mxu0 0
      %1217 = vmatprep.subr.bf16.mxu0 0
      %1218 = vmatpush1.bf16.msra.mxu0 0
      %1219 = vmatprep.subr.bf16.mxu0 0
      %1220 = vmatpush1.bf16.msra.mxu0 0
      %1221 = vmatprep.subr.bf16.mxu0 0
      %1222 = vmatpush1.bf16.msra.mxu0 0
      %1223 = vmatprep.subr.bf16.mxu0 0
      %1224 = vmatpush1.bf16.msra.mxu0 %v1207
      %1225 = vmatprep.subr.bf16.mxu0 0
      %1226 = vmatpush2.bf16.msra.mxu0 0
      %1227 = vmatprep.subr.bf16.mxu0 0
      %1228 = vmatpush2.bf16.msra.mxu0 0
      %1229 = vmatprep.subr.bf16.mxu0 0
      %1230 = vmatpush2.bf16.msra.mxu0 0
      %1231 = vmatprep.subr.bf16.mxu0 0
      %1232 = vmatpush2.bf16.msra.mxu0 0
      %1233 = vmatprep.subr.bf16.mxu0 0
      %1234 = vmatpush2.bf16.msra.mxu0 0
      %1235 = vmatprep.subr.bf16.mxu0 0
      %1236 = vmatpush2.bf16.msra.mxu0 0
      %1237 = vmatprep.subr.bf16.mxu0 0
      %1238 = vmatpush2.bf16.msra.mxu0 0
      %1239 = vmatprep.subr.bf16.mxu0 0
      %1240 = vmatpush2.bf16.msra.mxu0 0
      %1241 = vmatprep.mubr.bf16.mxu0 0
      %1242 = vmatmul.mubr.bf16.gmra.mxu0 %v1195
      %v1243 = vpop.f32.mrf.mxu0
      %v1244 = vadd.f32 0.0, %v1243
      %v1245 = vpop.f32.mrf.mxu0
      %v1246 = vpop.f32.mrf.mxu0
      %v1247 = vadd.f32 0.0, %v1246
      %v1248 = vpop.f32.mrf.mxu0
      %1249 = vmatprep.mubr.bf16.mxu0 0
      %1250 = vmatmul.mubr.bf16.gmra.mxu0 %v1198
      %v1251 = vpop.f32.mrf.mxu0
      %v1252 = vadd.f32 0.0, %v1251
      %v1253 = vpop.f32.mrf.mxu0
      %v1254 = vpop.f32.mrf.mxu0
      %v1255 = vadd.f32 0.0, %v1254
      %v1256 = vpop.f32.mrf.mxu0
      %1257 = vmatprep.mubr.bf16.mxu0 0
      %1258 = vmatmul.mubr.bf16.gmra.mxu0 %v1201
      %v1259 = vpop.f32.mrf.mxu0
      %v1260 = vadd.f32 0.0, %v1259
      %v1261 = vpop.f32.mrf.mxu0
      %v1262 = vpop.f32.mrf.mxu0
      %v1263 = vadd.f32 0.0, %v1262
      %v1264 = vpop.f32.mrf.mxu0
      %1265 = vmatprep.mubr.bf16.mxu0 0
      %1266 = vmatmul.mubr.bf16.gmra.mxu0 %v1204
      %v1267 = vpop.f32.mrf.mxu0
      %v1268 = vadd.f32 0.0, %v1267
      %v1269 = vpop.f32.mrf.mxu0
      %v1270 = vpop.f32.mrf.mxu0
      %v1271 = vadd.f32 0.0, %v1270
      %v1272 = vpop.f32.mrf.mxu0
      %1273 = vdwg.mxu0
      %v1274 = vadd.f32 %v1044, %v1244
      %v1275 = vadd.f32 %v1045, %v1247
      %v1276 = vadd.f32 %v1046, %v1252
      %v1277 = vadd.f32 %v1047, %v1255
      %v1278 = vadd.f32 %v1048, %v1260
      %v1279 = vadd.f32 %v1049, %v1263
      %v1280 = vadd.f32 %v1050, %v1268
      %v1281 = vadd.f32 %v1051, %v1271
      %s1282 = scalar_lea.vmem %s331, 8
      %v1283 = vld [vmem:[%s1282] sm:$0xf]
      %v1284 = vld [vmem:[%s1282 + $0x8] sm:$0xf]
      %v1285 = vld [vmem:[%s1282 + $0x10] sm:$0xf]
      %v1286 = vld [vmem:[%s1282 + $0x18] sm:$0xf]
      %v1287 = vld [vmem:[%s1282 + $0x20] sm:$0xf]
      %v1288 = vld [vmem:[%s1282 + $0x28] sm:$0xf]
      %v1289 = vld [vmem:[%s1282 + $0x30] sm:$0xf]
      %v1290 = vld [vmem:[%s1282 + $0x38] sm:$0xf]
      %s1291 = scalar_lea.vmem %s4, 12
      %v1292 = vld [vmem:[%s1291] sm:$0x3]
      %v1301 = vunpack.c.l.b16 %v1283
      %v1302 = vunpack.c.l.b16 %v1284
      %v1303 = vunpack.c.l.b16 %v1285
      %v1304 = vunpack.c.l.b16 %v1286
      %v1305 = vunpack.c.l.b16 %v1287
      %v1306 = vunpack.c.l.b16 %v1288
      %v1307 = vunpack.c.l.b16 %v1289
      %v1308 = vunpack.c.l.b16 %v1290
      %v1309 = vpack.c.b16 %v1302, %v1301
      %v1310 = vpack.c.b16 %v1304, %v1303
      %v1311 = vpack.c.b16 %v1306, %v1305
      %v1312 = vpack.c.b16 %v1308, %v1307
      %v1314 = vsel %vm401, %v1309, 0
      %v1317 = vsel %vm401, %v1310, 0
      %v1320 = vsel %vm401, %v1311, 0
      %v1323 = vsel %vm401, %v1312, 0
      %v1326 = vsel %vm414, %v1292, 0
      %1328 = vmatprep.subr.bf16.mxu0 0
      %1329 = vmatpush1.bf16.msra.mxu0 0
      %1330 = vmatprep.subr.bf16.mxu0 0
      %1331 = vmatpush1.bf16.msra.mxu0 0
      %1332 = vmatprep.subr.bf16.mxu0 0
      %1333 = vmatpush1.bf16.msra.mxu0 0
      %1334 = vmatprep.subr.bf16.mxu0 0
      %1335 = vmatpush1.bf16.msra.mxu0 0
      %1336 = vmatprep.subr.bf16.mxu0 0
      %1337 = vmatpush1.bf16.msra.mxu0 0
      %1338 = vmatprep.subr.bf16.mxu0 0
      %1339 = vmatpush1.bf16.msra.mxu0 0
      %1340 = vmatprep.subr.bf16.mxu0 0
      %1341 = vmatpush1.bf16.msra.mxu0 0
      %1342 = vmatprep.subr.bf16.mxu0 0
      %1343 = vmatpush1.bf16.msra.mxu0 %v1326
      %1344 = vmatprep.subr.bf16.mxu0 0
      %1345 = vmatpush2.bf16.msra.mxu0 0
      %1346 = vmatprep.subr.bf16.mxu0 0
      %1347 = vmatpush2.bf16.msra.mxu0 0
      %1348 = vmatprep.subr.bf16.mxu0 0
      %1349 = vmatpush2.bf16.msra.mxu0 0
      %1350 = vmatprep.subr.bf16.mxu0 0
      %1351 = vmatpush2.bf16.msra.mxu0 0
      %1352 = vmatprep.subr.bf16.mxu0 0
      %1353 = vmatpush2.bf16.msra.mxu0 0
      %1354 = vmatprep.subr.bf16.mxu0 0
      %1355 = vmatpush2.bf16.msra.mxu0 0
      %1356 = vmatprep.subr.bf16.mxu0 0
      %1357 = vmatpush2.bf16.msra.mxu0 0
      %1358 = vmatprep.subr.bf16.mxu0 0
      %1359 = vmatpush2.bf16.msra.mxu0 0
      %1360 = vmatprep.mubr.bf16.mxu0 0
      %1361 = vmatmul.mubr.bf16.gmra.mxu0 %v1314
      %v1362 = vpop.f32.mrf.mxu0
      %v1363 = vadd.f32 0.0, %v1362
      %v1364 = vpop.f32.mrf.mxu0
      %v1365 = vpop.f32.mrf.mxu0
      %v1366 = vadd.f32 0.0, %v1365
      %v1367 = vpop.f32.mrf.mxu0
      %1368 = vmatprep.mubr.bf16.mxu0 0
      %1369 = vmatmul.mubr.bf16.gmra.mxu0 %v1317
      %v1370 = vpop.f32.mrf.mxu0
      %v1371 = vadd.f32 0.0, %v1370
      %v1372 = vpop.f32.mrf.mxu0
      %v1373 = vpop.f32.mrf.mxu0
      %v1374 = vadd.f32 0.0, %v1373
      %v1375 = vpop.f32.mrf.mxu0
      %1376 = vmatprep.mubr.bf16.mxu0 0
      %1377 = vmatmul.mubr.bf16.gmra.mxu0 %v1320
      %v1378 = vpop.f32.mrf.mxu0
      %v1379 = vadd.f32 0.0, %v1378
      %v1380 = vpop.f32.mrf.mxu0
      %v1381 = vpop.f32.mrf.mxu0
      %v1382 = vadd.f32 0.0, %v1381
      %v1383 = vpop.f32.mrf.mxu0
      %1384 = vmatprep.mubr.bf16.mxu0 0
      %1385 = vmatmul.mubr.bf16.gmra.mxu0 %v1323
      %v1386 = vpop.f32.mrf.mxu0
      %v1387 = vadd.f32 0.0, %v1386
      %v1388 = vpop.f32.mrf.mxu0
      %v1389 = vpop.f32.mrf.mxu0
      %v1390 = vadd.f32 0.0, %v1389
      %v1391 = vpop.f32.mrf.mxu0
      %1392 = vdwg.mxu0
      %v1393 = vadd.f32 %v1274, %v1363
      %v1394 = vadd.f32 %v1275, %v1366
      %v1395 = vadd.f32 %v1276, %v1371
      %v1396 = vadd.f32 %v1277, %v1374
      %v1397 = vadd.f32 %v1278, %v1379
      %v1398 = vadd.f32 %v1279, %v1382
      %v1399 = vadd.f32 %v1280, %v1387
      %v1400 = vadd.f32 %v1281, %v1390
      %s1401 = scalar_lea.vmem %s336, 8
      %v1402 = vld [vmem:[%s1401] sm:$0xf]
      %v1403 = vld [vmem:[%s1401 + $0x8] sm:$0xf]
      %v1404 = vld [vmem:[%s1401 + $0x10] sm:$0xf]
      %v1405 = vld [vmem:[%s1401 + $0x18] sm:$0xf]
      %v1406 = vld [vmem:[%s1401 + $0x20] sm:$0xf]
      %v1407 = vld [vmem:[%s1401 + $0x28] sm:$0xf]
      %v1408 = vld [vmem:[%s1401 + $0x30] sm:$0xf]
      %v1409 = vld [vmem:[%s1401 + $0x38] sm:$0xf]
      %s1410 = scalar_lea.vmem %s4, 14
      %v1411 = vld [vmem:[%s1410] sm:$0x3]
      %v1420 = vunpack.c.l.b16 %v1402
      %v1421 = vunpack.c.l.b16 %v1403
      %v1422 = vunpack.c.l.b16 %v1404
      %v1423 = vunpack.c.l.b16 %v1405
      %v1424 = vunpack.c.l.b16 %v1406
      %v1425 = vunpack.c.l.b16 %v1407
      %v1426 = vunpack.c.l.b16 %v1408
      %v1427 = vunpack.c.l.b16 %v1409
      %v1428 = vpack.c.b16 %v1421, %v1420
      %v1429 = vpack.c.b16 %v1423, %v1422
      %v1430 = vpack.c.b16 %v1425, %v1424
      %v1431 = vpack.c.b16 %v1427, %v1426
      %v1433 = vsel %vm401, %v1428, 0
      %v1436 = vsel %vm401, %v1429, 0
      %v1439 = vsel %vm401, %v1430, 0
      %v1442 = vsel %vm401, %v1431, 0
      %v1445 = vsel %vm414, %v1411, 0
      %1447 = vmatprep.subr.bf16.mxu0 0
      %1448 = vmatpush1.bf16.msra.mxu0 0
      %1449 = vmatprep.subr.bf16.mxu0 0
      %1450 = vmatpush1.bf16.msra.mxu0 0
      %1451 = vmatprep.subr.bf16.mxu0 0
      %1452 = vmatpush1.bf16.msra.mxu0 0
      %1453 = vmatprep.subr.bf16.mxu0 0
      %1454 = vmatpush1.bf16.msra.mxu0 0
      %1455 = vmatprep.subr.bf16.mxu0 0
      %1456 = vmatpush1.bf16.msra.mxu0 0
      %1457 = vmatprep.subr.bf16.mxu0 0
      %1458 = vmatpush1.bf16.msra.mxu0 0
      %1459 = vmatprep.subr.bf16.mxu0 0
      %1460 = vmatpush1.bf16.msra.mxu0 0
      %1461 = vmatprep.subr.bf16.mxu0 0
      %1462 = vmatpush1.bf16.msra.mxu0 %v1445
      %1463 = vmatprep.subr.bf16.mxu0 0
      %1464 = vmatpush2.bf16.msra.mxu0 0
      %1465 = vmatprep.subr.bf16.mxu0 0
      %1466 = vmatpush2.bf16.msra.mxu0 0
      %1467 = vmatprep.subr.bf16.mxu0 0
      %1468 = vmatpush2.bf16.msra.mxu0 0
      %1469 = vmatprep.subr.bf16.mxu0 0
      %1470 = vmatpush2.bf16.msra.mxu0 0
      %1471 = vmatprep.subr.bf16.mxu0 0
      %1472 = vmatpush2.bf16.msra.mxu0 0
      %1473 = vmatprep.subr.bf16.mxu0 0
      %1474 = vmatpush2.bf16.msra.mxu0 0
      %1475 = vmatprep.subr.bf16.mxu0 0
      %1476 = vmatpush2.bf16.msra.mxu0 0
      %1477 = vmatprep.subr.bf16.mxu0 0
      %1478 = vmatpush2.bf16.msra.mxu0 0
      %1479 = vmatprep.mubr.bf16.mxu0 0
      %1480 = vmatmul.mubr.bf16.gmra.mxu0 %v1433
      %v1481 = vpop.f32.mrf.mxu0
      %v1482 = vadd.f32 0.0, %v1481
      %v1483 = vpop.f32.mrf.mxu0
      %v1484 = vpop.f32.mrf.mxu0
      %v1485 = vadd.f32 0.0, %v1484
      %v1486 = vpop.f32.mrf.mxu0
      %1487 = vmatprep.mubr.bf16.mxu0 0
      %1488 = vmatmul.mubr.bf16.gmra.mxu0 %v1436
      %v1489 = vpop.f32.mrf.mxu0
      %v1490 = vadd.f32 0.0, %v1489
      %v1491 = vpop.f32.mrf.mxu0
      %v1492 = vpop.f32.mrf.mxu0
      %v1493 = vadd.f32 0.0, %v1492
      %v1494 = vpop.f32.mrf.mxu0
      %1495 = vmatprep.mubr.bf16.mxu0 0
      %1496 = vmatmul.mubr.bf16.gmra.mxu0 %v1439
      %v1497 = vpop.f32.mrf.mxu0
      %v1498 = vadd.f32 0.0, %v1497
      %v1499 = vpop.f32.mrf.mxu0
      %v1500 = vpop.f32.mrf.mxu0
      %v1501 = vadd.f32 0.0, %v1500
      %v1502 = vpop.f32.mrf.mxu0
      %1503 = vmatprep.mubr.bf16.mxu0 0
      %1504 = vmatmul.mubr.bf16.gmra.mxu0 %v1442
      %v1505 = vpop.f32.mrf.mxu0
      %v1506 = vadd.f32 0.0, %v1505
      %v1507 = vpop.f32.mrf.mxu0
      %v1508 = vpop.f32.mrf.mxu0
      %v1509 = vadd.f32 0.0, %v1508
      %v1510 = vpop.f32.mrf.mxu0
      %1511 = vdwg.mxu0
      %v1512 = vadd.f32 %v1393, %v1482
      %v1513 = vadd.f32 %v1394, %v1485
      %v1514 = vadd.f32 %v1395, %v1490
      %v1515 = vadd.f32 %v1396, %v1493
      %v1516 = vadd.f32 %v1397, %v1498
      %v1517 = vadd.f32 %v1398, %v1501
      %v1518 = vadd.f32 %v1399, %v1506
      %v1519 = vadd.f32 %v1400, %v1509
      %v1520 = vld [vmem:[%s1282] sm:$0xf]
      %v1521 = vld [vmem:[%s1282 + $0x4] sm:$0x1]
      %v1522 = vld [vmem:[%s1282 + $0x8] sm:$0xf]
      %v1523 = vld [vmem:[%s1282 + $0xc] sm:$0x1]
      %v1524 = vld [vmem:[%s1282 + $0x10] sm:$0xf]
      %v1525 = vld [vmem:[%s1282 + $0x14] sm:$0x1]
      %v1526 = vld [vmem:[%s1282 + $0x18] sm:$0xf]
      %v1527 = vld [vmem:[%s1282 + $0x1c] sm:$0x1]
      %v1528 = vld [vmem:[%s1282 + $0x20] sm:$0xf]
      %v1529 = vld [vmem:[%s1282 + $0x24] sm:$0x1]
      %v1530 = vld [vmem:[%s1282 + $0x28] sm:$0xf]
      %v1531 = vld [vmem:[%s1282 + $0x2c] sm:$0x1]
      %v1532 = vld [vmem:[%s1282 + $0x30] sm:$0xf]
      %v1533 = vld [vmem:[%s1282 + $0x34] sm:$0x1]
      %v1534 = vld [vmem:[%s1282 + $0x38] sm:$0xf]
      %v1535 = vld [vmem:[%s1282 + $0x3c] sm:$0x1]
      %v1537 = vshrl.u32 %v1520, 16
      %v1539 = vrot.slane %v1537, 4
      %v1540 = vshll.u32 %v1520, 16
      %v1542 = vrot.slane %v1540, 5
      %v1543 = vor.u32 %v1539, %v1542
      %v1544 = vrot.slane %v1543, 4
      %v1546 = vshll.u32 %v1521, 16
      %v1548 = vrot.slane %v1546, 5
      %v1549 = vsel %vm601, %v1544, %v1548
      %v1551 = vshrl.u32 %v1522, 16
      %v1553 = vrot.slane %v1551, 4
      %v1554 = vshll.u32 %v1522, 16
      %v1556 = vrot.slane %v1554, 5
      %v1557 = vor.u32 %v1553, %v1556
      %v1558 = vrot.slane %v1557, 4
      %v1560 = vshll.u32 %v1523, 16
      %v1562 = vrot.slane %v1560, 5
      %v1563 = vsel %vm601, %v1558, %v1562
      %v1565 = vshrl.u32 %v1524, 16
      %v1567 = vrot.slane %v1565, 4
      %v1568 = vshll.u32 %v1524, 16
      %v1570 = vrot.slane %v1568, 5
      %v1571 = vor.u32 %v1567, %v1570
      %v1572 = vrot.slane %v1571, 4
      %v1574 = vshll.u32 %v1525, 16
      %v1576 = vrot.slane %v1574, 5
      %v1577 = vsel %vm601, %v1572, %v1576
      %v1579 = vshrl.u32 %v1526, 16
      %v1581 = vrot.slane %v1579, 4
      %v1582 = vshll.u32 %v1526, 16
      %v1584 = vrot.slane %v1582, 5
      %v1585 = vor.u32 %v1581, %v1584
      %v1586 = vrot.slane %v1585, 4
      %v1588 = vshll.u32 %v1527, 16
      %v1590 = vrot.slane %v1588, 5
      %v1591 = vsel %vm601, %v1586, %v1590
      %v1593 = vshrl.u32 %v1528, 16
      %v1595 = vrot.slane %v1593, 4
      %v1596 = vshll.u32 %v1528, 16
      %v1598 = vrot.slane %v1596, 5
      %v1599 = vor.u32 %v1595, %v1598
      %v1600 = vrot.slane %v1599, 4
      %v1602 = vshll.u32 %v1529, 16
      %v1604 = vrot.slane %v1602, 5
      %v1605 = vsel %vm601, %v1600, %v1604
      %v1607 = vshrl.u32 %v1530, 16
      %v1609 = vrot.slane %v1607, 4
      %v1610 = vshll.u32 %v1530, 16
      %v1612 = vrot.slane %v1610, 5
      %v1613 = vor.u32 %v1609, %v1612
      %v1614 = vrot.slane %v1613, 4
      %v1616 = vshll.u32 %v1531, 16
      %v1618 = vrot.slane %v1616, 5
      %v1619 = vsel %vm601, %v1614, %v1618
      %v1621 = vshrl.u32 %v1532, 16
      %v1623 = vrot.slane %v1621, 4
      %v1624 = vshll.u32 %v1532, 16
      %v1626 = vrot.slane %v1624, 5
      %v1627 = vor.u32 %v1623, %v1626
      %v1628 = vrot.slane %v1627, 4
      %v1630 = vshll.u32 %v1533, 16
      %v1632 = vrot.slane %v1630, 5
      %v1633 = vsel %vm601, %v1628, %v1632
      %v1635 = vshrl.u32 %v1534, 16
      %v1637 = vrot.slane %v1635, 4
      %v1638 = vshll.u32 %v1534, 16
      %v1640 = vrot.slane %v1638, 5
      %v1641 = vor.u32 %v1637, %v1640
      %v1642 = vrot.slane %v1641, 4
      %v1644 = vshll.u32 %v1535, 16
      %v1646 = vrot.slane %v1644, 5
      %v1647 = vsel %vm601, %v1642, %v1646
      %s1648 = scalar_lea.vmem %s4, 16
      %v1649 = vld [vmem:[%s1648] sm:$0x3]
      %v1650 = vunpack.c.l.b16 %v1549
      %v1651 = vunpack.c.l.b16 %v1563
      %v1652 = vunpack.c.l.b16 %v1577
      %v1653 = vunpack.c.l.b16 %v1591
      %v1654 = vunpack.c.l.b16 %v1605
      %v1655 = vunpack.c.l.b16 %v1619
      %v1656 = vunpack.c.l.b16 %v1633
      %v1657 = vunpack.c.l.b16 %v1647
      %v1658 = vpack.c.b16 %v1651, %v1650
      %v1659 = vpack.c.b16 %v1653, %v1652
      %v1660 = vpack.c.b16 %v1655, %v1654
      %v1661 = vpack.c.b16 %v1657, %v1656
      %v1663 = vsel %vm401, %v1658, 0
      %v1666 = vsel %vm401, %v1659, 0
      %v1669 = vsel %vm401, %v1660, 0
      %v1672 = vsel %vm401, %v1661, 0
      %v1675 = vsel %vm414, %v1649, 0
      %1677 = vmatprep.subr.bf16.mxu0 0
      %1678 = vmatpush1.bf16.msra.mxu0 0
      %1679 = vmatprep.subr.bf16.mxu0 0
      %1680 = vmatpush1.bf16.msra.mxu0 0
      %1681 = vmatprep.subr.bf16.mxu0 0
      %1682 = vmatpush1.bf16.msra.mxu0 0
      %1683 = vmatprep.subr.bf16.mxu0 0
      %1684 = vmatpush1.bf16.msra.mxu0 0
      %1685 = vmatprep.subr.bf16.mxu0 0
      %1686 = vmatpush1.bf16.msra.mxu0 0
      %1687 = vmatprep.subr.bf16.mxu0 0
      %1688 = vmatpush1.bf16.msra.mxu0 0
      %1689 = vmatprep.subr.bf16.mxu0 0
      %1690 = vmatpush1.bf16.msra.mxu0 0
      %1691 = vmatprep.subr.bf16.mxu0 0
      %1692 = vmatpush1.bf16.msra.mxu0 %v1675
      %1693 = vmatprep.subr.bf16.mxu0 0
      %1694 = vmatpush2.bf16.msra.mxu0 0
      %1695 = vmatprep.subr.bf16.mxu0 0
      %1696 = vmatpush2.bf16.msra.mxu0 0
      %1697 = vmatprep.subr.bf16.mxu0 0
      %1698 = vmatpush2.bf16.msra.mxu0 0
      %1699 = vmatprep.subr.bf16.mxu0 0
      %1700 = vmatpush2.bf16.msra.mxu0 0
      %1701 = vmatprep.subr.bf16.mxu0 0
      %1702 = vmatpush2.bf16.msra.mxu0 0
      %1703 = vmatprep.subr.bf16.mxu0 0
      %1704 = vmatpush2.bf16.msra.mxu0 0
      %1705 = vmatprep.subr.bf16.mxu0 0
      %1706 = vmatpush2.bf16.msra.mxu0 0
      %1707 = vmatprep.subr.bf16.mxu0 0
      %1708 = vmatpush2.bf16.msra.mxu0 0
      %1709 = vmatprep.mubr.bf16.mxu0 0
      %1710 = vmatmul.mubr.bf16.gmra.mxu0 %v1663
      %v1711 = vpop.f32.mrf.mxu0
      %v1712 = vadd.f32 0.0, %v1711
      %v1713 = vpop.f32.mrf.mxu0
      %v1714 = vpop.f32.mrf.mxu0
      %v1715 = vadd.f32 0.0, %v1714
      %v1716 = vpop.f32.mrf.mxu0
      %1717 = vmatprep.mubr.bf16.mxu0 0
      %1718 = vmatmul.mubr.bf16.gmra.mxu0 %v1666
      %v1719 = vpop.f32.mrf.mxu0
      %v1720 = vadd.f32 0.0, %v1719
      %v1721 = vpop.f32.mrf.mxu0
      %v1722 = vpop.f32.mrf.mxu0
      %v1723 = vadd.f32 0.0, %v1722
      %v1724 = vpop.f32.mrf.mxu0
      %1725 = vmatprep.mubr.bf16.mxu0 0
      %1726 = vmatmul.mubr.bf16.gmra.mxu0 %v1669
      %v1727 = vpop.f32.mrf.mxu0
      %v1728 = vadd.f32 0.0, %v1727
      %v1729 = vpop.f32.mrf.mxu0
      %v1730 = vpop.f32.mrf.mxu0
      %v1731 = vadd.f32 0.0, %v1730
      %v1732 = vpop.f32.mrf.mxu0
      %1733 = vmatprep.mubr.bf16.mxu0 0
      %1734 = vmatmul.mubr.bf16.gmra.mxu0 %v1672
      %v1735 = vpop.f32.mrf.mxu0
      %v1736 = vadd.f32 0.0, %v1735
      %v1737 = vpop.f32.mrf.mxu0
      %v1738 = vpop.f32.mrf.mxu0
      %v1739 = vadd.f32 0.0, %v1738
      %v1740 = vpop.f32.mrf.mxu0
      %1741 = vdwg.mxu0
      %v1742 = vadd.f32 %v1512, %v1712
      %v1743 = vadd.f32 %v1513, %v1715
      %v1744 = vadd.f32 %v1514, %v1720
      %v1745 = vadd.f32 %v1515, %v1723
      %v1746 = vadd.f32 %v1516, %v1728
      %v1747 = vadd.f32 %v1517, %v1731
      %v1748 = vadd.f32 %v1518, %v1736
      %v1749 = vadd.f32 %v1519, %v1739
      %1750 = vst [vmem:[%s351] sm:$0xff] %v1742
      %1751 = vst [vmem:[%s351 + $0x8] sm:$0xff] %v1743
      %1752 = vst [vmem:[%s351 + $0x10] sm:$0xff] %v1744
      %1753 = vst [vmem:[%s351 + $0x18] sm:$0xff] %v1745
      %1754 = vst [vmem:[%s351 + $0x20] sm:$0xff] %v1746
      %1755 = vst [vmem:[%s351 + $0x28] sm:$0xff] %v1747
      %1756 = vst [vmem:[%s351 + $0x30] sm:$0xff] %v1748
      %1757 = vst [vmem:[%s351 + $0x38] sm:$0xff] %v1749
      %v1758 = vadd.f32 %v1742, %v1743
      %v1759 = vadd.f32 %v1758, %v1744
      %v1760 = vadd.f32 %v1759, %v1745
      %v1761 = vadd.f32 %v1760, %v1746
      %v1762 = vadd.f32 %v1761, %v1747
      %v1763 = vadd.f32 %v1762, %v1748
      %v1764 = vadd.f32 %v1763, %v1749
      %1765 = vst [vmem:[%s356] sm:$0xff] %v1764
      %v1766 = vmul.f32 %v1742, %v1742
      %v1767 = vmul.f32 %v1743, %v1743
      %v1768 = vmul.f32 %v1744, %v1744
      %v1769 = vmul.f32 %v1745, %v1745
      %v1770 = vmul.f32 %v1746, %v1746
      %v1771 = vmul.f32 %v1747, %v1747
      %v1772 = vmul.f32 %v1748, %v1748
      %v1773 = vmul.f32 %v1749, %v1749
      %v1774 = vadd.f32 %v1766, %v1767
      %v1775 = vadd.f32 %v1774, %v1768
      %v1776 = vadd.f32 %v1775, %v1769
      %v1777 = vadd.f32 %v1776, %v1770
      %v1778 = vadd.f32 %v1777, %v1771
      %v1779 = vadd.f32 %v1778, %v1772
      %v1780 = vadd.f32 %v1779, %v1773
      %1781 = vst [vmem:[%s360] sm:$0xff] %v1780
      %s1782 = smul.u32 8, %s19
      %p1783 = scmp.lt.s32.totalorder %s1782, 15
      %s1784 = scalar_select %p1783, %s1782, 15
      %s1785 = smul.addr %s1784, 8
      %s1786 = scalar_lea.vmem %s5, %s1785
      %p1787 = scmp.lt.s32.totalorder %s19, 1
      %s1788 = scalar_select %p1787, %s19, 1
      %s1789 = smul.addr %s1788, 8
      %s1790 = scalar_lea.vmem %s6, %s1789
      %p1791 = scmp.lt.s32.totalorder %s19, 1
      %s1792 = scalar_select %p1791, %s19, 1
      %s1793 = smul.addr %s1792, 8
      %s1794 = scalar_lea.vmem %s7, %s1793
      // Predicated region
      $region41: #{_residual_block_impl.4} parent=39 // pred_check
        %p1795 = pneg %p162
      $region42: #{_residual_block_impl.4} parent=39 // pred_check_branch
        %1797 = sbr.rel (%p1795) target = $region44
      $region43: #{_residual_block_impl.4} parent=39 // pred_region
        %s1798 = smul.u32 8, %s19
      $region44: #{_residual_block_impl.4} parent=39 // pred_fallthru
        _
      // Predicated region
      $region45: #{_residual_block_impl.4} parent=39 // pred_check
        %p1799 = pneg %p188
      $region46: #{_residual_block_impl.4} parent=39 // pred_check_branch
        %1801 = sbr.rel (%p1799) target = $region48
      $region47: #{_residual_block_impl.4} parent=39 // pred_region
        _
      $region48: #{_residual_block_impl.4} parent=39 // pred_fallthru
        _
      // Predicated region
      $region49: #{_residual_block_impl.4} parent=39 // pred_check
        %p1802 = pneg %p214
      $region50: #{_residual_block_impl.4} parent=39 // pred_check_branch
        %1804 = sbr.rel (%p1802) target = $region52
      $region51: #{_residual_block_impl.4} parent=39 // pred_region
        _
      $region52: #{_residual_block_impl.4} parent=39 // pred_fallthru
        _
    $region40: #{_residual_block_impl.4} parent=5 // pred_fallthru
      _
    %p1805 = scmp.le.s32.totalorder 2, %s14
    // Predicated region
    $region53: #{_residual_block_impl.4} parent=5 // pred_check
      %p1806 = pneg %p1805
    $region54: #{_residual_block_impl.4} parent=5 // pred_check_branch
      %1808 = sbr.rel (%p1806) target = $region56
    $region55: #{_residual_block_impl.4} parent=5 // pred_region
      %s1809 = ssub.s32 %s14, 2
      // Predicated region
      $region57: #{_residual_block_impl.4} parent=55 // pred_check
        %p1810 = pneg %p168
      $region58: #{_residual_block_impl.4} parent=55 // pred_check_branch
        %1812 = sbr.rel (%p1810) target = $region60
      $region59: #{_residual_block_impl.4} parent=55 // pred_region
        %s1813 = smul.u32 8, %s20
        %p1814 = scmp.lt.s32.totalorder %s1813, 15
        %s1815 = scalar_select %p1814, %s1813, 15
        %s1816 = smul.addr %s1815, 8
        %s1817 = scalar_lea.vmem %s5, %s1816
      $region60: #{_residual_block_impl.4} parent=55 // pred_fallthru
        _
      // Predicated region
      $region61: #{_residual_block_impl.4} parent=55 // pred_check
        %p1818 = pneg %p194
      $region62: #{_residual_block_impl.4} parent=55 // pred_check_branch
        %1820 = sbr.rel (%p1818) target = $region64
      $region63: #{_residual_block_impl.4} parent=55 // pred_region
        %p1821 = scmp.lt.s32.totalorder %s20, 1
        %s1822 = scalar_select %p1821, %s20, 1
        %s1823 = smul.addr %s1822, 8
        %s1824 = scalar_lea.vmem %s6, %s1823
      $region64: #{_residual_block_impl.4} parent=55 // pred_fallthru
        _
      // Predicated region
      $region65: #{_residual_block_impl.4} parent=55 // pred_check
        %p1825 = pneg %p220
      $region66: #{_residual_block_impl.4} parent=55 // pred_check_branch
        %1827 = sbr.rel (%p1825) target = $region68
      $region67: #{_residual_block_impl.4} parent=55 // pred_region
        %p1828 = scmp.lt.s32.totalorder %s20, 1
        %s1829 = scalar_select %p1828, %s20, 1
        %s1830 = smul.addr %s1829, 8
        %s1831 = scalar_lea.vmem %s7, %s1830
      $region68: #{_residual_block_impl.4} parent=55 // pred_fallthru
        _
    $region56: #{_residual_block_impl.4} parent=5 // pred_fallthru
      _
  $region6: #{_residual_block_impl.4} parent=0 // loop_footer
    %s18 = sadd.s32 1, %s14
  $region7: #{_residual_block_impl.4} parent=0 // loop_footer_branch
    %13 = sbr.rel target = $region3
  $region8: #{_residual_block_impl.4} parent=0 // loop_exit
    _

// kernel: _residual_block_impl.6
$region0: #{_residual_block_impl.6}
  #allocation0 [shape = 'u32[]', space=smem, size = 0x4, offset = 0x4, fixed_abs, tag = 'smem constant byte address 0x4 - core index']
  #allocation1 [shape = 'u32[144,128]{1,0:T(1,128)}', space=vmem, size = 0x12000, scoped, tag = 'internal scratch']
  %s0 = inlined_call_operand.vmem [shape: bf16[2,10,10,128], index: 0, kind: input, shape index: {}]
  %s1 = inlined_call_operand.vmem [shape: bf16[9,128,128], index: 1, kind: input, shape index: {}]
  %s2 = inlined_call_operand.vmem [shape: bf16[128,4], index: 2, kind: input, shape index: {}]
  %s3 = inlined_call_operand.vmem [shape: bf16[4,128], index: 3, kind: input, shape index: {}]
  %s4 = inlined_call_operand.vmem [shape: f32[128,128], index: 4, kind: output, shape index: {0}]
  %s5 = inlined_call_operand.vmem [shape: f32[16,128], index: 5, kind: output, shape index: {1}]
  %s6 = inlined_call_operand.vmem [shape: f32[16,128], index: 6, kind: output, shape index: {2}]
  %s7 = inlined_call_operand.vmem [shape: f32[128,128], index: 7, kind: output, shape index: {3}]
  %s8 = inlined_call_operand.vmem [shape: f32[16,128], index: 8, kind: output, shape index: {4}]
  %s9 = inlined_call_operand.vmem [shape: f32[16,128], index: 9, kind: output, shape index: {5}]
  %10 = xla_tuple %s4, %s5, %s6, %s7, %s8, %s9
  %s11 = sld [smem:[#allocation0]]
  $region89: #{_residual_block_impl.6} parent=0
    _
  %s13 = ssub.s32 1, %s11
  %s14 = scalar_select 0, %s13, %s11
  loop: start=0, step=1, limit=4
  $region2: #{_residual_block_impl.6} parent=0 // loop_pre_header
    _
  $region3: #{_residual_block_impl.6} parent=0 // loop_header
    %s16 = sphi 0, %s20
    %p17 = scmp.ge.s32.totalorder %s16, 4
    %s26 = sphi 0, %s28
    %s29 = sphi 0, %s26
    %s30 = sphi 0, %s29
    %s46 = sphi 0, %s30
    %s50 = sphi 0, %s50
    %s52 = sphi 0, %s50
    %s53 = sphi 0, %s52
    %s67 = sphi 0, %s53
    %s73 = sphi 0, %s75
    %s76 = sphi 0, %s73
    %s77 = sphi 0, %s76
    %s93 = sphi 0, %s77
    %s97 = sphi 0, %s97
    %s99 = sphi 0, %s97
    %s100 = sphi 0, %s99
    %s114 = sphi 0, %s100
    %s120 = sphi 0, %s122
    %s123 = sphi 0, %s120
    %s124 = sphi 0, %s123
    %s140 = sphi 0, %s124
    %s146 = sphi 0, %s148
    %s149 = sphi 0, %s146
    %s150 = sphi 0, %s149
    %s166 = sphi 0, %s150
    %s172 = sphi 0, %s174
    %s175 = sphi 0, %s172
    %s176 = sphi 0, %s175
    %s192 = sphi 0, %s176
    %s198 = sphi 0, %s200
    %s201 = sphi 0, %s198
    %s202 = sphi 0, %s201
    %s218 = sphi 0, %s202
    %s224 = sphi 0, %s226
    %s227 = sphi 0, %s224
    %s228 = sphi 0, %s227
    %s244 = sphi 0, %s228
    %s250 = sphi 0, %s252
    %s253 = sphi 0, %s250
    %s254 = sphi 0, %s253
    %s270 = sphi 0, %s254
  $region4: #{_residual_block_impl.6} parent=0 // loop_header_branch
    %19 = sbr.rel (%p17) target = $region8
  $region5: #{_residual_block_impl.6} parent=0 // loop_body
    %s21 = ssub.s32 %s16, 1
    %s22 = ssub.s32 %s16, 2
    %s23 = sadd.s32 %s16, 1
    %s24 = ssub.s32 %s16, %s23
    %p25 = scmp.eq.s32.totalorder %s24, 0
    %s27 = sadd.s32 %s26, 1
    %s28 = scalar_select %p25, %s26, %s27
    %p31 = pneg %p25
    %p32 = scmp.eq.s32.totalorder %s16, 1
    %p33 = por %p31, %p32
    %p34 = scmp.ne.s32.totalorder %s26, %s29
    %p35 = scmp.eq.s32.totalorder %s16, 0
    %p36 = por %p34, %p35
    %p37 = scmp.ne.s32.totalorder %s26, %s29
    %p38 = scmp.eq.s32.totalorder %s21, 1
    %p39 = por %p37, %p38
    %p40 = scmp.ne.s32.totalorder %s29, %s30
    %p41 = scmp.eq.s32.totalorder %s21, 0
    %p42 = por %p40, %p41
    %p43 = scmp.ne.s32.totalorder %s29, %s30
    %p44 = scmp.eq.s32.totalorder %s22, 1
    %p45 = por %p43, %p44
    %p47 = scmp.ne.s32.totalorder %s30, %s46
    %p48 = scmp.eq.s32.totalorder %s22, 0
    %p49 = por %p47, %p48
    %s51 = sadd.s32 %s50, 1
    %p54 = scmp.eq.s32.totalorder %s16, 1
    %p55 = scmp.ne.s32.totalorder %s50, %s52
    %p56 = scmp.eq.s32.totalorder %s16, 0
    %p57 = por %p55, %p56
    %p58 = scmp.ne.s32.totalorder %s50, %s52
    %p59 = scmp.eq.s32.totalorder %s21, 1
    %p60 = por %p58, %p59
    %p61 = scmp.ne.s32.totalorder %s52, %s53
    %p62 = scmp.eq.s32.totalorder %s21, 0
    %p63 = por %p61, %p62
    %p64 = scmp.ne.s32.totalorder %s52, %s53
    %p65 = scmp.eq.s32.totalorder %s22, 1
    %p66 = por %p64, %p65
    %p68 = scmp.ne.s32.totalorder %s53, %s67
    %p69 = scmp.eq.s32.totalorder %s22, 0
    %p70 = por %p68, %p69
    %s71 = ssub.s32 %s16, %s23
    %p72 = scmp.eq.s32.totalorder %s71, 0
    %s74 = sadd.s32 %s73, 1
    %s75 = scalar_select %p72, %s73, %s74
    %p78 = pneg %p72
    %p79 = scmp.eq.s32.totalorder %s16, 1
    %p80 = por %p78, %p79
    %p81 = scmp.ne.s32.totalorder %s73, %s76
    %p82 = scmp.eq.s32.totalorder %s16, 0
    %p83 = por %p81, %p82
    %p84 = scmp.ne.s32.totalorder %s73, %s76
    %p85 = scmp.eq.s32.totalorder %s21, 1
    %p86 = por %p84, %p85
    %p87 = scmp.ne.s32.totalorder %s76, %s77
    %p88 = scmp.eq.s32.totalorder %s21, 0
    %p89 = por %p87, %p88
    %p90 = scmp.ne.s32.totalorder %s76, %s77
    %p91 = scmp.eq.s32.totalorder %s22, 1
    %p92 = por %p90, %p91
    %p94 = scmp.ne.s32.totalorder %s77, %s93
    %p95 = scmp.eq.s32.totalorder %s22, 0
    %p96 = por %p94, %p95
    %s98 = sadd.s32 %s97, 1
    %p101 = scmp.eq.s32.totalorder %s16, 1
    %p102 = scmp.ne.s32.totalorder %s97, %s99
    %p103 = scmp.eq.s32.totalorder %s16, 0
    %p104 = por %p102, %p103
    %p105 = scmp.ne.s32.totalorder %s97, %s99
    %p106 = scmp.eq.s32.totalorder %s21, 1
    %p107 = por %p105, %p106
    %p108 = scmp.ne.s32.totalorder %s99, %s100
    %p109 = scmp.eq.s32.totalorder %s21, 0
    %p110 = por %p108, %p109
    %p111 = scmp.ne.s32.totalorder %s99, %s100
    %p112 = scmp.eq.s32.totalorder %s22, 1
    %p113 = por %p111, %p112
    %p115 = scmp.ne.s32.totalorder %s100, %s114
    %p116 = scmp.eq.s32.totalorder %s22, 0
    %p117 = por %p115, %p116
    %s118 = ssub.s32 %s16, %s23
    %p119 = scmp.eq.s32.totalorder %s118, 0
    %s121 = sadd.s32 %s120, 1
    %s122 = scalar_select %p119, %s120, %s121
    %p125 = pneg %p119
    %p126 = scmp.eq.s32.totalorder %s16, 1
    %p127 = por %p125, %p126
    %p128 = scmp.ne.s32.totalorder %s120, %s123
    %p129 = scmp.eq.s32.totalorder %s16, 0
    %p130 = por %p128, %p129
    %p131 = scmp.ne.s32.totalorder %s120, %s123
    %p132 = scmp.eq.s32.totalorder %s21, 1
    %p133 = por %p131, %p132
    %p134 = scmp.ne.s32.totalorder %s123, %s124
    %p135 = scmp.eq.s32.totalorder %s21, 0
    %p136 = por %p134, %p135
    %p137 = scmp.ne.s32.totalorder %s123, %s124
    %p138 = scmp.eq.s32.totalorder %s22, 1
    %p139 = por %p137, %p138
    %p141 = scmp.ne.s32.totalorder %s124, %s140
    %p142 = scmp.eq.s32.totalorder %s22, 0
    %p143 = por %p141, %p142
    %s144 = ssub.s32 %s16, %s23
    %p145 = scmp.eq.s32.totalorder %s144, 0
    %s147 = sadd.s32 %s146, 1
    %s148 = scalar_select %p145, %s146, %s147
    %p151 = pneg %p145
    %p152 = scmp.eq.s32.totalorder %s16, 1
    %p153 = por %p151, %p152
    %p154 = scmp.ne.s32.totalorder %s146, %s149
    %p155 = scmp.eq.s32.totalorder %s16, 0
    %p156 = por %p154, %p155
    %p157 = scmp.ne.s32.totalorder %s146, %s149
    %p158 = scmp.eq.s32.totalorder %s21, 1
    %p159 = por %p157, %p158
    %p160 = scmp.ne.s32.totalorder %s149, %s150
    %p161 = scmp.eq.s32.totalorder %s21, 0
    %p162 = por %p160, %p161
    %p163 = scmp.ne.s32.totalorder %s149, %s150
    %p164 = scmp.eq.s32.totalorder %s22, 1
    %p165 = por %p163, %p164
    %p167 = scmp.ne.s32.totalorder %s150, %s166
    %p168 = scmp.eq.s32.totalorder %s22, 0
    %p169 = por %p167, %p168
    %s170 = ssub.s32 %s16, %s23
    %p171 = scmp.eq.s32.totalorder %s170, 0
    %s173 = sadd.s32 %s172, 1
    %s174 = scalar_select %p171, %s172, %s173
    %p177 = pneg %p171
    %p178 = scmp.eq.s32.totalorder %s16, 1
    %p179 = por %p177, %p178
    %p180 = scmp.ne.s32.totalorder %s172, %s175
    %p181 = scmp.eq.s32.totalorder %s16, 0
    %p182 = por %p180, %p181
    %p183 = scmp.ne.s32.totalorder %s172, %s175
    %p184 = scmp.eq.s32.totalorder %s21, 1
    %p185 = por %p183, %p184
    %p186 = scmp.ne.s32.totalorder %s175, %s176
    %p187 = scmp.eq.s32.totalorder %s21, 0
    %p188 = por %p186, %p187
    %p189 = scmp.ne.s32.totalorder %s175, %s176
    %p190 = scmp.eq.s32.totalorder %s22, 1
    %p191 = por %p189, %p190
    %p193 = scmp.ne.s32.totalorder %s176, %s192
    %p194 = scmp.eq.s32.totalorder %s22, 0
    %p195 = por %p193, %p194
    %s196 = ssub.s32 %s16, %s23
    %p197 = scmp.eq.s32.totalorder %s196, 0
    %s199 = sadd.s32 %s198, 1
    %s200 = scalar_select %p197, %s198, %s199
    %p203 = pneg %p197
    %p204 = scmp.eq.s32.totalorder %s16, 1
    %p205 = por %p203, %p204
    %p206 = scmp.ne.s32.totalorder %s198, %s201
    %p207 = scmp.eq.s32.totalorder %s16, 0
    %p208 = por %p206, %p207
    %p209 = scmp.ne.s32.totalorder %s198, %s201
    %p210 = scmp.eq.s32.totalorder %s21, 1
    %p211 = por %p209, %p210
    %p212 = scmp.ne.s32.totalorder %s201, %s202
    %p213 = scmp.eq.s32.totalorder %s21, 0
    %p214 = por %p212, %p213
    %p215 = scmp.ne.s32.totalorder %s201, %s202
    %p216 = scmp.eq.s32.totalorder %s22, 1
    %p217 = por %p215, %p216
    %p219 = scmp.ne.s32.totalorder %s202, %s218
    %p220 = scmp.eq.s32.totalorder %s22, 0
    %p221 = por %p219, %p220
    %s222 = ssub.s32 %s16, %s23
    %p223 = scmp.eq.s32.totalorder %s222, 0
    %s225 = sadd.s32 %s224, 1
    %s226 = scalar_select %p223, %s224, %s225
    %p229 = pneg %p223
    %p230 = scmp.eq.s32.totalorder %s16, 1
    %p231 = por %p229, %p230
    %p232 = scmp.ne.s32.totalorder %s224, %s227
    %p233 = scmp.eq.s32.totalorder %s16, 0
    %p234 = por %p232, %p233
    %p235 = scmp.ne.s32.totalorder %s224, %s227
    %p236 = scmp.eq.s32.totalorder %s21, 1
    %p237 = por %p235, %p236
    %p238 = scmp.ne.s32.totalorder %s227, %s228
    %p239 = scmp.eq.s32.totalorder %s21, 0
    %p240 = por %p238, %p239
    %p241 = scmp.ne.s32.totalorder %s227, %s228
    %p242 = scmp.eq.s32.totalorder %s22, 1
    %p243 = por %p241, %p242
    %p245 = scmp.ne.s32.totalorder %s228, %s244
    %p246 = scmp.eq.s32.totalorder %s22, 0
    %p247 = por %p245, %p246
    %s248 = ssub.s32 %s16, %s23
    %p249 = scmp.eq.s32.totalorder %s248, 0
    %s251 = sadd.s32 %s250, 1
    %s252 = scalar_select %p249, %s250, %s251
    %p255 = pneg %p249
    %p256 = scmp.eq.s32.totalorder %s16, 1
    %p257 = por %p255, %p256
    %p258 = scmp.ne.s32.totalorder %s250, %s253
    %p259 = scmp.eq.s32.totalorder %s16, 0
    %p260 = por %p258, %p259
    %p261 = scmp.ne.s32.totalorder %s250, %s253
    %p262 = scmp.eq.s32.totalorder %s21, 1
    %p263 = por %p261, %p262
    %p264 = scmp.ne.s32.totalorder %s253, %s254
    %p265 = scmp.eq.s32.totalorder %s21, 0
    %p266 = por %p264, %p265
    %p267 = scmp.ne.s32.totalorder %s253, %s254
    %p268 = scmp.eq.s32.totalorder %s22, 1
    %p269 = por %p267, %p268
    %p271 = scmp.ne.s32.totalorder %s254, %s270
    %p272 = scmp.eq.s32.totalorder %s22, 0
    %p273 = por %p271, %p272
    %p274 = scmp.le.s32.totalorder 1, %s16
    %p275 = scmp.lt.s32.totalorder %s16, 3
    %p276 = pnand %p274, %p275
    %p277 = pneg %p276
    // Predicated region
    $region9: #{_residual_block_impl.6} parent=5 // pred_check
      _
    $region10: #{_residual_block_impl.6} parent=5 // pred_check_branch
      %279 = sbr.rel (%p276) target = $region12
    $region11: #{_residual_block_impl.6} parent=5 // pred_region
      %s280 = ssub.s32 %s16, 1
      // Predicated region
      $region13: #{_residual_block_impl.6} parent=11 // pred_check
        %p281 = pneg %p63
      $region14: #{_residual_block_impl.6} parent=11 // pred_check_branch
        %283 = sbr.rel (%p281) target = $region16
      $region15: #{_residual_block_impl.6} parent=11 // pred_region
        _
      $region16: #{_residual_block_impl.6} parent=11 // pred_fallthru
        _
      // Predicated region
      $region17: #{_residual_block_impl.6} parent=11 // pred_check
        %p284 = pneg %p110
      $region18: #{_residual_block_impl.6} parent=11 // pred_check_branch
        %286 = sbr.rel (%p284) target = $region20
      $region19: #{_residual_block_impl.6} parent=11 // pred_region
        _
      $region20: #{_residual_block_impl.6} parent=11 // pred_fallthru
        _
    $region12: #{_residual_block_impl.6} parent=5 // pred_fallthru
      _
    %p287 = scmp.lt.s32.totalorder %s16, 2
    // Predicated region
    $region21: #{_residual_block_impl.6} parent=5 // pred_check
      %p288 = pneg %p287
    $region22: #{_residual_block_impl.6} parent=5 // pred_check_branch
      %290 = sbr.rel (%p288) target = $region24
    $region23: #{_residual_block_impl.6} parent=5 // pred_region
      // Predicated region
      $region25: #{_residual_block_impl.6} parent=23 // pred_check
        %p291 = pneg %p36
      $region26: #{_residual_block_impl.6} parent=23 // pred_check_branch
        %293 = sbr.rel (%p291) target = $region28
      $region27: #{_residual_block_impl.6} parent=23 // pred_region
        %p294 = scmp.lt.s32.totalorder %s16, 1
        %s295 = scalar_select %p294, %s16, 1
        %s296 = smul.addr %s295, 20
        %s297 = smul.addr %s296, 4
        %s298 = scalar_lea.vmem %s0, %s297
      $region28: #{_residual_block_impl.6} parent=23 // pred_fallthru
        _
      // Predicated region
      $region29: #{_residual_block_impl.6} parent=23 // pred_check
        %p299 = pneg %p83
      $region30: #{_residual_block_impl.6} parent=23 // pred_check_branch
        %301 = sbr.rel (%p299) target = $region32
      $region31: #{_residual_block_impl.6} parent=23 // pred_region
        %s302 = smul.u32 8, %s16
        %p303 = scmp.lt.s32.totalorder %s302, 15
        %s304 = scalar_select %p303, %s302, 15
        %s305 = smul.addr %s304, 4
        %s306 = scalar_lea.vmem %s2, %s305
        %s307 = smul.u32 8, %s16
      $region32: #{_residual_block_impl.6} parent=23 // pred_fallthru
        _
    $region24: #{_residual_block_impl.6} parent=5 // pred_fallthru
      _
    %p308 = scmp.le.s32.totalorder 1, %s16
    %p309 = scmp.lt.s32.totalorder %s16, 3
    %p310 = pnand %p308, %p309
    %p311 = pneg %p310
    // Predicated region
    $region33: #{_residual_block_impl.6} parent=5 // pred_check
      _
    $region34: #{_residual_block_impl.6} parent=5 // pred_check_branch
      %313 = sbr.rel (%p310) target = $region36
    $region35: #{_residual_block_impl.6} parent=5 // pred_region
      %s314 = ssub.s32 %s16, 1
      %p315 = scmp.lt.s32.totalorder %s21, 1
      %s316 = scalar_select %p315, %s21, 1
      %s317 = smul.addr %s316, 20
      %s318 = smul.addr %s317, 4
      %s319 = scalar_lea.vmem %s0, %s318
      %p320 = pneg %p42
      %p321 = pneg %p39
      %p322 = pneg %p63
      %p323 = pneg %p60
      %s324 = smul.u32 8, %s21
      %p325 = scmp.lt.s32.totalorder %s324, 15
      %s326 = scalar_select %p325, %s324, 15
      %s327 = smul.addr %s326, 4
      %s328 = scalar_lea.vmem %s2, %s327
      %p329 = pneg %p89
      %p330 = pneg %p86
      %p331 = pneg %p110
      %p332 = pneg %p107
      %p333 = pneg %p136
      %p334 = pneg %p133
      %s335 = smul.u32 8, %s21
      %p336 = scmp.lt.s32.totalorder %s335, 15
      %s337 = scalar_select %p336, %s335, 15
      %s338 = smul.addr %s337, 8
      %s339 = scalar_lea.vmem %s4, %s338
      %p340 = pneg %p162
      %p341 = pneg %p159
      %p342 = scmp.lt.s32.totalorder %s21, 1
      %s343 = scalar_select %p342, %s21, 1
      %s344 = smul.addr %s343, 8
      %s345 = scalar_lea.vmem %s5, %s344
      %p346 = pneg %p188
      %p347 = pneg %p185
      %p348 = scmp.lt.s32.totalorder %s21, 1
      %s349 = scalar_select %p348, %s21, 1
      %s350 = smul.addr %s349, 8
      %s351 = scalar_lea.vmem %s6, %s350
      %p352 = pneg %p214
      %p353 = pneg %p211
      %s354 = smul.u32 8, %s21
      %p355 = scmp.lt.s32.totalorder %s354, 15
      %s356 = scalar_select %p355, %s354, 15
      %s357 = smul.addr %s356, 8
      %s358 = scalar_lea.vmem %s7, %s357
      %p359 = pneg %p240
      %p360 = pneg %p237
      %p361 = scmp.lt.s32.totalorder %s21, 1
      %s362 = scalar_select %p361, %s21, 1
      %s363 = smul.addr %s362, 8
      %s364 = scalar_lea.vmem %s8, %s363
      %p365 = pneg %p266
      %p366 = pneg %p263
      %p367 = scmp.lt.s32.totalorder %s21, 1
      %s368 = scalar_select %p367, %s21, 1
      %s369 = smul.addr %s368, 8
      %s370 = scalar_lea.vmem %s9, %s369
      %p371 = scmp.lt.s32.totalorder %s21, 1
      %s372 = scalar_select %p371, %s21, 1
      %s373 = smul.addr %s372, 20
      %s374 = smul.addr %s373, 4
      %s375 = scalar_lea.vmem %s0, %s374
      %s376 = smul.u32 8, %s21
      %p377 = scmp.lt.s32.totalorder %s376, 15
      %s378 = scalar_select %p377, %s376, 15
      %s379 = smul.addr %s378, 4
      %s380 = scalar_lea.vmem %s2, %s379
      %s381 = smul.u32 8, %s21
      %s382 = smul.u32 8, %s21
      %p383 = scmp.lt.s32.totalorder %s382, 15
      %s384 = scalar_select %p383, %s382, 15
      %s385 = smul.addr %s384, 8
      %s386 = scalar_lea.vmem %s4, %s385
      %s387 = smul.u32 8, %s21
      %p388 = scmp.lt.s32.totalorder %s21, 1
      %s389 = scalar_select %p388, %s21, 1
      %s390 = smul.addr %s389, 8
      %s391 = scalar_lea.vmem %s5, %s390
      %p392 = scmp.lt.s32.totalorder %s21, 1
      %s393 = scalar_select %p392, %s21, 1
      %s394 = smul.addr %s393, 8
      %s395 = scalar_lea.vmem %s6, %s394
      %s396 = smul.u32 8, %s21
      %p397 = scmp.lt.s32.totalorder %s396, 15
      %s398 = scalar_select %p397, %s396, 15
      %s399 = smul.addr %s398, 8
      %s400 = scalar_lea.vmem %s7, %s399
      %s401 = smul.u32 8, %s21
      %p402 = scmp.lt.s32.totalorder %s21, 1
      %s403 = scalar_select %p402, %s21, 1
      %s404 = smul.addr %s403, 8
      %s405 = scalar_lea.vmem %s8, %s404
      %p406 = scmp.lt.s32.totalorder %s21, 1
      %s407 = scalar_select %p406, %s21, 1
      %s408 = smul.addr %s407, 8
      %s409 = scalar_lea.vmem %s9, %s408
      %v411 = vld [vmem:[%s375] sm:$0xf]
      %v412 = vld [vmem:[%s375 + $0x8] sm:$0xf]
      %v413 = vld [vmem:[%s375 + $0x10] sm:$0xf]
      %v414 = vld [vmem:[%s375 + $0x18] sm:$0xf]
      %v415 = vld [vmem:[%s375 + $0x20] sm:$0xf]
      %v416 = vld [vmem:[%s375 + $0x28] sm:$0xf]
      %v417 = vld [vmem:[%s375 + $0x30] sm:$0xf]
      %v418 = vld [vmem:[%s375 + $0x38] sm:$0xf]
      %v419 = vld [vmem:[%s1] sm:$0xf]
      %v420 = vld [vmem:[%s1 + $0x4] sm:$0xf]
      %v421 = vld [vmem:[%s1 + $0x8] sm:$0xf]
      %v422 = vld [vmem:[%s1 + $0xc] sm:$0xf]
      %v423 = vld [vmem:[%s1 + $0x10] sm:$0xf]
      %v424 = vld [vmem:[%s1 + $0x14] sm:$0xf]
      %v425 = vld [vmem:[%s1 + $0x18] sm:$0xf]
      %v426 = vld [vmem:[%s1 + $0x1c] sm:$0xf]
      %v427 = vld [vmem:[%s1 + $0x20] sm:$0xf]
      %v428 = vld [vmem:[%s1 + $0x24] sm:$0xf]
      %v429 = vld [vmem:[%s1 + $0x28] sm:$0xf]
      %v430 = vld [vmem:[%s1 + $0x2c] sm:$0xf]
      %v431 = vld [vmem:[%s1 + $0x30] sm:$0xf]
      %v432 = vld [vmem:[%s1 + $0x34] sm:$0xf]
      %v433 = vld [vmem:[%s1 + $0x38] sm:$0xf]
      %v434 = vld [vmem:[%s1 + $0x3c] sm:$0xf]
      %v435 = vld [vmem:[%s375 + $0x4] sm:$0x1]
      %v436 = vld [vmem:[%s375 + $0xc] sm:$0x1]
      %v437 = vld [vmem:[%s375 + $0x14] sm:$0x1]
      %v438 = vld [vmem:[%s375 + $0x1c] sm:$0x1]
      %v439 = vld [vmem:[%s375 + $0x24] sm:$0x1]
      %v440 = vld [vmem:[%s375 + $0x2c] sm:$0x1]
      %v441 = vld [vmem:[%s375 + $0x34] sm:$0x1]
      %v442 = vld [vmem:[%s375 + $0x3c] sm:$0x1]
      %vm443 = vsmask.f32 3328
      %vm444 = vsmask.f32 7440
      %vm445 = vmor %vm443, %vm444
      %v447 = vshrl.u32 %v411, 16
      %v449 = vrot.slane %v447, 4
      %v450 = vshll.u32 %v411, 16
      %v452 = vrot.slane %v450, 5
      %v453 = vor.u32 %v449, %v452
      %v454 = vrot.slane %v453, 4
      %v456 = vshll.u32 %v435, 16
      %v458 = vrot.slane %v456, 5
      %v459 = vsel %vm445, %v454, %v458
      %v461 = vshrl.u32 %v412, 16
      %v463 = vrot.slane %v461, 4
      %v464 = vshll.u32 %v412, 16
      %v466 = vrot.slane %v464, 5
      %v467 = vor.u32 %v463, %v466
      %v468 = vrot.slane %v467, 4
      %v470 = vshll.u32 %v436, 16
      %v472 = vrot.slane %v470, 5
      %v473 = vsel %vm445, %v468, %v472
      %v475 = vshrl.u32 %v413, 16
      %v477 = vrot.slane %v475, 4
      %v478 = vshll.u32 %v413, 16
      %v480 = vrot.slane %v478, 5
      %v481 = vor.u32 %v477, %v480
      %v482 = vrot.slane %v481, 4
      %v484 = vshll.u32 %v437, 16
      %v486 = vrot.slane %v484, 5
      %v487 = vsel %vm445, %v482, %v486
      %v489 = vshrl.u32 %v414, 16
      %v491 = vrot.slane %v489, 4
      %v492 = vshll.u32 %v414, 16
      %v494 = vrot.slane %v492, 5
      %v495 = vor.u32 %v491, %v494
      %v496 = vrot.slane %v495, 4
      %v498 = vshll.u32 %v438, 16
      %v500 = vrot.slane %v498, 5
      %v501 = vsel %vm445, %v496, %v500
      %v503 = vshrl.u32 %v415, 16
      %v505 = vrot.slane %v503, 4
      %v506 = vshll.u32 %v415, 16
      %v508 = vrot.slane %v506, 5
      %v509 = vor.u32 %v505, %v508
      %v510 = vrot.slane %v509, 4
      %v512 = vshll.u32 %v439, 16
      %v514 = vrot.slane %v512, 5
      %v515 = vsel %vm445, %v510, %v514
      %v517 = vshrl.u32 %v416, 16
      %v519 = vrot.slane %v517, 4
      %v520 = vshll.u32 %v416, 16
      %v522 = vrot.slane %v520, 5
      %v523 = vor.u32 %v519, %v522
      %v524 = vrot.slane %v523, 4
      %v526 = vshll.u32 %v440, 16
      %v528 = vrot.slane %v526, 5
      %v529 = vsel %vm445, %v524, %v528
      %v531 = vshrl.u32 %v417, 16
      %v533 = vrot.slane %v531, 4
      %v534 = vshll.u32 %v417, 16
      %v536 = vrot.slane %v534, 5
      %v537 = vor.u32 %v533, %v536
      %v538 = vrot.slane %v537, 4
      %v540 = vshll.u32 %v441, 16
      %v542 = vrot.slane %v540, 5
      %v543 = vsel %vm445, %v538, %v542
      %v545 = vshrl.u32 %v418, 16
      %v547 = vrot.slane %v545, 4
      %v548 = vshll.u32 %v418, 16
      %v550 = vrot.slane %v548, 5
      %v551 = vor.u32 %v547, %v550
      %v552 = vrot.slane %v551, 4
      %v554 = vshll.u32 %v442, 16
      %v556 = vrot.slane %v554, 5
      %v557 = vsel %vm445, %v552, %v556
      %s558 = scalar_lea.vmem %s1, 64
      %v559 = vld [vmem:[%s558] sm:$0xf]
      %v560 = vld [vmem:[%s558 + $0x4] sm:$0xf]
      %v561 = vld [vmem:[%s558 + $0x8] sm:$0xf]
      %v562 = vld [vmem:[%s558 + $0xc] sm:$0xf]
      %v563 = vld [vmem:[%s558 + $0x10] sm:$0xf]
      %v564 = vld [vmem:[%s558 + $0x14] sm:$0xf]
      %v565 = vld [vmem:[%s558 + $0x18] sm:$0xf]
      %v566 = vld [vmem:[%s558 + $0x1c] sm:$0xf]
      %v567 = vld [vmem:[%s558 + $0x20] sm:$0xf]
      %v568 = vld [vmem:[%s558 + $0x24] sm:$0xf]
      %v569 = vld [vmem:[%s558 + $0x28] sm:$0xf]
      %v570 = vld [vmem:[%s558 + $0x2c] sm:$0xf]
      %v571 = vld [vmem:[%s558 + $0x30] sm:$0xf]
      %v572 = vld [vmem:[%s558 + $0x34] sm:$0xf]
      %v573 = vld [vmem:[%s558 + $0x38] sm:$0xf]
      %v574 = vld [vmem:[%s558 + $0x3c] sm:$0xf]
      %v575 = vunpack.c.l.b16 %v459
      %v576 = vunpack.c.l.b16 %v473
      %v577 = vunpack.c.l.b16 %v487
      %v578 = vunpack.c.l.b16 %v501
      %v579 = vunpack.c.l.b16 %v515
      %v580 = vunpack.c.l.b16 %v529
      %v581 = vunpack.c.l.b16 %v543
      %v582 = vunpack.c.l.b16 %v557
      %v583 = vpack.c.b16 %v576, %v575
      %v584 = vpack.c.b16 %v578, %v577
      %v585 = vpack.c.b16 %v580, %v579
      %v586 = vpack.c.b16 %v582, %v581
      %v607 = vunpack.c.l.b16 %v559
      %v608 = vunpack.c.l.b16 %v560
      %v609 = vunpack.c.l.b16 %v561
      %v610 = vunpack.c.l.b16 %v562
      %v611 = vunpack.c.l.b16 %v563
      %v612 = vunpack.c.l.b16 %v564
      %v613 = vunpack.c.l.b16 %v565
      %v614 = vunpack.c.l.b16 %v566
      %v615 = vunpack.c.l.b16 %v567
      %v616 = vunpack.c.l.b16 %v568
      %v617 = vunpack.c.l.b16 %v569
      %v618 = vunpack.c.l.b16 %v570
      %v619 = vunpack.c.l.b16 %v571
      %v620 = vunpack.c.l.b16 %v572
      %v621 = vunpack.c.l.b16 %v573
      %v622 = vunpack.c.l.b16 %v574
      %v623 = vpack.c.b16 %v608, %v607
      %v624 = vpack.c.b16 %v610, %v609
      %v625 = vpack.c.b16 %v612, %v611
      %v626 = vpack.c.b16 %v614, %v613
      %v627 = vpack.c.b16 %v616, %v615
      %v628 = vpack.c.b16 %v618, %v617
      %v629 = vpack.c.b16 %v620, %v619
      %v630 = vpack.c.b16 %v622, %v621
      %639 = vmatprep.subr.bf16.mxu0 0
      %640 = vmatpush1.bf16.msra.mxu0 %v630
      %641 = vmatprep.subr.bf16.mxu0 0
      %642 = vmatpush1.bf16.msra.mxu0 %v629
      %643 = vmatprep.subr.bf16.mxu0 0
      %644 = vmatpush1.bf16.msra.mxu0 %v628
      %645 = vmatprep.subr.bf16.mxu0 0
      %646 = vmatpush1.bf16.msra.mxu0 %v627
      %647 = vmatprep.subr.bf16.mxu0 0
      %648 = vmatpush1.bf16.msra.mxu0 %v626
      %649 = vmatprep.subr.bf16.mxu0 0
      %650 = vmatpush1.bf16.msra.mxu0 %v625
      %651 = vmatprep.subr.bf16.mxu0 0
      %652 = vmatpush1.bf16.msra.mxu0 %v624
      %653 = vmatprep.subr.bf16.mxu0 0
      %654 = vmatpush1.bf16.msra.mxu0 %v623
      %655 = vmatprep.subr.bf16.mxu0 0
      %656 = vmatpush2.bf16.msra.mxu0 0
      %657 = vmatprep.subr.bf16.mxu0 0
      %658 = vmatpush2.bf16.msra.mxu0 0
      %659 = vmatprep.subr.bf16.mxu0 0
      %660 = vmatpush2.bf16.msra.mxu0 0
      %661 = vmatprep.subr.bf16.mxu0 0
      %662 = vmatpush2.bf16.msra.mxu0 0
      %663 = vmatprep.subr.bf16.mxu0 0
      %664 = vmatpush2.bf16.msra.mxu0 0
      %665 = vmatprep.subr.bf16.mxu0 0
      %666 = vmatpush2.bf16.msra.mxu0 0
      %667 = vmatprep.subr.bf16.mxu0 0
      %668 = vmatpush2.bf16.msra.mxu0 0
      %669 = vmatprep.subr.bf16.mxu0 0
      %670 = vmatpush2.bf16.msra.mxu0 0
      %671 = vmatprep.mubr.bf16.mxu0 0
      %672 = vmatmul.mubr.bf16.gmra.mxu0 %v583
      %v673 = vpop.f32.mrf.mxu0
      %v674 = vadd.f32 0.0, %v673
      %v675 = vpop.f32.mrf.mxu0
      %v676 = vpop.f32.mrf.mxu0
      %v677 = vadd.f32 0.0, %v676
      %v678 = vpop.f32.mrf.mxu0
      %679 = vmatprep.mubr.bf16.mxu0 0
      %680 = vmatmul.mubr.bf16.gmra.mxu0 %v584
      %v681 = vpop.f32.mrf.mxu0
      %v682 = vadd.f32 0.0, %v681
      %v683 = vpop.f32.mrf.mxu0
      %v684 = vpop.f32.mrf.mxu0
      %v685 = vadd.f32 0.0, %v684
      %v686 = vpop.f32.mrf.mxu0
      %687 = vmatprep.mubr.bf16.mxu0 0
      %688 = vmatmul.mubr.bf16.gmra.mxu0 %v585
      %v689 = vpop.f32.mrf.mxu0
      %v690 = vadd.f32 0.0, %v689
      %v691 = vpop.f32.mrf.mxu0
      %v692 = vpop.f32.mrf.mxu0
      %v693 = vadd.f32 0.0, %v692
      %v694 = vpop.f32.mrf.mxu0
      %695 = vmatprep.mubr.bf16.mxu0 0
      %696 = vmatmul.mubr.bf16.gmra.mxu0 %v586
      %v697 = vpop.f32.mrf.mxu0
      %v698 = vadd.f32 0.0, %v697
      %v699 = vpop.f32.mrf.mxu0
      %v700 = vpop.f32.mrf.mxu0
      %v701 = vadd.f32 0.0, %v700
      %v702 = vpop.f32.mrf.mxu0
      %703 = vdwg.mxu0
      %v712 = vunpack.c.l.b16 %v411
      %v713 = vunpack.c.l.b16 %v412
      %v714 = vunpack.c.l.b16 %v413
      %v715 = vunpack.c.l.b16 %v414
      %v716 = vunpack.c.l.b16 %v415
      %v717 = vunpack.c.l.b16 %v416
      %v718 = vunpack.c.l.b16 %v417
      %v719 = vunpack.c.l.b16 %v418
      %v720 = vpack.c.b16 %v713, %v712
      %v721 = vpack.c.b16 %v715, %v714
      %v722 = vpack.c.b16 %v717, %v716
      %v723 = vpack.c.b16 %v719, %v718
      %v744 = vunpack.c.l.b16 %v419
      %v745 = vunpack.c.l.b16 %v420
      %v746 = vunpack.c.l.b16 %v421
      %v747 = vunpack.c.l.b16 %v422
      %v748 = vunpack.c.l.b16 %v423
      %v749 = vunpack.c.l.b16 %v424
      %v750 = vunpack.c.l.b16 %v425
      %v751 = vunpack.c.l.b16 %v426
      %v752 = vunpack.c.l.b16 %v427
      %v753 = vunpack.c.l.b16 %v428
      %v754 = vunpack.c.l.b16 %v429
      %v755 = vunpack.c.l.b16 %v430
      %v756 = vunpack.c.l.b16 %v431
      %v757 = vunpack.c.l.b16 %v432
      %v758 = vunpack.c.l.b16 %v433
      %v759 = vunpack.c.l.b16 %v434
      %v760 = vpack.c.b16 %v745, %v744
      %v761 = vpack.c.b16 %v747, %v746
      %v762 = vpack.c.b16 %v749, %v748
      %v763 = vpack.c.b16 %v751, %v750
      %v764 = vpack.c.b16 %v753, %v752
      %v765 = vpack.c.b16 %v755, %v754
      %v766 = vpack.c.b16 %v757, %v756
      %v767 = vpack.c.b16 %v759, %v758
      %776 = vmatprep.subr.bf16.mxu0 0
      %777 = vmatpush1.bf16.msra.mxu0 %v767
      %778 = vmatprep.subr.bf16.mxu0 0
      %779 = vmatpush1.bf16.msra.mxu0 %v766
      %780 = vmatprep.subr.bf16.mxu0 0
      %781 = vmatpush1.bf16.msra.mxu0 %v765
      %782 = vmatprep.subr.bf16.mxu0 0
      %783 = vmatpush1.bf16.msra.mxu0 %v764
      %784 = vmatprep.subr.bf16.mxu0 0
      %785 = vmatpush1.bf16.msra.mxu0 %v763
      %786 = vmatprep.subr.bf16.mxu0 0
      %787 = vmatpush1.bf16.msra.mxu0 %v762
      %788 = vmatprep.subr.bf16.mxu0 0
      %789 = vmatpush1.bf16.msra.mxu0 %v761
      %790 = vmatprep.subr.bf16.mxu0 0
      %791 = vmatpush1.bf16.msra.mxu0 %v760
      %792 = vmatprep.subr.bf16.mxu0 0
      %793 = vmatpush2.bf16.msra.mxu0 0
      %794 = vmatprep.subr.bf16.mxu0 0
      %795 = vmatpush2.bf16.msra.mxu0 0
      %796 = vmatprep.subr.bf16.mxu0 0
      %797 = vmatpush2.bf16.msra.mxu0 0
      %798 = vmatprep.subr.bf16.mxu0 0
      %799 = vmatpush2.bf16.msra.mxu0 0
      %800 = vmatprep.subr.bf16.mxu0 0
      %801 = vmatpush2.bf16.msra.mxu0 0
      %802 = vmatprep.subr.bf16.mxu0 0
      %803 = vmatpush2.bf16.msra.mxu0 0
      %804 = vmatprep.subr.bf16.mxu0 0
      %805 = vmatpush2.bf16.msra.mxu0 0
      %806 = vmatprep.subr.bf16.mxu0 0
      %807 = vmatpush2.bf16.msra.mxu0 0
      %808 = vmatprep.mubr.bf16.mxu0 0
      %809 = vmatmul.mubr.bf16.gmra.mxu0 %v720
      %v810 = vpop.f32.mrf.mxu0
      %v811 = vadd.f32 %v674, %v810
      %v812 = vpop.f32.mrf.mxu0
      %v813 = vpop.f32.mrf.mxu0
      %v814 = vadd.f32 %v677, %v813
      %v815 = vpop.f32.mrf.mxu0
      %816 = vmatprep.mubr.bf16.mxu0 0
      %817 = vmatmul.mubr.bf16.gmra.mxu0 %v721
      %v818 = vpop.f32.mrf.mxu0
      %v819 = vadd.f32 %v682, %v818
      %v820 = vpop.f32.mrf.mxu0
      %v821 = vpop.f32.mrf.mxu0
      %v822 = vadd.f32 %v685, %v821
      %v823 = vpop.f32.mrf.mxu0
      %824 = vmatprep.mubr.bf16.mxu0 0
      %825 = vmatmul.mubr.bf16.gmra.mxu0 %v722
      %v826 = vpop.f32.mrf.mxu0
      %v827 = vadd.f32 %v690, %v826
      %v828 = vpop.f32.mrf.mxu0
      %v829 = vpop.f32.mrf.mxu0
      %v830 = vadd.f32 %v693, %v829
      %v831 = vpop.f32.mrf.mxu0
      %832 = vmatprep.mubr.bf16.mxu0 0
      %833 = vmatmul.mubr.bf16.gmra.mxu0 %v723
      %v834 = vpop.f32.mrf.mxu0
      %v835 = vadd.f32 %v698, %v834
      %v836 = vpop.f32.mrf.mxu0
      %v837 = vpop.f32.mrf.mxu0
      %v838 = vadd.f32 %v701, %v837
      %v839 = vpop.f32.mrf.mxu0
      %840 = vdwg.mxu0
      %v841 = vld [vmem:[%s375] sm:$0xe]
      %v842 = vld [vmem:[%s375 + $0x8] sm:$0xe]
      %v843 = vld [vmem:[%s375 + $0x10] sm:$0xe]
      %v844 = vld [vmem:[%s375 + $0x18] sm:$0xe]
      %v845 = vld [vmem:[%s375 + $0x20] sm:$0xe]
      %v846 = vld [vmem:[%s375 + $0x28] sm:$0xe]
      %v847 = vld [vmem:[%s375 + $0x30] sm:$0xe]
      %v848 = vld [vmem:[%s375 + $0x38] sm:$0xe]
      %vm865 = vcmask 1042432
      %vm866 = vcmask 1046532
      %vm867 = vmor %vm865, %vm866
      %v868 = vrot.slane %v841, 5
      %v869 = vrot.slane %v868, 4
      %v870 = vrot.slane %v435, 5
      %v871 = vsel %vm867, %v869, %v870
      %v872 = vrot.slane %v842, 5
      %v873 = vrot.slane %v872, 4
      %v874 = vrot.slane %v436, 5
      %v875 = vsel %vm867, %v873, %v874
      %v876 = vrot.slane %v843, 5
      %v877 = vrot.slane %v876, 4
      %v878 = vrot.slane %v437, 5
      %v879 = vsel %vm867, %v877, %v878
      %v880 = vrot.slane %v844, 5
      %v881 = vrot.slane %v880, 4
      %v882 = vrot.slane %v438, 5
      %v883 = vsel %vm867, %v881, %v882
      %v884 = vrot.slane %v845, 5
      %v885 = vrot.slane %v884, 4
      %v886 = vrot.slane %v439, 5
      %v887 = vsel %vm867, %v885, %v886
      %v888 = vrot.slane %v846, 5
      %v889 = vrot.slane %v888, 4
      %v890 = vrot.slane %v440, 5
      %v891 = vsel %vm867, %v889, %v890
      %v892 = vrot.slane %v847, 5
      %v893 = vrot.slane %v892, 4
      %v894 = vrot.slane %v441, 5
      %v895 = vsel %vm867, %v893, %v894
      %v896 = vrot.slane %v848, 5
      %v897 = vrot.slane %v896, 4
      %v898 = vrot.slane %v442, 5
      %v899 = vsel %vm867, %v897, %v898
      %s900 = scalar_lea.vmem %s1, 128
      %v901 = vld [vmem:[%s900] sm:$0xf]
      %v902 = vld [vmem:[%s900 + $0x4] sm:$0xf]
      %v903 = vld [vmem:[%s900 + $0x8] sm:$0xf]
      %v904 = vld [vmem:[%s900 + $0xc] sm:$0xf]
      %v905 = vld [vmem:[%s900 + $0x10] sm:$0xf]
      %v906 = vld [vmem:[%s900 + $0x14] sm:$0xf]
      %v907 = vld [vmem:[%s900 + $0x18] sm:$0xf]
      %v908 = vld [vmem:[%s900 + $0x1c] sm:$0xf]
      %v909 = vld [vmem:[%s900 + $0x20] sm:$0xf]
      %v910 = vld [vmem:[%s900 + $0x24] sm:$0xf]
      %v911 = vld [vmem:[%s900 + $0x28] sm:$0xf]
      %v912 = vld [vmem:[%s900 + $0x2c] sm:$0xf]
      %v913 = vld [vmem:[%s900 + $0x30] sm:$0xf]
      %v914 = vld [vmem:[%s900 + $0x34] sm:$0xf]
      %v915 = vld [vmem:[%s900 + $0x38] sm:$0xf]
      %v916 = vld [vmem:[%s900 + $0x3c] sm:$0xf]
      %v917 = vunpack.c.l.b16 %v871
      %v918 = vunpack.c.l.b16 %v875
      %v919 = vunpack.c.l.b16 %v879
      %v920 = vunpack.c.l.b16 %v883
      %v921 = vunpack.c.l.b16 %v887
      %v922 = vunpack.c.l.b16 %v891
      %v923 = vunpack.c.l.b16 %v895
      %v924 = vunpack.c.l.b16 %v899
      %v925 = vpack.c.b16 %v918, %v917
      %v926 = vpack.c.b16 %v920, %v919
      %v927 = vpack.c.b16 %v922, %v921
      %v928 = vpack.c.b16 %v924, %v923
      %v949 = vunpack.c.l.b16 %v901
      %v950 = vunpack.c.l.b16 %v902
      %v951 = vunpack.c.l.b16 %v903
      %v952 = vunpack.c.l.b16 %v904
      %v953 = vunpack.c.l.b16 %v905
      %v954 = vunpack.c.l.b16 %v906
      %v955 = vunpack.c.l.b16 %v907
      %v956 = vunpack.c.l.b16 %v908
      %v957 = vunpack.c.l.b16 %v909
      %v958 = vunpack.c.l.b16 %v910
      %v959 = vunpack.c.l.b16 %v911
      %v960 = vunpack.c.l.b16 %v912
      %v961 = vunpack.c.l.b16 %v913
      %v962 = vunpack.c.l.b16 %v914
      %v963 = vunpack.c.l.b16 %v915
      %v964 = vunpack.c.l.b16 %v916
      %v965 = vpack.c.b16 %v950, %v949
      %v966 = vpack.c.b16 %v952, %v951
      %v967 = vpack.c.b16 %v954, %v953
      %v968 = vpack.c.b16 %v956, %v955
      %v969 = vpack.c.b16 %v958, %v957
      %v970 = vpack.c.b16 %v960, %v959
      %v971 = vpack.c.b16 %v962, %v961
      %v972 = vpack.c.b16 %v964, %v963
      %981 = vmatprep.subr.bf16.mxu0 0
      %982 = vmatpush1.bf16.msra.mxu0 %v972
      %983 = vmatprep.subr.bf16.mxu0 0
      %984 = vmatpush1.bf16.msra.mxu0 %v971
      %985 = vmatprep.subr.bf16.mxu0 0
      %986 = vmatpush1.bf16.msra.mxu0 %v970
      %987 = vmatprep.subr.bf16.mxu0 0
      %988 = vmatpush1.bf16.msra.mxu0 %v969
      %989 = vmatprep.subr.bf16.mxu0 0
      %990 = vmatpush1.bf16.msra.mxu0 %v968
      %991 = vmatprep.subr.bf16.mxu0 0
      %992 = vmatpush1.bf16.msra.mxu0 %v967
      %993 = vmatprep.subr.bf16.mxu0 0
      %994 = vmatpush1.bf16.msra.mxu0 %v966
      %995 = vmatprep.subr.bf16.mxu0 0
      %996 = vmatpush1.bf16.msra.mxu0 %v965
      %997 = vmatprep.subr.bf16.mxu0 0
      %998 = vmatpush2.bf16.msra.mxu0 0
      %999 = vmatprep.subr.bf16.mxu0 0
      %1000 = vmatpush2.bf16.msra.mxu0 0
      %1001 = vmatprep.subr.bf16.mxu0 0
      %1002 = vmatpush2.bf16.msra.mxu0 0
      %1003 = vmatprep.subr.bf16.mxu0 0
      %1004 = vmatpush2.bf16.msra.mxu0 0
      %1005 = vmatprep.subr.bf16.mxu0 0
      %1006 = vmatpush2.bf16.msra.mxu0 0
      %1007 = vmatprep.subr.bf16.mxu0 0
      %1008 = vmatpush2.bf16.msra.mxu0 0
      %1009 = vmatprep.subr.bf16.mxu0 0
      %1010 = vmatpush2.bf16.msra.mxu0 0
      %1011 = vmatprep.subr.bf16.mxu0 0
      %1012 = vmatpush2.bf16.msra.mxu0 0
      %1013 = vmatprep.mubr.bf16.mxu0 0
      %1014 = vmatmul.mubr.bf16.gmra.mxu0 %v925
      %v1015 = vpop.f32.mrf.mxu0
      %v1016 = vadd.f32 0.0, %v1015
      %v1017 = vpop.f32.mrf.mxu0
      %v1018 = vpop.f32.mrf.mxu0
      %v1019 = vadd.f32 0.0, %v1018
      %v1020 = vpop.f32.mrf.mxu0
      %1021 = vmatprep.mubr.bf16.mxu0 0
      %1022 = vmatmul.mubr.bf16.gmra.mxu0 %v926
      %v1023 = vpop.f32.mrf.mxu0
      %v1024 = vadd.f32 0.0, %v1023
      %v1025 = vpop.f32.mrf.mxu0
      %v1026 = vpop.f32.mrf.mxu0
      %v1027 = vadd.f32 0.0, %v1026
      %v1028 = vpop.f32.mrf.mxu0
      %1029 = vmatprep.mubr.bf16.mxu0 0
      %1030 = vmatmul.mubr.bf16.gmra.mxu0 %v927
      %v1031 = vpop.f32.mrf.mxu0
      %v1032 = vadd.f32 0.0, %v1031
      %v1033 = vpop.f32.mrf.mxu0
      %v1034 = vpop.f32.mrf.mxu0
      %v1035 = vadd.f32 0.0, %v1034
      %v1036 = vpop.f32.mrf.mxu0
      %1037 = vmatprep.mubr.bf16.mxu0 0
      %1038 = vmatmul.mubr.bf16.gmra.mxu0 %v928
      %v1039 = vpop.f32.mrf.mxu0
      %v1040 = vadd.f32 0.0, %v1039
      %v1041 = vpop.f32.mrf.mxu0
      %v1042 = vpop.f32.mrf.mxu0
      %v1043 = vadd.f32 0.0, %v1042
      %v1044 = vpop.f32.mrf.mxu0
      %1045 = vdwg.mxu0
      %v1046 = vadd.f32 %v811, %v1016
      %v1047 = vadd.f32 %v814, %v1019
      %v1048 = vadd.f32 %v819, %v1024
      %v1049 = vadd.f32 %v822, %v1027
      %v1050 = vadd.f32 %v827, %v1032
      %v1051 = vadd.f32 %v830, %v1035
      %v1052 = vadd.f32 %v835, %v1040
      %v1053 = vadd.f32 %v838, %v1043
      %s1054 = scalar_lea.vmem %s375, 8
      %v1055 = vld [vmem:[%s1054] sm:$0xf]
      %v1056 = vld [vmem:[%s1054 + $0x8] sm:$0xf]
      %v1057 = vld [vmem:[%s1054 + $0x10] sm:$0xf]
      %v1058 = vld [vmem:[%s1054 + $0x18] sm:$0xf]
      %v1059 = vld [vmem:[%s1054 + $0x20] sm:$0xf]
      %v1060 = vld [vmem:[%s1054 + $0x28] sm:$0xf]
      %v1061 = vld [vmem:[%s1054 + $0x30] sm:$0xf]
      %v1062 = vld [vmem:[%s1054 + $0x38] sm:$0xf]
      %s1063 = scalar_lea.vmem %s1, 192
      %v1064 = vld [vmem:[%s1063] sm:$0xf]
      %v1065 = vld [vmem:[%s1063 + $0x4] sm:$0xf]
      %v1066 = vld [vmem:[%s1063 + $0x8] sm:$0xf]
      %v1067 = vld [vmem:[%s1063 + $0xc] sm:$0xf]
      %v1068 = vld [vmem:[%s1063 + $0x10] sm:$0xf]
      %v1069 = vld [vmem:[%s1063 + $0x14] sm:$0xf]
      %v1070 = vld [vmem:[%s1063 + $0x18] sm:$0xf]
      %v1071 = vld [vmem:[%s1063 + $0x1c] sm:$0xf]
      %v1072 = vld [vmem:[%s1063 + $0x20] sm:$0xf]
      %v1073 = vld [vmem:[%s1063 + $0x24] sm:$0xf]
      %v1074 = vld [vmem:[%s1063 + $0x28] sm:$0xf]
      %v1075 = vld [vmem:[%s1063 + $0x2c] sm:$0xf]
      %v1076 = vld [vmem:[%s1063 + $0x30] sm:$0xf]
      %v1077 = vld [vmem:[%s1063 + $0x34] sm:$0xf]
      %v1078 = vld [vmem:[%s1063 + $0x38] sm:$0xf]
      %v1079 = vld [vmem:[%s1063 + $0x3c] sm:$0xf]
      %v1088 = vunpack.c.l.b16 %v1055
      %v1089 = vunpack.c.l.b16 %v1056
      %v1090 = vunpack.c.l.b16 %v1057
      %v1091 = vunpack.c.l.b16 %v1058
      %v1092 = vunpack.c.l.b16 %v1059
      %v1093 = vunpack.c.l.b16 %v1060
      %v1094 = vunpack.c.l.b16 %v1061
      %v1095 = vunpack.c.l.b16 %v1062
      %v1096 = vpack.c.b16 %v1089, %v1088
      %v1097 = vpack.c.b16 %v1091, %v1090
      %v1098 = vpack.c.b16 %v1093, %v1092
      %v1099 = vpack.c.b16 %v1095, %v1094
      %v1120 = vunpack.c.l.b16 %v1064
      %v1121 = vunpack.c.l.b16 %v1065
      %v1122 = vunpack.c.l.b16 %v1066
      %v1123 = vunpack.c.l.b16 %v1067
      %v1124 = vunpack.c.l.b16 %v1068
      %v1125 = vunpack.c.l.b16 %v1069
      %v1126 = vunpack.c.l.b16 %v1070
      %v1127 = vunpack.c.l.b16 %v1071
      %v1128 = vunpack.c.l.b16 %v1072
      %v1129 = vunpack.c.l.b16 %v1073
      %v1130 = vunpack.c.l.b16 %v1074
      %v1131 = vunpack.c.l.b16 %v1075
      %v1132 = vunpack.c.l.b16 %v1076
      %v1133 = vunpack.c.l.b16 %v1077
      %v1134 = vunpack.c.l.b16 %v1078
      %v1135 = vunpack.c.l.b16 %v1079
      %v1136 = vpack.c.b16 %v1121, %v1120
      %v1137 = vpack.c.b16 %v1123, %v1122
      %v1138 = vpack.c.b16 %v1125, %v1124
      %v1139 = vpack.c.b16 %v1127, %v1126
      %v1140 = vpack.c.b16 %v1129, %v1128
      %v1141 = vpack.c.b16 %v1131, %v1130
      %v1142 = vpack.c.b16 %v1133, %v1132
      %v1143 = vpack.c.b16 %v1135, %v1134
      %1152 = vmatprep.subr.bf16.mxu0 0
      %1153 = vmatpush1.bf16.msra.mxu0 %v1143
      %1154 = vmatprep.subr.bf16.mxu0 0
      %1155 = vmatpush1.bf16.msra.mxu0 %v1142
      %1156 = vmatprep.subr.bf16.mxu0 0
      %1157 = vmatpush1.bf16.msra.mxu0 %v1141
      %1158 = vmatprep.subr.bf16.mxu0 0
      %1159 = vmatpush1.bf16.msra.mxu0 %v1140
      %1160 = vmatprep.subr.bf16.mxu0 0
      %1161 = vmatpush1.bf16.msra.mxu0 %v1139
      %1162 = vmatprep.subr.bf16.mxu0 0
      %1163 = vmatpush1.bf16.msra.mxu0 %v1138
      %1164 = vmatprep.subr.bf16.mxu0 0
      %1165 = vmatpush1.bf16.msra.mxu0 %v1137
      %1166 = vmatprep.subr.bf16.mxu0 0
      %1167 = vmatpush1.bf16.msra.mxu0 %v1136
      %1168 = vmatprep.subr.bf16.mxu0 0
      %1169 = vmatpush2.bf16.msra.mxu0 0
      %1170 = vmatprep.subr.bf16.mxu0 0
      %1171 = vmatpush2.bf16.msra.mxu0 0
      %1172 = vmatprep.subr.bf16.mxu0 0
      %1173 = vmatpush2.bf16.msra.mxu0 0
      %1174 = vmatprep.subr.bf16.mxu0 0
      %1175 = vmatpush2.bf16.msra.mxu0 0
      %1176 = vmatprep.subr.bf16.mxu0 0
      %1177 = vmatpush2.bf16.msra.mxu0 0
      %1178 = vmatprep.subr.bf16.mxu0 0
      %1179 = vmatpush2.bf16.msra.mxu0 0
      %1180 = vmatprep.subr.bf16.mxu0 0
      %1181 = vmatpush2.bf16.msra.mxu0 0
      %1182 = vmatprep.subr.bf16.mxu0 0
      %1183 = vmatpush2.bf16.msra.mxu0 0
      %1184 = vmatprep.mubr.bf16.mxu0 0
      %1185 = vmatmul.mubr.bf16.gmra.mxu0 %v1096
      %v1186 = vpop.f32.mrf.mxu0
      %v1187 = vadd.f32 0.0, %v1186
      %v1188 = vpop.f32.mrf.mxu0
      %v1189 = vpop.f32.mrf.mxu0
      %v1190 = vadd.f32 0.0, %v1189
      %v1191 = vpop.f32.mrf.mxu0
      %1192 = vmatprep.mubr.bf16.mxu0 0
      %1193 = vmatmul.mubr.bf16.gmra.mxu0 %v1097
      %v1194 = vpop.f32.mrf.mxu0
      %v1195 = vadd.f32 0.0, %v1194
      %v1196 = vpop.f32.mrf.mxu0
      %v1197 = vpop.f32.mrf.mxu0
      %v1198 = vadd.f32 0.0, %v1197
      %v1199 = vpop.f32.mrf.mxu0
      %1200 = vmatprep.mubr.bf16.mxu0 0
      %1201 = vmatmul.mubr.bf16.gmra.mxu0 %v1098
      %v1202 = vpop.f32.mrf.mxu0
      %v1203 = vadd.f32 0.0, %v1202
      %v1204 = vpop.f32.mrf.mxu0
      %v1205 = vpop.f32.mrf.mxu0
      %v1206 = vadd.f32 0.0, %v1205
      %v1207 = vpop.f32.mrf.mxu0
      %1208 = vmatprep.mubr.bf16.mxu0 0
      %1209 = vmatmul.mubr.bf16.gmra.mxu0 %v1099
      %v1210 = vpop.f32.mrf.mxu0
      %v1211 = vadd.f32 0.0, %v1210
      %v1212 = vpop.f32.mrf.mxu0
      %v1213 = vpop.f32.mrf.mxu0
      %v1214 = vadd.f32 0.0, %v1213
      %v1215 = vpop.f32.mrf.mxu0
      %1216 = vdwg.mxu0
      %v1217 = vadd.f32 %v1046, %v1187
      %v1218 = vadd.f32 %v1047, %v1190
      %v1219 = vadd.f32 %v1048, %v1195
      %v1220 = vadd.f32 %v1049, %v1198
      %v1221 = vadd.f32 %v1050, %v1203
      %v1222 = vadd.f32 %v1051, %v1206
      %v1223 = vadd.f32 %v1052, %v1211
      %v1224 = vadd.f32 %v1053, %v1214
      %v1225 = vld [vmem:[%s1054] sm:$0xf]
      %v1226 = vld [vmem:[%s1054 + $0x4] sm:$0x1]
      %v1227 = vld [vmem:[%s1054 + $0x8] sm:$0xf]
      %v1228 = vld [vmem:[%s1054 + $0xc] sm:$0x1]
      %v1229 = vld [vmem:[%s1054 + $0x10] sm:$0xf]
      %v1230 = vld [vmem:[%s1054 + $0x14] sm:$0x1]
      %v1231 = vld [vmem:[%s1054 + $0x18] sm:$0xf]
      %v1232 = vld [vmem:[%s1054 + $0x1c] sm:$0x1]
      %v1233 = vld [vmem:[%s1054 + $0x20] sm:$0xf]
      %v1234 = vld [vmem:[%s1054 + $0x24] sm:$0x1]
      %v1235 = vld [vmem:[%s1054 + $0x28] sm:$0xf]
      %v1236 = vld [vmem:[%s1054 + $0x2c] sm:$0x1]
      %v1237 = vld [vmem:[%s1054 + $0x30] sm:$0xf]
      %v1238 = vld [vmem:[%s1054 + $0x34] sm:$0x1]
      %v1239 = vld [vmem:[%s1054 + $0x38] sm:$0xf]
      %v1240 = vld [vmem:[%s1054 + $0x3c] sm:$0x1]
      %v1242 = vshrl.u32 %v1225, 16
      %v1244 = vrot.slane %v1242, 4
      %v1245 = vshll.u32 %v1225, 16
      %v1247 = vrot.slane %v1245, 5
      %v1248 = vor.u32 %v1244, %v1247
      %v1249 = vrot.slane %v1248, 4
      %v1251 = vshll.u32 %v1226, 16
      %v1253 = vrot.slane %v1251, 5
      %v1254 = vsel %vm445, %v1249, %v1253
      %v1256 = vshrl.u32 %v1227, 16
      %v1258 = vrot.slane %v1256, 4
      %v1259 = vshll.u32 %v1227, 16
      %v1261 = vrot.slane %v1259, 5
      %v1262 = vor.u32 %v1258, %v1261
      %v1263 = vrot.slane %v1262, 4
      %v1265 = vshll.u32 %v1228, 16
      %v1267 = vrot.slane %v1265, 5
      %v1268 = vsel %vm445, %v1263, %v1267
      %v1270 = vshrl.u32 %v1229, 16
      %v1272 = vrot.slane %v1270, 4
      %v1273 = vshll.u32 %v1229, 16
      %v1275 = vrot.slane %v1273, 5
      %v1276 = vor.u32 %v1272, %v1275
      %v1277 = vrot.slane %v1276, 4
      %v1279 = vshll.u32 %v1230, 16
      %v1281 = vrot.slane %v1279, 5
      %v1282 = vsel %vm445, %v1277, %v1281
      %v1284 = vshrl.u32 %v1231, 16
      %v1286 = vrot.slane %v1284, 4
      %v1287 = vshll.u32 %v1231, 16
      %v1289 = vrot.slane %v1287, 5
      %v1290 = vor.u32 %v1286, %v1289
      %v1291 = vrot.slane %v1290, 4
      %v1293 = vshll.u32 %v1232, 16
      %v1295 = vrot.slane %v1293, 5
      %v1296 = vsel %vm445, %v1291, %v1295
      %v1298 = vshrl.u32 %v1233, 16
      %v1300 = vrot.slane %v1298, 4
      %v1301 = vshll.u32 %v1233, 16
      %v1303 = vrot.slane %v1301, 5
      %v1304 = vor.u32 %v1300, %v1303
      %v1305 = vrot.slane %v1304, 4
      %v1307 = vshll.u32 %v1234, 16
      %v1309 = vrot.slane %v1307, 5
      %v1310 = vsel %vm445, %v1305, %v1309
      %v1312 = vshrl.u32 %v1235, 16
      %v1314 = vrot.slane %v1312, 4
      %v1315 = vshll.u32 %v1235, 16
      %v1317 = vrot.slane %v1315, 5
      %v1318 = vor.u32 %v1314, %v1317
      %v1319 = vrot.slane %v1318, 4
      %v1321 = vshll.u32 %v1236, 16
      %v1323 = vrot.slane %v1321, 5
      %v1324 = vsel %vm445, %v1319, %v1323
      %v1326 = vshrl.u32 %v1237, 16
      %v1328 = vrot.slane %v1326, 4
      %v1329 = vshll.u32 %v1237, 16
      %v1331 = vrot.slane %v1329, 5
      %v1332 = vor.u32 %v1328, %v1331
      %v1333 = vrot.slane %v1332, 4
      %v1335 = vshll.u32 %v1238, 16
      %v1337 = vrot.slane %v1335, 5
      %v1338 = vsel %vm445, %v1333, %v1337
      %v1340 = vshrl.u32 %v1239, 16
      %v1342 = vrot.slane %v1340, 4
      %v1343 = vshll.u32 %v1239, 16
      %v1345 = vrot.slane %v1343, 5
      %v1346 = vor.u32 %v1342, %v1345
      %v1347 = vrot.slane %v1346, 4
      %v1349 = vshll.u32 %v1240, 16
      %v1351 = vrot.slane %v1349, 5
      %v1352 = vsel %vm445, %v1347, %v1351
      %s1353 = scalar_lea.vmem %s1, 256
      %v1354 = vld [vmem:[%s1353] sm:$0xf]
      %v1355 = vld [vmem:[%s1353 + $0x4] sm:$0xf]
      %v1356 = vld [vmem:[%s1353 + $0x8] sm:$0xf]
      %v1357 = vld [vmem:[%s1353 + $0xc] sm:$0xf]
      %v1358 = vld [vmem:[%s1353 + $0x10] sm:$0xf]
      %v1359 = vld [vmem:[%s1353 + $0x14] sm:$0xf]
      %v1360 = vld [vmem:[%s1353 + $0x18] sm:$0xf]
      %v1361 = vld [vmem:[%s1353 + $0x1c] sm:$0xf]
      %v1362 = vld [vmem:[%s1353 + $0x20] sm:$0xf]
      %v1363 = vld [vmem:[%s1353 + $0x24] sm:$0xf]
      %v1364 = vld [vmem:[%s1353 + $0x28] sm:$0xf]
      %v1365 = vld [vmem:[%s1353 + $0x2c] sm:$0xf]
      %v1366 = vld [vmem:[%s1353 + $0x30] sm:$0xf]
      %v1367 = vld [vmem:[%s1353 + $0x34] sm:$0xf]
      %v1368 = vld [vmem:[%s1353 + $0x38] sm:$0xf]
      %v1369 = vld [vmem:[%s1353 + $0x3c] sm:$0xf]
      %v1370 = vunpack.c.l.b16 %v1254
      %v1371 = vunpack.c.l.b16 %v1268
      %v1372 = vunpack.c.l.b16 %v1282
      %v1373 = vunpack.c.l.b16 %v1296
      %v1374 = vunpack.c.l.b16 %v1310
      %v1375 = vunpack.c.l.b16 %v1324
      %v1376 = vunpack.c.l.b16 %v1338
      %v1377 = vunpack.c.l.b16 %v1352
      %v1378 = vpack.c.b16 %v1371, %v1370
      %v1379 = vpack.c.b16 %v1373, %v1372
      %v1380 = vpack.c.b16 %v1375, %v1374
      %v1381 = vpack.c.b16 %v1377, %v1376
      %v1402 = vunpack.c.l.b16 %v1354
      %v1403 = vunpack.c.l.b16 %v1355
      %v1404 = vunpack.c.l.b16 %v1356
      %v1405 = vunpack.c.l.b16 %v1357
      %v1406 = vunpack.c.l.b16 %v1358
      %v1407 = vunpack.c.l.b16 %v1359
      %v1408 = vunpack.c.l.b16 %v1360
      %v1409 = vunpack.c.l.b16 %v1361
      %v1410 = vunpack.c.l.b16 %v1362
      %v1411 = vunpack.c.l.b16 %v1363
      %v1412 = vunpack.c.l.b16 %v1364
      %v1413 = vunpack.c.l.b16 %v1365
      %v1414 = vunpack.c.l.b16 %v1366
      %v1415 = vunpack.c.l.b16 %v1367
      %v1416 = vunpack.c.l.b16 %v1368
      %v1417 = vunpack.c.l.b16 %v1369
      %v1418 = vpack.c.b16 %v1403, %v1402
      %v1419 = vpack.c.b16 %v1405, %v1404
      %v1420 = vpack.c.b16 %v1407, %v1406
      %v1421 = vpack.c.b16 %v1409, %v1408
      %v1422 = vpack.c.b16 %v1411, %v1410
      %v1423 = vpack.c.b16 %v1413, %v1412
      %v1424 = vpack.c.b16 %v1415, %v1414
      %v1425 = vpack.c.b16 %v1417, %v1416
      %1434 = vmatprep.subr.bf16.mxu0 0
      %1435 = vmatpush1.bf16.msra.mxu0 %v1425
      %1436 = vmatprep.subr.bf16.mxu0 0
      %1437 = vmatpush1.bf16.msra.mxu0 %v1424
      %1438 = vmatprep.subr.bf16.mxu0 0
      %1439 = vmatpush1.bf16.msra.mxu0 %v1423
      %1440 = vmatprep.subr.bf16.mxu0 0
      %1441 = vmatpush1.bf16.msra.mxu0 %v1422
      %1442 = vmatprep.subr.bf16.mxu0 0
      %1443 = vmatpush1.bf16.msra.mxu0 %v1421
      %1444 = vmatprep.subr.bf16.mxu0 0
      %1445 = vmatpush1.bf16.msra.mxu0 %v1420
      %1446 = vmatprep.subr.bf16.mxu0 0
      %1447 = vmatpush1.bf16.msra.mxu0 %v1419
      %1448 = vmatprep.subr.bf16.mxu0 0
      %1449 = vmatpush1.bf16.msra.mxu0 %v1418
      %1450 = vmatprep.subr.bf16.mxu0 0
      %1451 = vmatpush2.bf16.msra.mxu0 0
      %1452 = vmatprep.subr.bf16.mxu0 0
      %1453 = vmatpush2.bf16.msra.mxu0 0
      %1454 = vmatprep.subr.bf16.mxu0 0
      %1455 = vmatpush2.bf16.msra.mxu0 0
      %1456 = vmatprep.subr.bf16.mxu0 0
      %1457 = vmatpush2.bf16.msra.mxu0 0
      %1458 = vmatprep.subr.bf16.mxu0 0
      %1459 = vmatpush2.bf16.msra.mxu0 0
      %1460 = vmatprep.subr.bf16.mxu0 0
      %1461 = vmatpush2.bf16.msra.mxu0 0
      %1462 = vmatprep.subr.bf16.mxu0 0
      %1463 = vmatpush2.bf16.msra.mxu0 0
      %1464 = vmatprep.subr.bf16.mxu0 0
      %1465 = vmatpush2.bf16.msra.mxu0 0
      %1466 = vmatprep.mubr.bf16.mxu0 0
      %1467 = vmatmul.mubr.bf16.gmra.mxu0 %v1378
      %v1468 = vpop.f32.mrf.mxu0
      %v1469 = vadd.f32 0.0, %v1468
      %v1470 = vpop.f32.mrf.mxu0
      %v1471 = vpop.f32.mrf.mxu0
      %v1472 = vadd.f32 0.0, %v1471
      %v1473 = vpop.f32.mrf.mxu0
      %1474 = vmatprep.mubr.bf16.mxu0 0
      %1475 = vmatmul.mubr.bf16.gmra.mxu0 %v1379
      %v1476 = vpop.f32.mrf.mxu0
      %v1477 = vadd.f32 0.0, %v1476
      %v1478 = vpop.f32.mrf.mxu0
      %v1479 = vpop.f32.mrf.mxu0
      %v1480 = vadd.f32 0.0, %v1479
      %v1481 = vpop.f32.mrf.mxu0
      %1482 = vmatprep.mubr.bf16.mxu0 0
      %1483 = vmatmul.mubr.bf16.gmra.mxu0 %v1380
      %v1484 = vpop.f32.mrf.mxu0
      %v1485 = vadd.f32 0.0, %v1484
      %v1486 = vpop.f32.mrf.mxu0
      %v1487 = vpop.f32.mrf.mxu0
      %v1488 = vadd.f32 0.0, %v1487
      %v1489 = vpop.f32.mrf.mxu0
      %1490 = vmatprep.mubr.bf16.mxu0 0
      %1491 = vmatmul.mubr.bf16.gmra.mxu0 %v1381
      %v1492 = vpop.f32.mrf.mxu0
      %v1493 = vadd.f32 0.0, %v1492
      %v1494 = vpop.f32.mrf.mxu0
      %v1495 = vpop.f32.mrf.mxu0
      %v1496 = vadd.f32 0.0, %v1495
      %v1497 = vpop.f32.mrf.mxu0
      %1498 = vdwg.mxu0
      %v1499 = vadd.f32 %v1217, %v1469
      %v1500 = vadd.f32 %v1218, %v1472
      %v1501 = vadd.f32 %v1219, %v1477
      %v1502 = vadd.f32 %v1220, %v1480
      %v1503 = vadd.f32 %v1221, %v1485
      %v1504 = vadd.f32 %v1222, %v1488
      %v1505 = vadd.f32 %v1223, %v1493
      %v1506 = vadd.f32 %v1224, %v1496
      %v1507 = vld [vmem:[%s1054] sm:$0xe]
      %v1508 = vld [vmem:[%s1054 + $0x8] sm:$0xe]
      %v1509 = vld [vmem:[%s1054 + $0x10] sm:$0xe]
      %v1510 = vld [vmem:[%s1054 + $0x18] sm:$0xe]
      %v1511 = vld [vmem:[%s1054 + $0x20] sm:$0xe]
      %v1512 = vld [vmem:[%s1054 + $0x28] sm:$0xe]
      %v1513 = vld [vmem:[%s1054 + $0x30] sm:$0xe]
      %v1514 = vld [vmem:[%s1054 + $0x38] sm:$0xe]
      %v1531 = vrot.slane %v1507, 5
      %v1532 = vrot.slane %v1531, 4
      %v1533 = vrot.slane %v1226, 5
      %v1534 = vsel %vm867, %v1532, %v1533
      %v1535 = vrot.slane %v1508, 5
      %v1536 = vrot.slane %v1535, 4
      %v1537 = vrot.slane %v1228, 5
      %v1538 = vsel %vm867, %v1536, %v1537
      %v1539 = vrot.slane %v1509, 5
      %v1540 = vrot.slane %v1539, 4
      %v1541 = vrot.slane %v1230, 5
      %v1542 = vsel %vm867, %v1540, %v1541
      %v1543 = vrot.slane %v1510, 5
      %v1544 = vrot.slane %v1543, 4
      %v1545 = vrot.slane %v1232, 5
      %v1546 = vsel %vm867, %v1544, %v1545
      %v1547 = vrot.slane %v1511, 5
      %v1548 = vrot.slane %v1547, 4
      %v1549 = vrot.slane %v1234, 5
      %v1550 = vsel %vm867, %v1548, %v1549
      %v1551 = vrot.slane %v1512, 5
      %v1552 = vrot.slane %v1551, 4
      %v1553 = vrot.slane %v1236, 5
      %v1554 = vsel %vm867, %v1552, %v1553
      %v1555 = vrot.slane %v1513, 5
      %v1556 = vrot.slane %v1555, 4
      %v1557 = vrot.slane %v1238, 5
      %v1558 = vsel %vm867, %v1556, %v1557
      %v1559 = vrot.slane %v1514, 5
      %v1560 = vrot.slane %v1559, 4
      %v1561 = vrot.slane %v1240, 5
      %v1562 = vsel %vm867, %v1560, %v1561
      %s1563 = scalar_lea.vmem %s1, 320
      %v1564 = vld [vmem:[%s1563] sm:$0xf]
      %v1565 = vld [vmem:[%s1563 + $0x4] sm:$0xf]
      %v1566 = vld [vmem:[%s1563 + $0x8] sm:$0xf]
      %v1567 = vld [vmem:[%s1563 + $0xc] sm:$0xf]
      %v1568 = vld [vmem:[%s1563 + $0x10] sm:$0xf]
      %v1569 = vld [vmem:[%s1563 + $0x14] sm:$0xf]
      %v1570 = vld [vmem:[%s1563 + $0x18] sm:$0xf]
      %v1571 = vld [vmem:[%s1563 + $0x1c] sm:$0xf]
      %v1572 = vld [vmem:[%s1563 + $0x20] sm:$0xf]
      %v1573 = vld [vmem:[%s1563 + $0x24] sm:$0xf]
      %v1574 = vld [vmem:[%s1563 + $0x28] sm:$0xf]
      %v1575 = vld [vmem:[%s1563 + $0x2c] sm:$0xf]
      %v1576 = vld [vmem:[%s1563 + $0x30] sm:$0xf]
      %v1577 = vld [vmem:[%s1563 + $0x34] sm:$0xf]
      %v1578 = vld [vmem:[%s1563 + $0x38] sm:$0xf]
      %v1579 = vld [vmem:[%s1563 + $0x3c] sm:$0xf]
      %v1580 = vunpack.c.l.b16 %v1534
      %v1581 = vunpack.c.l.b16 %v1538
      %v1582 = vunpack.c.l.b16 %v1542
      %v1583 = vunpack.c.l.b16 %v1546
      %v1584 = vunpack.c.l.b16 %v1550
      %v1585 = vunpack.c.l.b16 %v1554
      %v1586 = vunpack.c.l.b16 %v1558
      %v1587 = vunpack.c.l.b16 %v1562
      %v1588 = vpack.c.b16 %v1581, %v1580
      %v1589 = vpack.c.b16 %v1583, %v1582
      %v1590 = vpack.c.b16 %v1585, %v1584
      %v1591 = vpack.c.b16 %v1587, %v1586
      %v1612 = vunpack.c.l.b16 %v1564
      %v1613 = vunpack.c.l.b16 %v1565
      %v1614 = vunpack.c.l.b16 %v1566
      %v1615 = vunpack.c.l.b16 %v1567
      %v1616 = vunpack.c.l.b16 %v1568
      %v1617 = vunpack.c.l.b16 %v1569
      %v1618 = vunpack.c.l.b16 %v1570
      %v1619 = vunpack.c.l.b16 %v1571
      %v1620 = vunpack.c.l.b16 %v1572
      %v1621 = vunpack.c.l.b16 %v1573
      %v1622 = vunpack.c.l.b16 %v1574
      %v1623 = vunpack.c.l.b16 %v1575
      %v1624 = vunpack.c.l.b16 %v1576
      %v1625 = vunpack.c.l.b16 %v1577
      %v1626 = vunpack.c.l.b16 %v1578
      %v1627 = vunpack.c.l.b16 %v1579
      %v1628 = vpack.c.b16 %v1613, %v1612
      %v1629 = vpack.c.b16 %v1615, %v1614
      %v1630 = vpack.c.b16 %v1617, %v1616
      %v1631 = vpack.c.b16 %v1619, %v1618
      %v1632 = vpack.c.b16 %v1621, %v1620
      %v1633 = vpack.c.b16 %v1623, %v1622
      %v1634 = vpack.c.b16 %v1625, %v1624
      %v1635 = vpack.c.b16 %v1627, %v1626
      %1644 = vmatprep.subr.bf16.mxu0 0
      %1645 = vmatpush1.bf16.msra.mxu0 %v1635
      %1646 = vmatprep.subr.bf16.mxu0 0
      %1647 = vmatpush1.bf16.msra.mxu0 %v1634
      %1648 = vmatprep.subr.bf16.mxu0 0
      %1649 = vmatpush1.bf16.msra.mxu0 %v1633
      %1650 = vmatprep.subr.bf16.mxu0 0
      %1651 = vmatpush1.bf16.msra.mxu0 %v1632
      %1652 = vmatprep.subr.bf16.mxu0 0
      %1653 = vmatpush1.bf16.msra.mxu0 %v1631
      %1654 = vmatprep.subr.bf16.mxu0 0
      %1655 = vmatpush1.bf16.msra.mxu0 %v1630
      %1656 = vmatprep.subr.bf16.mxu0 0
      %1657 = vmatpush1.bf16.msra.mxu0 %v1629
      %1658 = vmatprep.subr.bf16.mxu0 0
      %1659 = vmatpush1.bf16.msra.mxu0 %v1628
      %1660 = vmatprep.subr.bf16.mxu0 0
      %1661 = vmatpush2.bf16.msra.mxu0 0
      %1662 = vmatprep.subr.bf16.mxu0 0
      %1663 = vmatpush2.bf16.msra.mxu0 0
      %1664 = vmatprep.subr.bf16.mxu0 0
      %1665 = vmatpush2.bf16.msra.mxu0 0
      %1666 = vmatprep.subr.bf16.mxu0 0
      %1667 = vmatpush2.bf16.msra.mxu0 0
      %1668 = vmatprep.subr.bf16.mxu0 0
      %1669 = vmatpush2.bf16.msra.mxu0 0
      %1670 = vmatprep.subr.bf16.mxu0 0
      %1671 = vmatpush2.bf16.msra.mxu0 0
      %1672 = vmatprep.subr.bf16.mxu0 0
      %1673 = vmatpush2.bf16.msra.mxu0 0
      %1674 = vmatprep.subr.bf16.mxu0 0
      %1675 = vmatpush2.bf16.msra.mxu0 0
      %1676 = vmatprep.mubr.bf16.mxu0 0
      %1677 = vmatmul.mubr.bf16.gmra.mxu0 %v1588
      %v1678 = vpop.f32.mrf.mxu0
      %v1679 = vadd.f32 0.0, %v1678
      %v1680 = vpop.f32.mrf.mxu0
      %v1681 = vpop.f32.mrf.mxu0
      %v1682 = vadd.f32 0.0, %v1681
      %v1683 = vpop.f32.mrf.mxu0
      %1684 = vmatprep.mubr.bf16.mxu0 0
      %1685 = vmatmul.mubr.bf16.gmra.mxu0 %v1589
      %v1686 = vpop.f32.mrf.mxu0
      %v1687 = vadd.f32 0.0, %v1686
      %v1688 = vpop.f32.mrf.mxu0
      %v1689 = vpop.f32.mrf.mxu0
      %v1690 = vadd.f32 0.0, %v1689
      %v1691 = vpop.f32.mrf.mxu0
      %1692 = vmatprep.mubr.bf16.mxu0 0
      %1693 = vmatmul.mubr.bf16.gmra.mxu0 %v1590
      %v1694 = vpop.f32.mrf.mxu0
      %v1695 = vadd.f32 0.0, %v1694
      %v1696 = vpop.f32.mrf.mxu0
      %v1697 = vpop.f32.mrf.mxu0
      %v1698 = vadd.f32 0.0, %v1697
      %v1699 = vpop.f32.mrf.mxu0
      %1700 = vmatprep.mubr.bf16.mxu0 0
      %1701 = vmatmul.mubr.bf16.gmra.mxu0 %v1591
      %v1702 = vpop.f32.mrf.mxu0
      %v1703 = vadd.f32 0.0, %v1702
      %v1704 = vpop.f32.mrf.mxu0
      %v1705 = vpop.f32.mrf.mxu0
      %v1706 = vadd.f32 0.0, %v1705
      %v1707 = vpop.f32.mrf.mxu0
      %1708 = vdwg.mxu0
      %v1709 = vadd.f32 %v1499, %v1679
      %v1710 = vadd.f32 %v1500, %v1682
      %v1711 = vadd.f32 %v1501, %v1687
      %v1712 = vadd.f32 %v1502, %v1690
      %v1713 = vadd.f32 %v1503, %v1695
      %v1714 = vadd.f32 %v1504, %v1698
      %v1715 = vadd.f32 %v1505, %v1703
      %v1716 = vadd.f32 %v1506, %v1706
      %s1717 = scalar_lea.vmem %s375, 16
      %v1718 = vld [vmem:[%s1717] sm:$0xf]
      %v1719 = vld [vmem:[%s1717 + $0x8] sm:$0xf]
      %v1720 = vld [vmem:[%s1717 + $0x10] sm:$0xf]
      %v1721 = vld [vmem:[%s1717 + $0x18] sm:$0xf]
      %v1722 = vld [vmem:[%s1717 + $0x20] sm:$0xf]
      %v1723 = vld [vmem:[%s1717 + $0x28] sm:$0xf]
      %v1724 = vld [vmem:[%s1717 + $0x30] sm:$0xf]
      %v1725 = vld [vmem:[%s1717 + $0x38] sm:$0xf]
      %s1726 = scalar_lea.vmem %s1, 384
      %v1727 = vld [vmem:[%s1726] sm:$0xf]
      %v1728 = vld [vmem:[%s1726 + $0x4] sm:$0xf]
      %v1729 = vld [vmem:[%s1726 + $0x8] sm:$0xf]
      %v1730 = vld [vmem:[%s1726 + $0xc] sm:$0xf]
      %v1731 = vld [vmem:[%s1726 + $0x10] sm:$0xf]
      %v1732 = vld [vmem:[%s1726 + $0x14] sm:$0xf]
      %v1733 = vld [vmem:[%s1726 + $0x18] sm:$0xf]
      %v1734 = vld [vmem:[%s1726 + $0x1c] sm:$0xf]
      %v1735 = vld [vmem:[%s1726 + $0x20] sm:$0xf]
      %v1736 = vld [vmem:[%s1726 + $0x24] sm:$0xf]
      %v1737 = vld [vmem:[%s1726 + $0x28] sm:$0xf]
      %v1738 = vld [vmem:[%s1726 + $0x2c] sm:$0xf]
      %v1739 = vld [vmem:[%s1726 + $0x30] sm:$0xf]
      %v1740 = vld [vmem:[%s1726 + $0x34] sm:$0xf]
      %v1741 = vld [vmem:[%s1726 + $0x38] sm:$0xf]
      %v1742 = vld [vmem:[%s1726 + $0x3c] sm:$0xf]
      %v1751 = vunpack.c.l.b16 %v1718
      %v1752 = vunpack.c.l.b16 %v1719
      %v1753 = vunpack.c.l.b16 %v1720
      %v1754 = vunpack.c.l.b16 %v1721
      %v1755 = vunpack.c.l.b16 %v1722
      %v1756 = vunpack.c.l.b16 %v1723
      %v1757 = vunpack.c.l.b16 %v1724
      %v1758 = vunpack.c.l.b16 %v1725
      %v1759 = vpack.c.b16 %v1752, %v1751
      %v1760 = vpack.c.b16 %v1754, %v1753
      %v1761 = vpack.c.b16 %v1756, %v1755
      %v1762 = vpack.c.b16 %v1758, %v1757
      %v1783 = vunpack.c.l.b16 %v1727
      %v1784 = vunpack.c.l.b16 %v1728
      %v1785 = vunpack.c.l.b16 %v1729
      %v1786 = vunpack.c.l.b16 %v1730
      %v1787 = vunpack.c.l.b16 %v1731
      %v1788 = vunpack.c.l.b16 %v1732
      %v1789 = vunpack.c.l.b16 %v1733
      %v1790 = vunpack.c.l.b16 %v1734
      %v1791 = vunpack.c.l.b16 %v1735
      %v1792 = vunpack.c.l.b16 %v1736
      %v1793 = vunpack.c.l.b16 %v1737
      %v1794 = vunpack.c.l.b16 %v1738
      %v1795 = vunpack.c.l.b16 %v1739
      %v1796 = vunpack.c.l.b16 %v1740
      %v1797 = vunpack.c.l.b16 %v1741
      %v1798 = vunpack.c.l.b16 %v1742
      %v1799 = vpack.c.b16 %v1784, %v1783
      %v1800 = vpack.c.b16 %v1786, %v1785
      %v1801 = vpack.c.b16 %v1788, %v1787
      %v1802 = vpack.c.b16 %v1790, %v1789
      %v1803 = vpack.c.b16 %v1792, %v1791
      %v1804 = vpack.c.b16 %v1794, %v1793
      %v1805 = vpack.c.b16 %v1796, %v1795
      %v1806 = vpack.c.b16 %v1798, %v1797
      %1815 = vmatprep.subr.bf16.mxu0 0
      %1816 = vmatpush1.bf16.msra.mxu0 %v1806
      %1817 = vmatprep.subr.bf16.mxu0 0
      %1818 = vmatpush1.bf16.msra.mxu0 %v1805
      %1819 = vmatprep.subr.bf16.mxu0 0
      %1820 = vmatpush1.bf16.msra.mxu0 %v1804
      %1821 = vmatprep.subr.bf16.mxu0 0
      %1822 = vmatpush1.bf16.msra.mxu0 %v1803
      %1823 = vmatprep.subr.bf16.mxu0 0
      %1824 = vmatpush1.bf16.msra.mxu0 %v1802
      %1825 = vmatprep.subr.bf16.mxu0 0
      %1826 = vmatpush1.bf16.msra.mxu0 %v1801
      %1827 = vmatprep.subr.bf16.mxu0 0
      %1828 = vmatpush1.bf16.msra.mxu0 %v1800
      %1829 = vmatprep.subr.bf16.mxu0 0
      %1830 = vmatpush1.bf16.msra.mxu0 %v1799
      %1831 = vmatprep.subr.bf16.mxu0 0
      %1832 = vmatpush2.bf16.msra.mxu0 0
      %1833 = vmatprep.subr.bf16.mxu0 0
      %1834 = vmatpush2.bf16.msra.mxu0 0
      %1835 = vmatprep.subr.bf16.mxu0 0
      %1836 = vmatpush2.bf16.msra.mxu0 0
      %1837 = vmatprep.subr.bf16.mxu0 0
      %1838 = vmatpush2.bf16.msra.mxu0 0
      %1839 = vmatprep.subr.bf16.mxu0 0
      %1840 = vmatpush2.bf16.msra.mxu0 0
      %1841 = vmatprep.subr.bf16.mxu0 0
      %1842 = vmatpush2.bf16.msra.mxu0 0
      %1843 = vmatprep.subr.bf16.mxu0 0
      %1844 = vmatpush2.bf16.msra.mxu0 0
      %1845 = vmatprep.subr.bf16.mxu0 0
      %1846 = vmatpush2.bf16.msra.mxu0 0
      %1847 = vmatprep.mubr.bf16.mxu0 0
      %1848 = vmatmul.mubr.bf16.gmra.mxu0 %v1759
      %v1849 = vpop.f32.mrf.mxu0
      %v1850 = vadd.f32 0.0, %v1849
      %v1851 = vpop.f32.mrf.mxu0
      %v1852 = vpop.f32.mrf.mxu0
      %v1853 = vadd.f32 0.0, %v1852
      %v1854 = vpop.f32.mrf.mxu0
      %1855 = vmatprep.mubr.bf16.mxu0 0
      %1856 = vmatmul.mubr.bf16.gmra.mxu0 %v1760
      %v1857 = vpop.f32.mrf.mxu0
      %v1858 = vadd.f32 0.0, %v1857
      %v1859 = vpop.f32.mrf.mxu0
      %v1860 = vpop.f32.mrf.mxu0
      %v1861 = vadd.f32 0.0, %v1860
      %v1862 = vpop.f32.mrf.mxu0
      %1863 = vmatprep.mubr.bf16.mxu0 0
      %1864 = vmatmul.mubr.bf16.gmra.mxu0 %v1761
      %v1865 = vpop.f32.mrf.mxu0
      %v1866 = vadd.f32 0.0, %v1865
      %v1867 = vpop.f32.mrf.mxu0
      %v1868 = vpop.f32.mrf.mxu0
      %v1869 = vadd.f32 0.0, %v1868
      %v1870 = vpop.f32.mrf.mxu0
      %1871 = vmatprep.mubr.bf16.mxu0 0
      %1872 = vmatmul.mubr.bf16.gmra.mxu0 %v1762
      %v1873 = vpop.f32.mrf.mxu0
      %v1874 = vadd.f32 0.0, %v1873
      %v1875 = vpop.f32.mrf.mxu0
      %v1876 = vpop.f32.mrf.mxu0
      %v1877 = vadd.f32 0.0, %v1876
      %v1878 = vpop.f32.mrf.mxu0
      %1879 = vdwg.mxu0
      %v1880 = vadd.f32 %v1709, %v1850
      %v1881 = vadd.f32 %v1710, %v1853
      %v1882 = vadd.f32 %v1711, %v1858
      %v1883 = vadd.f32 %v1712, %v1861
      %v1884 = vadd.f32 %v1713, %v1866
      %v1885 = vadd.f32 %v1714, %v1869
      %v1886 = vadd.f32 %v1715, %v1874
      %v1887 = vadd.f32 %v1716, %v1877
      %v1888 = vld [vmem:[%s1717] sm:$0xf]
      %v1889 = vld [vmem:[%s1717 + $0x4] sm:$0x1]
      %v1890 = vld [vmem:[%s1717 + $0x8] sm:$0xf]
      %v1891 = vld [vmem:[%s1717 + $0xc] sm:$0x1]
      %v1892 = vld [vmem:[%s1717 + $0x10] sm:$0xf]
      %v1893 = vld [vmem:[%s1717 + $0x14] sm:$0x1]
      %v1894 = vld [vmem:[%s1717 + $0x18] sm:$0xf]
      %v1895 = vld [vmem:[%s1717 + $0x1c] sm:$0x1]
      %v1896 = vld [vmem:[%s1717 + $0x20] sm:$0xf]
      %v1897 = vld [vmem:[%s1717 + $0x24] sm:$0x1]
      %v1898 = vld [vmem:[%s1717 + $0x28] sm:$0xf]
      %v1899 = vld [vmem:[%s1717 + $0x2c] sm:$0x1]
      %v1900 = vld [vmem:[%s1717 + $0x30] sm:$0xf]
      %v1901 = vld [vmem:[%s1717 + $0x34] sm:$0x1]
      %v1902 = vld [vmem:[%s1717 + $0x38] sm:$0xf]
      %v1903 = vld [vmem:[%s1717 + $0x3c] sm:$0x1]
      %v1905 = vshrl.u32 %v1888, 16
      %v1907 = vrot.slane %v1905, 4
      %v1908 = vshll.u32 %v1888, 16
      %v1910 = vrot.slane %v1908, 5
      %v1911 = vor.u32 %v1907, %v1910
      %v1912 = vrot.slane %v1911, 4
      %v1914 = vshll.u32 %v1889, 16
      %v1916 = vrot.slane %v1914, 5
      %v1917 = vsel %vm445, %v1912, %v1916
      %v1919 = vshrl.u32 %v1890, 16
      %v1921 = vrot.slane %v1919, 4
      %v1922 = vshll.u32 %v1890, 16
      %v1924 = vrot.slane %v1922, 5
      %v1925 = vor.u32 %v1921, %v1924
      %v1926 = vrot.slane %v1925, 4
      %v1928 = vshll.u32 %v1891, 16
      %v1930 = vrot.slane %v1928, 5
      %v1931 = vsel %vm445, %v1926, %v1930
      %v1933 = vshrl.u32 %v1892, 16
      %v1935 = vrot.slane %v1933, 4
      %v1936 = vshll.u32 %v1892, 16
      %v1938 = vrot.slane %v1936, 5
      %v1939 = vor.u32 %v1935, %v1938
      %v1940 = vrot.slane %v1939, 4
      %v1942 = vshll.u32 %v1893, 16
      %v1944 = vrot.slane %v1942, 5
      %v1945 = vsel %vm445, %v1940, %v1944
      %v1947 = vshrl.u32 %v1894, 16
      %v1949 = vrot.slane %v1947, 4
      %v1950 = vshll.u32 %v1894, 16
      %v1952 = vrot.slane %v1950, 5
      %v1953 = vor.u32 %v1949, %v1952
      %v1954 = vrot.slane %v1953, 4
      %v1956 = vshll.u32 %v1895, 16
      %v1958 = vrot.slane %v1956, 5
      %v1959 = vsel %vm445, %v1954, %v1958
      %v1961 = vshrl.u32 %v1896, 16
      %v1963 = vrot.slane %v1961, 4
      %v1964 = vshll.u32 %v1896, 16
      %v1966 = vrot.slane %v1964, 5
      %v1967 = vor.u32 %v1963, %v1966
      %v1968 = vrot.slane %v1967, 4
      %v1970 = vshll.u32 %v1897, 16
      %v1972 = vrot.slane %v1970, 5
      %v1973 = vsel %vm445, %v1968, %v1972
      %v1975 = vshrl.u32 %v1898, 16
      %v1977 = vrot.slane %v1975, 4
      %v1978 = vshll.u32 %v1898, 16
      %v1980 = vrot.slane %v1978, 5
      %v1981 = vor.u32 %v1977, %v1980
      %v1982 = vrot.slane %v1981, 4
      %v1984 = vshll.u32 %v1899, 16
      %v1986 = vrot.slane %v1984, 5
      %v1987 = vsel %vm445, %v1982, %v1986
      %v1989 = vshrl.u32 %v1900, 16
      %v1991 = vrot.slane %v1989, 4
      %v1992 = vshll.u32 %v1900, 16
      %v1994 = vrot.slane %v1992, 5
      %v1995 = vor.u32 %v1991, %v1994
      %v1996 = vrot.slane %v1995, 4
      %v1998 = vshll.u32 %v1901, 16
      %v2000 = vrot.slane %v1998, 5
      %v2001 = vsel %vm445, %v1996, %v2000
      %v2003 = vshrl.u32 %v1902, 16
      %v2005 = vrot.slane %v2003, 4
      %v2006 = vshll.u32 %v1902, 16
      %v2008 = vrot.slane %v2006, 5
      %v2009 = vor.u32 %v2005, %v2008
      %v2010 = vrot.slane %v2009, 4
      %v2012 = vshll.u32 %v1903, 16
      %v2014 = vrot.slane %v2012, 5
      %v2015 = vsel %vm445, %v2010, %v2014
      %s2016 = scalar_lea.vmem %s1, 448
      %v2017 = vld [vmem:[%s2016] sm:$0xf]
      %v2018 = vld [vmem:[%s2016 + $0x4] sm:$0xf]
      %v2019 = vld [vmem:[%s2016 + $0x8] sm:$0xf]
      %v2020 = vld [vmem:[%s2016 + $0xc] sm:$0xf]
      %v2021 = vld [vmem:[%s2016 + $0x10] sm:$0xf]
      %v2022 = vld [vmem:[%s2016 + $0x14] sm:$0xf]
      %v2023 = vld [vmem:[%s2016 + $0x18] sm:$0xf]
      %v2024 = vld [vmem:[%s2016 + $0x1c] sm:$0xf]
      %v2025 = vld [vmem:[%s2016 + $0x20] sm:$0xf]
      %v2026 = vld [vmem:[%s2016 + $0x24] sm:$0xf]
      %v2027 = vld [vmem:[%s2016 + $0x28] sm:$0xf]
      %v2028 = vld [vmem:[%s2016 + $0x2c] sm:$0xf]
      %v2029 = vld [vmem:[%s2016 + $0x30] sm:$0xf]
      %v2030 = vld [vmem:[%s2016 + $0x34] sm:$0xf]
      %v2031 = vld [vmem:[%s2016 + $0x38] sm:$0xf]
      %v2032 = vld [vmem:[%s2016 + $0x3c] sm:$0xf]
      %v2033 = vunpack.c.l.b16 %v1917
      %v2034 = vunpack.c.l.b16 %v1931
      %v2035 = vunpack.c.l.b16 %v1945
      %v2036 = vunpack.c.l.b16 %v1959
      %v2037 = vunpack.c.l.b16 %v1973
      %v2038 = vunpack.c.l.b16 %v1987
      %v2039 = vunpack.c.l.b16 %v2001
      %v2040 = vunpack.c.l.b16 %v2015
      %v2041 = vpack.c.b16 %v2034, %v2033
      %v2042 = vpack.c.b16 %v2036, %v2035
      %v2043 = vpack.c.b16 %v2038, %v2037
      %v2044 = vpack.c.b16 %v2040, %v2039
      %v2065 = vunpack.c.l.b16 %v2017
      %v2066 = vunpack.c.l.b16 %v2018
      %v2067 = vunpack.c.l.b16 %v2019
      %v2068 = vunpack.c.l.b16 %v2020
      %v2069 = vunpack.c.l.b16 %v2021
      %v2070 = vunpack.c.l.b16 %v2022
      %v2071 = vunpack.c.l.b16 %v2023
      %v2072 = vunpack.c.l.b16 %v2024
      %v2073 = vunpack.c.l.b16 %v2025
      %v2074 = vunpack.c.l.b16 %v2026
      %v2075 = vunpack.c.l.b16 %v2027
      %v2076 = vunpack.c.l.b16 %v2028
      %v2077 = vunpack.c.l.b16 %v2029
      %v2078 = vunpack.c.l.b16 %v2030
      %v2079 = vunpack.c.l.b16 %v2031
      %v2080 = vunpack.c.l.b16 %v2032
      %v2081 = vpack.c.b16 %v2066, %v2065
      %v2082 = vpack.c.b16 %v2068, %v2067
      %v2083 = vpack.c.b16 %v2070, %v2069
      %v2084 = vpack.c.b16 %v2072, %v2071
      %v2085 = vpack.c.b16 %v2074, %v2073
      %v2086 = vpack.c.b16 %v2076, %v2075
      %v2087 = vpack.c.b16 %v2078, %v2077
      %v2088 = vpack.c.b16 %v2080, %v2079
      %2097 = vmatprep.subr.bf16.mxu0 0
      %2098 = vmatpush1.bf16.msra.mxu0 %v2088
      %2099 = vmatprep.subr.bf16.mxu0 0
      %2100 = vmatpush1.bf16.msra.mxu0 %v2087
      %2101 = vmatprep.subr.bf16.mxu0 0
      %2102 = vmatpush1.bf16.msra.mxu0 %v2086
      %2103 = vmatprep.subr.bf16.mxu0 0
      %2104 = vmatpush1.bf16.msra.mxu0 %v2085
      %2105 = vmatprep.subr.bf16.mxu0 0
      %2106 = vmatpush1.bf16.msra.mxu0 %v2084
      %2107 = vmatprep.subr.bf16.mxu0 0
      %2108 = vmatpush1.bf16.msra.mxu0 %v2083
      %2109 = vmatprep.subr.bf16.mxu0 0
      %2110 = vmatpush1.bf16.msra.mxu0 %v2082
      %2111 = vmatprep.subr.bf16.mxu0 0
      %2112 = vmatpush1.bf16.msra.mxu0 %v2081
      %2113 = vmatprep.subr.bf16.mxu0 0
      %2114 = vmatpush2.bf16.msra.mxu0 0
      %2115 = vmatprep.subr.bf16.mxu0 0
      %2116 = vmatpush2.bf16.msra.mxu0 0
      %2117 = vmatprep.subr.bf16.mxu0 0
      %2118 = vmatpush2.bf16.msra.mxu0 0
      %2119 = vmatprep.subr.bf16.mxu0 0
      %2120 = vmatpush2.bf16.msra.mxu0 0
      %2121 = vmatprep.subr.bf16.mxu0 0
      %2122 = vmatpush2.bf16.msra.mxu0 0
      %2123 = vmatprep.subr.bf16.mxu0 0
      %2124 = vmatpush2.bf16.msra.mxu0 0
      %2125 = vmatprep.subr.bf16.mxu0 0
      %2126 = vmatpush2.bf16.msra.mxu0 0
      %2127 = vmatprep.subr.bf16.mxu0 0
      %2128 = vmatpush2.bf16.msra.mxu0 0
      %2129 = vmatprep.mubr.bf16.mxu0 0
      %2130 = vmatmul.mubr.bf16.gmra.mxu0 %v2041
      %v2131 = vpop.f32.mrf.mxu0
      %v2132 = vadd.f32 0.0, %v2131
      %v2133 = vpop.f32.mrf.mxu0
      %v2134 = vpop.f32.mrf.mxu0
      %v2135 = vadd.f32 0.0, %v2134
      %v2136 = vpop.f32.mrf.mxu0
      %2137 = vmatprep.mubr.bf16.mxu0 0
      %2138 = vmatmul.mubr.bf16.gmra.mxu0 %v2042
      %v2139 = vpop.f32.mrf.mxu0
      %v2140 = vadd.f32 0.0, %v2139
      %v2141 = vpop.f32.mrf.mxu0
      %v2142 = vpop.f32.mrf.mxu0
      %v2143 = vadd.f32 0.0, %v2142
      %v2144 = vpop.f32.mrf.mxu0
      %2145 = vmatprep.mubr.bf16.mxu0 0
      %2146 = vmatmul.mubr.bf16.gmra.mxu0 %v2043
      %v2147 = vpop.f32.mrf.mxu0
      %v2148 = vadd.f32 0.0, %v2147
      %v2149 = vpop.f32.mrf.mxu0
      %v2150 = vpop.f32.mrf.mxu0
      %v2151 = vadd.f32 0.0, %v2150
      %v2152 = vpop.f32.mrf.mxu0
      %2153 = vmatprep.mubr.bf16.mxu0 0
      %2154 = vmatmul.mubr.bf16.gmra.mxu0 %v2044
      %v2155 = vpop.f32.mrf.mxu0
      %v2156 = vadd.f32 0.0, %v2155
      %v2157 = vpop.f32.mrf.mxu0
      %v2158 = vpop.f32.mrf.mxu0
      %v2159 = vadd.f32 0.0, %v2158
      %v2160 = vpop.f32.mrf.mxu0
      %2161 = vdwg.mxu0
      %v2162 = vadd.f32 %v1880, %v2132
      %v2163 = vadd.f32 %v1881, %v2135
      %v2164 = vadd.f32 %v1882, %v2140
      %v2165 = vadd.f32 %v1883, %v2143
      %v2166 = vadd.f32 %v1884, %v2148
      %v2167 = vadd.f32 %v1885, %v2151
      %v2168 = vadd.f32 %v1886, %v2156
      %v2169 = vadd.f32 %v1887, %v2159
      %v2170 = vld [vmem:[%s1717] sm:$0xe]
      %v2171 = vld [vmem:[%s1717 + $0x8] sm:$0xe]
      %v2172 = vld [vmem:[%s1717 + $0x10] sm:$0xe]
      %v2173 = vld [vmem:[%s1717 + $0x18] sm:$0xe]
      %v2174 = vld [vmem:[%s1717 + $0x20] sm:$0xe]
      %v2175 = vld [vmem:[%s1717 + $0x28] sm:$0xe]
      %v2176 = vld [vmem:[%s1717 + $0x30] sm:$0xe]
      %v2177 = vld [vmem:[%s1717 + $0x38] sm:$0xe]
      %v2194 = vrot.slane %v2170, 5
      %v2195 = vrot.slane %v2194, 4
      %v2196 = vrot.slane %v1889, 5
      %v2197 = vsel %vm867, %v2195, %v2196
      %v2198 = vrot.slane %v2171, 5
      %v2199 = vrot.slane %v2198, 4
      %v2200 = vrot.slane %v1891, 5
      %v2201 = vsel %vm867, %v2199, %v2200
      %v2202 = vrot.slane %v2172, 5
      %v2203 = vrot.slane %v2202, 4
      %v2204 = vrot.slane %v1893, 5
      %v2205 = vsel %vm867, %v2203, %v2204
      %v2206 = vrot.slane %v2173, 5
      %v2207 = vrot.slane %v2206, 4
      %v2208 = vrot.slane %v1895, 5
      %v2209 = vsel %vm867, %v2207, %v2208
      %v2210 = vrot.slane %v2174, 5
      %v2211 = vrot.slane %v2210, 4
      %v2212 = vrot.slane %v1897, 5
      %v2213 = vsel %vm867, %v2211, %v2212
      %v2214 = vrot.slane %v2175, 5
      %v2215 = vrot.slane %v2214, 4
      %v2216 = vrot.slane %v1899, 5
      %v2217 = vsel %vm867, %v2215, %v2216
      %v2218 = vrot.slane %v2176, 5
      %v2219 = vrot.slane %v2218, 4
      %v2220 = vrot.slane %v1901, 5
      %v2221 = vsel %vm867, %v2219, %v2220
      %v2222 = vrot.slane %v2177, 5
      %v2223 = vrot.slane %v2222, 4
      %v2224 = vrot.slane %v1903, 5
      %v2225 = vsel %vm867, %v2223, %v2224
      %s2226 = scalar_lea.vmem %s1, 512
      %v2227 = vld [vmem:[%s2226] sm:$0xf]
      %v2228 = vld [vmem:[%s2226 + $0x4] sm:$0xf]
      %v2229 = vld [vmem:[%s2226 + $0x8] sm:$0xf]
      %v2230 = vld [vmem:[%s2226 + $0xc] sm:$0xf]
      %v2231 = vld [vmem:[%s2226 + $0x10] sm:$0xf]
      %v2232 = vld [vmem:[%s2226 + $0x14] sm:$0xf]
      %v2233 = vld [vmem:[%s2226 + $0x18] sm:$0xf]
      %v2234 = vld [vmem:[%s2226 + $0x1c] sm:$0xf]
      %v2235 = vld [vmem:[%s2226 + $0x20] sm:$0xf]
      %v2236 = vld [vmem:[%s2226 + $0x24] sm:$0xf]
      %v2237 = vld [vmem:[%s2226 + $0x28] sm:$0xf]
      %v2238 = vld [vmem:[%s2226 + $0x2c] sm:$0xf]
      %v2239 = vld [vmem:[%s2226 + $0x30] sm:$0xf]
      %v2240 = vld [vmem:[%s2226 + $0x34] sm:$0xf]
      %v2241 = vld [vmem:[%s2226 + $0x38] sm:$0xf]
      %v2242 = vld [vmem:[%s2226 + $0x3c] sm:$0xf]
      %v2243 = vunpack.c.l.b16 %v2197
      %v2244 = vunpack.c.l.b16 %v2201
      %v2245 = vunpack.c.l.b16 %v2205
      %v2246 = vunpack.c.l.b16 %v2209
      %v2247 = vunpack.c.l.b16 %v2213
      %v2248 = vunpack.c.l.b16 %v2217
      %v2249 = vunpack.c.l.b16 %v2221
      %v2250 = vunpack.c.l.b16 %v2225
      %v2251 = vpack.c.b16 %v2244, %v2243
      %v2252 = vpack.c.b16 %v2246, %v2245
      %v2253 = vpack.c.b16 %v2248, %v2247
      %v2254 = vpack.c.b16 %v2250, %v2249
      %v2275 = vunpack.c.l.b16 %v2227
      %v2276 = vunpack.c.l.b16 %v2228
      %v2277 = vunpack.c.l.b16 %v2229
      %v2278 = vunpack.c.l.b16 %v2230
      %v2279 = vunpack.c.l.b16 %v2231
      %v2280 = vunpack.c.l.b16 %v2232
      %v2281 = vunpack.c.l.b16 %v2233
      %v2282 = vunpack.c.l.b16 %v2234
      %v2283 = vunpack.c.l.b16 %v2235
      %v2284 = vunpack.c.l.b16 %v2236
      %v2285 = vunpack.c.l.b16 %v2237
      %v2286 = vunpack.c.l.b16 %v2238
      %v2287 = vunpack.c.l.b16 %v2239
      %v2288 = vunpack.c.l.b16 %v2240
      %v2289 = vunpack.c.l.b16 %v2241
      %v2290 = vunpack.c.l.b16 %v2242
      %v2291 = vpack.c.b16 %v2276, %v2275
      %v2292 = vpack.c.b16 %v2278, %v2277
      %v2293 = vpack.c.b16 %v2280, %v2279
      %v2294 = vpack.c.b16 %v2282, %v2281
      %v2295 = vpack.c.b16 %v2284, %v2283
      %v2296 = vpack.c.b16 %v2286, %v2285
      %v2297 = vpack.c.b16 %v2288, %v2287
      %v2298 = vpack.c.b16 %v2290, %v2289
      %2307 = vmatprep.subr.bf16.mxu0 0
      %2308 = vmatpush1.bf16.msra.mxu0 %v2298
      %2309 = vmatprep.subr.bf16.mxu0 0
      %2310 = vmatpush1.bf16.msra.mxu0 %v2297
      %2311 = vmatprep.subr.bf16.mxu0 0
      %2312 = vmatpush1.bf16.msra.mxu0 %v2296
      %2313 = vmatprep.subr.bf16.mxu0 0
      %2314 = vmatpush1.bf16.msra.mxu0 %v2295
      %2315 = vmatprep.subr.bf16.mxu0 0
      %2316 = vmatpush1.bf16.msra.mxu0 %v2294
      %2317 = vmatprep.subr.bf16.mxu0 0
      %2318 = vmatpush1.bf16.msra.mxu0 %v2293
      %2319 = vmatprep.subr.bf16.mxu0 0
      %2320 = vmatpush1.bf16.msra.mxu0 %v2292
      %2321 = vmatprep.subr.bf16.mxu0 0
      %2322 = vmatpush1.bf16.msra.mxu0 %v2291
      %2323 = vmatprep.subr.bf16.mxu0 0
      %2324 = vmatpush2.bf16.msra.mxu0 0
      %2325 = vmatprep.subr.bf16.mxu0 0
      %2326 = vmatpush2.bf16.msra.mxu0 0
      %2327 = vmatprep.subr.bf16.mxu0 0
      %2328 = vmatpush2.bf16.msra.mxu0 0
      %2329 = vmatprep.subr.bf16.mxu0 0
      %2330 = vmatpush2.bf16.msra.mxu0 0
      %2331 = vmatprep.subr.bf16.mxu0 0
      %2332 = vmatpush2.bf16.msra.mxu0 0
      %2333 = vmatprep.subr.bf16.mxu0 0
      %2334 = vmatpush2.bf16.msra.mxu0 0
      %2335 = vmatprep.subr.bf16.mxu0 0
      %2336 = vmatpush2.bf16.msra.mxu0 0
      %2337 = vmatprep.subr.bf16.mxu0 0
      %2338 = vmatpush2.bf16.msra.mxu0 0
      %2339 = vmatprep.mubr.bf16.mxu0 0
      %2340 = vmatmul.mubr.bf16.gmra.mxu0 %v2251
      %v2341 = vpop.f32.mrf.mxu0
      %v2342 = vadd.f32 0.0, %v2341
      %v2343 = vpop.f32.mrf.mxu0
      %v2344 = vpop.f32.mrf.mxu0
      %v2345 = vadd.f32 0.0, %v2344
      %v2346 = vpop.f32.mrf.mxu0
      %2347 = vmatprep.mubr.bf16.mxu0 0
      %2348 = vmatmul.mubr.bf16.gmra.mxu0 %v2252
      %v2349 = vpop.f32.mrf.mxu0
      %v2350 = vadd.f32 0.0, %v2349
      %v2351 = vpop.f32.mrf.mxu0
      %v2352 = vpop.f32.mrf.mxu0
      %v2353 = vadd.f32 0.0, %v2352
      %v2354 = vpop.f32.mrf.mxu0
      %2355 = vmatprep.mubr.bf16.mxu0 0
      %2356 = vmatmul.mubr.bf16.gmra.mxu0 %v2253
      %v2357 = vpop.f32.mrf.mxu0
      %v2358 = vadd.f32 0.0, %v2357
      %v2359 = vpop.f32.mrf.mxu0
      %v2360 = vpop.f32.mrf.mxu0
      %v2361 = vadd.f32 0.0, %v2360
      %v2362 = vpop.f32.mrf.mxu0
      %2363 = vmatprep.mubr.bf16.mxu0 0
      %2364 = vmatmul.mubr.bf16.gmra.mxu0 %v2254
      %v2365 = vpop.f32.mrf.mxu0
      %v2366 = vadd.f32 0.0, %v2365
      %v2367 = vpop.f32.mrf.mxu0
      %v2368 = vpop.f32.mrf.mxu0
      %v2369 = vadd.f32 0.0, %v2368
      %v2370 = vpop.f32.mrf.mxu0
      %2371 = vdwg.mxu0
      %v2372 = vadd.f32 %v2162, %v2342
      %v2373 = vadd.f32 %v2163, %v2345
      %v2374 = vadd.f32 %v2164, %v2350
      %v2375 = vadd.f32 %v2165, %v2353
      %v2376 = vadd.f32 %v2166, %v2358
      %v2377 = vadd.f32 %v2167, %v2361
      %v2378 = vadd.f32 %v2168, %v2366
      %v2379 = vadd.f32 %v2169, %v2369
      %2380 = vst [vmem:[%s386] sm:$0xff] %v2372
      %2381 = vst [vmem:[%s386 + $0x8] sm:$0xff] %v2373
      %2382 = vst [vmem:[%s386 + $0x10] sm:$0xff] %v2374
      %2383 = vst [vmem:[%s386 + $0x18] sm:$0xff] %v2375
      %2384 = vst [vmem:[%s386 + $0x20] sm:$0xff] %v2376
      %2385 = vst [vmem:[%s386 + $0x28] sm:$0xff] %v2377
      %2386 = vst [vmem:[%s386 + $0x30] sm:$0xff] %v2378
      %2387 = vst [vmem:[%s386 + $0x38] sm:$0xff] %v2379
      %v2388 = vadd.f32 %v2372, %v2373
      %v2389 = vadd.f32 %v2388, %v2374
      %v2390 = vadd.f32 %v2389, %v2375
      %v2391 = vadd.f32 %v2390, %v2376
      %v2392 = vadd.f32 %v2391, %v2377
      %v2393 = vadd.f32 %v2392, %v2378
      %v2394 = vadd.f32 %v2393, %v2379
      %2395 = vst [vmem:[%s391] sm:$0xff] %v2394
      %v2396 = vmul.f32 %v2372, %v2372
      %v2397 = vmul.f32 %v2373, %v2373
      %v2398 = vmul.f32 %v2374, %v2374
      %v2399 = vmul.f32 %v2375, %v2375
      %v2400 = vmul.f32 %v2376, %v2376
      %v2401 = vmul.f32 %v2377, %v2377
      %v2402 = vmul.f32 %v2378, %v2378
      %v2403 = vmul.f32 %v2379, %v2379
      %v2404 = vadd.f32 %v2396, %v2397
      %v2405 = vadd.f32 %v2404, %v2398
      %v2406 = vadd.f32 %v2405, %v2399
      %v2407 = vadd.f32 %v2406, %v2400
      %v2408 = vadd.f32 %v2407, %v2401
      %v2409 = vadd.f32 %v2408, %v2402
      %v2410 = vadd.f32 %v2409, %v2403
      %2411 = vst [vmem:[%s395] sm:$0xff] %v2410
      %v2412 = vld [vmem:[%s380] sm:$0xf]
      %v2413 = vld [vmem:[%s380 + $0x4] sm:$0xf]
      %v2414 = vld [vmem:[%s380 + $0x8] sm:$0xf]
      %v2415 = vld [vmem:[%s380 + $0xc] sm:$0xf]
      %v2416 = vld [vmem:[%s380 + $0x10] sm:$0xf]
      %v2417 = vld [vmem:[%s380 + $0x14] sm:$0xf]
      %v2418 = vld [vmem:[%s380 + $0x18] sm:$0xf]
      %v2419 = vld [vmem:[%s380 + $0x1c] sm:$0xf]
      %v2420 = vld [vmem:[%s3] sm:$0x3]
      %v2429 = vunpack.c.l.b16 %v2412
      %v2430 = vunpack.c.l.b16 %v2413
      %v2431 = vunpack.c.l.b16 %v2414
      %v2432 = vunpack.c.l.b16 %v2415
      %v2433 = vunpack.c.l.b16 %v2416
      %v2434 = vunpack.c.l.b16 %v2417
      %v2435 = vunpack.c.l.b16 %v2418
      %v2436 = vunpack.c.l.b16 %v2419
      %v2437 = vpack.c.b16 %v2430, %v2429
      %v2438 = vpack.c.b16 %v2432, %v2431
      %v2439 = vpack.c.b16 %v2434, %v2433
      %v2440 = vpack.c.b16 %v2436, %v2435
      %vm2441 = vcmask 31744
      %v2443 = vsel %vm2441, %v2437, 0
      %v2446 = vsel %vm2441, %v2438, 0
      %v2449 = vsel %vm2441, %v2439, 0
      %v2452 = vsel %vm2441, %v2440, 0
      %vm2454 = vcmask 1041408
      %v2456 = vsel %vm2454, %v2420, 0
      %2458 = vmatprep.subr.bf16.mxu0 0
      %2459 = vmatpush1.bf16.msra.mxu0 0
      %2460 = vmatprep.subr.bf16.mxu0 0
      %2461 = vmatpush1.bf16.msra.mxu0 0
      %2462 = vmatprep.subr.bf16.mxu0 0
      %2463 = vmatpush1.bf16.msra.mxu0 0
      %2464 = vmatprep.subr.bf16.mxu0 0
      %2465 = vmatpush1.bf16.msra.mxu0 0
      %2466 = vmatprep.subr.bf16.mxu0 0
      %2467 = vmatpush1.bf16.msra.mxu0 0
      %2468 = vmatprep.subr.bf16.mxu0 0
      %2469 = vmatpush1.bf16.msra.mxu0 0
      %2470 = vmatprep.subr.bf16.mxu0 0
      %2471 = vmatpush1.bf16.msra.mxu0 0
      %2472 = vmatprep.subr.bf16.mxu0 0
      %2473 = vmatpush1.bf16.msra.mxu0 %v2456
      %2474 = vmatprep.subr.bf16.mxu0 0
      %2475 = vmatpush2.bf16.msra.mxu0 0
      %2476 = vmatprep.subr.bf16.mxu0 0
      %2477 = vmatpush2.bf16.msra.mxu0 0
      %2478 = vmatprep.subr.bf16.mxu0 0
      %2479 = vmatpush2.bf16.msra.mxu0 0
      %2480 = vmatprep.subr.bf16.mxu0 0
      %2481 = vmatpush2.bf16.msra.mxu0 0
      %2482 = vmatprep.subr.bf16.mxu0 0
      %2483 = vmatpush2.bf16.msra.mxu0 0
      %2484 = vmatprep.subr.bf16.mxu0 0
      %2485 = vmatpush2.bf16.msra.mxu0 0
      %2486 = vmatprep.subr.bf16.mxu0 0
      %2487 = vmatpush2.bf16.msra.mxu0 0
      %2488 = vmatprep.subr.bf16.mxu0 0
      %2489 = vmatpush2.bf16.msra.mxu0 0
      %2490 = vmatprep.mubr.bf16.mxu0 0
      %2491 = vmatmul.mubr.bf16.gmra.mxu0 %v2443
      %v2492 = vpop.f32.mrf.mxu0
      %v2493 = vadd.f32 0.0, %v2492
      %v2494 = vpop.f32.mrf.mxu0
      %v2495 = vpop.f32.mrf.mxu0
      %v2496 = vadd.f32 0.0, %v2495
      %v2497 = vpop.f32.mrf.mxu0
      %2498 = vmatprep.mubr.bf16.mxu0 0
      %2499 = vmatmul.mubr.bf16.gmra.mxu0 %v2446
      %v2500 = vpop.f32.mrf.mxu0
      %v2501 = vadd.f32 0.0, %v2500
      %v2502 = vpop.f32.mrf.mxu0
      %v2503 = vpop.f32.mrf.mxu0
      %v2504 = vadd.f32 0.0, %v2503
      %v2505 = vpop.f32.mrf.mxu0
      %2506 = vmatprep.mubr.bf16.mxu0 0
      %2507 = vmatmul.mubr.bf16.gmra.mxu0 %v2449
      %v2508 = vpop.f32.mrf.mxu0
      %v2509 = vadd.f32 0.0, %v2508
      %v2510 = vpop.f32.mrf.mxu0
      %v2511 = vpop.f32.mrf.mxu0
      %v2512 = vadd.f32 0.0, %v2511
      %v2513 = vpop.f32.mrf.mxu0
      %2514 = vmatprep.mubr.bf16.mxu0 0
      %2515 = vmatmul.mubr.bf16.gmra.mxu0 %v2452
      %v2516 = vpop.f32.mrf.mxu0
      %v2517 = vadd.f32 0.0, %v2516
      %v2518 = vpop.f32.mrf.mxu0
      %v2519 = vpop.f32.mrf.mxu0
      %v2520 = vadd.f32 0.0, %v2519
      %v2521 = vpop.f32.mrf.mxu0
      %2522 = vdwg.mxu0
      %2523 = vst [vmem:[%s400] sm:$0xff] %v2493
      %2524 = vst [vmem:[%s400 + $0x8] sm:$0xff] %v2496
      %2525 = vst [vmem:[%s400 + $0x10] sm:$0xff] %v2501
      %2526 = vst [vmem:[%s400 + $0x18] sm:$0xff] %v2504
      %2527 = vst [vmem:[%s400 + $0x20] sm:$0xff] %v2509
      %2528 = vst [vmem:[%s400 + $0x28] sm:$0xff] %v2512
      %2529 = vst [vmem:[%s400 + $0x30] sm:$0xff] %v2517
      %2530 = vst [vmem:[%s400 + $0x38] sm:$0xff] %v2520
      %v2531 = vadd.f32 %v2493, %v2496
      %v2532 = vadd.f32 %v2531, %v2501
      %v2533 = vadd.f32 %v2532, %v2504
      %v2534 = vadd.f32 %v2533, %v2509
      %v2535 = vadd.f32 %v2534, %v2512
      %v2536 = vadd.f32 %v2535, %v2517
      %v2537 = vadd.f32 %v2536, %v2520
      %2538 = vst [vmem:[%s405] sm:$0xff] %v2537
      %v2539 = vmul.f32 %v2493, %v2493
      %v2540 = vmul.f32 %v2496, %v2496
      %v2541 = vmul.f32 %v2501, %v2501
      %v2542 = vmul.f32 %v2504, %v2504
      %v2543 = vmul.f32 %v2509, %v2509
      %v2544 = vmul.f32 %v2512, %v2512
      %v2545 = vmul.f32 %v2517, %v2517
      %v2546 = vmul.f32 %v2520, %v2520
      %v2547 = vadd.f32 %v2539, %v2540
      %v2548 = vadd.f32 %v2547, %v2541
      %v2549 = vadd.f32 %v2548, %v2542
      %v2550 = vadd.f32 %v2549, %v2543
      %v2551 = vadd.f32 %v2550, %v2544
      %v2552 = vadd.f32 %v2551, %v2545
      %v2553 = vadd.f32 %v2552, %v2546
      %2554 = vst [vmem:[%s409] sm:$0xff] %v2553
      %s2555 = smul.u32 8, %s21
      %p2556 = scmp.lt.s32.totalorder %s2555, 15
      %s2557 = scalar_select %p2556, %s2555, 15
      %s2558 = smul.addr %s2557, 8
      %s2559 = scalar_lea.vmem %s4, %s2558
      %p2560 = scmp.lt.s32.totalorder %s21, 1
      %s2561 = scalar_select %p2560, %s21, 1
      %s2562 = smul.addr %s2561, 8
      %s2563 = scalar_lea.vmem %s5, %s2562
      %p2564 = scmp.lt.s32.totalorder %s21, 1
      %s2565 = scalar_select %p2564, %s21, 1
      %s2566 = smul.addr %s2565, 8
      %s2567 = scalar_lea.vmem %s6, %s2566
      %s2568 = smul.u32 8, %s21
      %p2569 = scmp.lt.s32.totalorder %s2568, 15
      %s2570 = scalar_select %p2569, %s2568, 15
      %s2571 = smul.addr %s2570, 8
      %s2572 = scalar_lea.vmem %s7, %s2571
      %p2573 = scmp.lt.s32.totalorder %s21, 1
      %s2574 = scalar_select %p2573, %s21, 1
      %s2575 = smul.addr %s2574, 8
      %s2576 = scalar_lea.vmem %s8, %s2575
      %p2577 = scmp.lt.s32.totalorder %s21, 1
      %s2578 = scalar_select %p2577, %s21, 1
      %s2579 = smul.addr %s2578, 8
      %s2580 = scalar_lea.vmem %s9, %s2579
      // Predicated region
      $region37: #{_residual_block_impl.6} parent=35 // pred_check
        %p2581 = pneg %p133
      $region38: #{_residual_block_impl.6} parent=35 // pred_check_branch
        %2583 = sbr.rel (%p2581) target = $region40
      $region39: #{_residual_block_impl.6} parent=35 // pred_region
        %s2584 = smul.u32 8, %s21
      $region40: #{_residual_block_impl.6} parent=35 // pred_fallthru
        _
      // Predicated region
      $region41: #{_residual_block_impl.6} parent=35 // pred_check
        %p2585 = pneg %p159
      $region42: #{_residual_block_impl.6} parent=35 // pred_check_branch
        %2587 = sbr.rel (%p2585) target = $region44
      $region43: #{_residual_block_impl.6} parent=35 // pred_region
        _
      $region44: #{_residual_block_impl.6} parent=35 // pred_fallthru
        _
      // Predicated region
      $region45: #{_residual_block_impl.6} parent=35 // pred_check
        %p2588 = pneg %p185
      $region46: #{_residual_block_impl.6} parent=35 // pred_check_branch
        %2590 = sbr.rel (%p2588) target = $region48
      $region47: #{_residual_block_impl.6} parent=35 // pred_region
        _
      $region48: #{_residual_block_impl.6} parent=35 // pred_fallthru
        _
      // Predicated region
      $region49: #{_residual_block_impl.6} parent=35 // pred_check
        %p2591 = pneg %p211
      $region50: #{_residual_block_impl.6} parent=35 // pred_check_branch
        %2593 = sbr.rel (%p2591) target = $region52
      $region51: #{_residual_block_impl.6} parent=35 // pred_region
        %s2594 = smul.u32 8, %s21
      $region52: #{_residual_block_impl.6} parent=35 // pred_fallthru
        _
      // Predicated region
      $region53: #{_residual_block_impl.6} parent=35 // pred_check
        %p2595 = pneg %p237
      $region54: #{_residual_block_impl.6} parent=35 // pred_check_branch
        %2597 = sbr.rel (%p2595) target = $region56
      $region55: #{_residual_block_impl.6} parent=35 // pred_region
        _
      $region56: #{_residual_block_impl.6} parent=35 // pred_fallthru
        _
      // Predicated region
      $region57: #{_residual_block_impl.6} parent=35 // pred_check
        %p2598 = pneg %p263
      $region58: #{_residual_block_impl.6} parent=35 // pred_check_branch
        %2600 = sbr.rel (%p2598) target = $region60
      $region59: #{_residual_block_impl.6} parent=35 // pred_region
        _
      $region60: #{_residual_block_impl.6} parent=35 // pred_fallthru
        _
    $region36: #{_residual_block_impl.6} parent=5 // pred_fallthru
      _
    %p2601 = scmp.le.s32.totalorder 2, %s16
    // Predicated region
    $region61: #{_residual_block_impl.6} parent=5 // pred_check
      %p2602 = pneg %p2601
    $region62: #{_residual_block_impl.6} parent=5 // pred_check_branch
      %2604 = sbr.rel (%p2602) target = $region64
    $region63: #{_residual_block_impl.6} parent=5 // pred_region
      %s2605 = ssub.s32 %s16, 2
      // Predicated region
      $region65: #{_residual_block_impl.6} parent=63 // pred_check
        %p2606 = pneg %p139
      $region66: #{_residual_block_impl.6} parent=63 // pred_check_branch
        %2608 = sbr.rel (%p2606) target = $region68
      $region67: #{_residual_block_impl.6} parent=63 // pred_region
        %s2609 = smul.u32 8, %s22
        %p2610 = scmp.lt.s32.totalorder %s2609, 15
        %s2611 = scalar_select %p2610, %s2609, 15
        %s2612 = smul.addr %s2611, 8
        %s2613 = scalar_lea.vmem %s4, %s2612
      $region68: #{_residual_block_impl.6} parent=63 // pred_fallthru
        _
      // Predicated region
      $region69: #{_residual_block_impl.6} parent=63 // pred_check
        %p2614 = pneg %p165
      $region70: #{_residual_block_impl.6} parent=63 // pred_check_branch
        %2616 = sbr.rel (%p2614) target = $region72
      $region71: #{_residual_block_impl.6} parent=63 // pred_region
        %p2617 = scmp.lt.s32.totalorder %s22, 1
        %s2618 = scalar_select %p2617, %s22, 1
        %s2619 = smul.addr %s2618, 8
        %s2620 = scalar_lea.vmem %s5, %s2619
      $region72: #{_residual_block_impl.6} parent=63 // pred_fallthru
        _
      // Predicated region
      $region73: #{_residual_block_impl.6} parent=63 // pred_check
        %p2621 = pneg %p191
      $region74: #{_residual_block_impl.6} parent=63 // pred_check_branch
        %2623 = sbr.rel (%p2621) target = $region76
      $region75: #{_residual_block_impl.6} parent=63 // pred_region
        %p2624 = scmp.lt.s32.totalorder %s22, 1
        %s2625 = scalar_select %p2624, %s22, 1
        %s2626 = smul.addr %s2625, 8
        %s2627 = scalar_lea.vmem %s6, %s2626
      $region76: #{_residual_block_impl.6} parent=63 // pred_fallthru
        _
      // Predicated region
      $region77: #{_residual_block_impl.6} parent=63 // pred_check
        %p2628 = pneg %p217
      $region78: #{_residual_block_impl.6} parent=63 // pred_check_branch
        %2630 = sbr.rel (%p2628) target = $region80
      $region79: #{_residual_block_impl.6} parent=63 // pred_region
        %s2631 = smul.u32 8, %s22
        %p2632 = scmp.lt.s32.totalorder %s2631, 15
        %s2633 = scalar_select %p2632, %s2631, 15
        %s2634 = smul.addr %s2633, 8
        %s2635 = scalar_lea.vmem %s7, %s2634
      $region80: #{_residual_block_impl.6} parent=63 // pred_fallthru
        _
      // Predicated region
      $region81: #{_residual_block_impl.6} parent=63 // pred_check
        %p2636 = pneg %p243
      $region82: #{_residual_block_impl.6} parent=63 // pred_check_branch
        %2638 = sbr.rel (%p2636) target = $region84
      $region83: #{_residual_block_impl.6} parent=63 // pred_region
        %p2639 = scmp.lt.s32.totalorder %s22, 1
        %s2640 = scalar_select %p2639, %s22, 1
        %s2641 = smul.addr %s2640, 8
        %s2642 = scalar_lea.vmem %s8, %s2641
      $region84: #{_residual_block_impl.6} parent=63 // pred_fallthru
        _
      // Predicated region
      $region85: #{_residual_block_impl.6} parent=63 // pred_check
        %p2643 = pneg %p269
      $region86: #{_residual_block_impl.6} parent=63 // pred_check_branch
        %2645 = sbr.rel (%p2643) target = $region88
      $region87: #{_residual_block_impl.6} parent=63 // pred_region
        %p2646 = scmp.lt.s32.totalorder %s22, 1
        %s2647 = scalar_select %p2646, %s22, 1
        %s2648 = smul.addr %s2647, 8
        %s2649 = scalar_lea.vmem %s9, %s2648
      $region88: #{_residual_block_impl.6} parent=63 // pred_fallthru
        _
    $region64: #{_residual_block_impl.6} parent=5 // pred_fallthru
      _
  $region6: #{_residual_block_impl.6} parent=0 // loop_footer
    %s20 = sadd.s32 1, %s16
  $region7: #{_residual_block_impl.6} parent=0 // loop_footer_branch
    %15 = sbr.rel target = $region3
  $region8: #{_residual_block_impl.6} parent=0 // loop_exit
    _

</llo_original>
